<compile_context>
chip_gen: v7x
topology: tpu7x:2x2x1
jax: 0.10.0
libtpu: 0.0.40
codegen_flags: <defaults>
</compile_context>

<pallas_src>
import functools

import jax
import jax.numpy as jnp
from jax import lax
from jax.experimental import pallas as pl
from jax.experimental.pallas import tpu as pltpu

NUM_CLASSES = 2
OVERLAP_THRESH = 0.35
NEGPOS_RATIO = 7
VARIANCE = (0.1, 0.2)


# ------------------------------------------------------------------------
# Kernel 1: jaccard overlaps fused with max/argmax reductions
# ------------------------------------------------------------------------
def _jaccard_kernel(truths_ref, priors_t_ref, area_b_ref,
                    bt_ov_ref, bt_idx_ref, bp_ov_ref, bp_idx_ref):
    t = truths_ref[0]            # [A, 4]  GT boxes (x1, y1, x2, y2)
    pt = priors_t_ref[...]       # [4, P]  transposed point-form priors
    area_b = area_b_ref[...]     # [1, P]  precomputed prior areas (hoisted)

    tx1 = t[:, 0:1]; ty1 = t[:, 1:2]; tx2 = t[:, 2:3]; ty2 = t[:, 3:4]      # [A,1]
    px1 = pt[0:1, :]; py1 = pt[1:2, :]; px2 = pt[2:3, :]; py2 = pt[3:4, :]  # [1,P]

    iw = jnp.maximum(jnp.minimum(tx2, px2) - jnp.maximum(tx1, px1), 0.0)    # [A,P]
    ih = jnp.maximum(jnp.minimum(ty2, py2) - jnp.maximum(ty1, py1), 0.0)
    inter = iw * ih
    area_a = (tx2 - tx1) * (ty2 - ty1)                                      # [A,1]
    union = area_a + area_b - inter
    union = jnp.where(union == 0.0, 1.0, union)      # guard 0/0 for padded GTs
    ov = inter * pl.reciprocal(union)                # divide on EUP, frees VALU

    A = ov.shape[0]
    P = ov.shape[1]

    # best GT per prior: reduce over A (sublane axis)
    bt_ov = jnp.max(ov, axis=0, keepdims=True)                              # [1,P]
    row_iota = lax.broadcasted_iota(jnp.int32, ov.shape, 0)
    bt_idx = jnp.min(jnp.where(ov == bt_ov, row_iota, A), axis=0, keepdims=True)
    bt_ov_ref[0] = bt_ov
    bt_idx_ref[0] = bt_idx

    # best prior per GT: reduce over P (lane axis)
    bp_ov = jnp.max(ov, axis=1, keepdims=True)                              # [A,1]
    lane_iota = lax.broadcasted_iota(jnp.int32, ov.shape, 1)
    bp_idx = jnp.min(jnp.where(ov == bp_ov, lane_iota, P), axis=1, keepdims=True)
    bp_ov_ref[0] = bp_ov
    bp_idx_ref[0] = bp_idx


def jaccard_best_matches(truths, priors_pf):
    """truths: (B, A, 4) point-form GT boxes; priors_pf: (P, 4) point-form priors.
    Returns (best_truth_overlap (B,P), best_truth_idx (B,P),
             best_prior_overlap (B,A), best_prior_idx (B,A))."""
    B, A, _ = truths.shape
    P = priors_pf.shape[0]
    priors_t = priors_pf.T.astype(jnp.float32)                              # (4,P)
    area_b = ((priors_pf[:, 2] - priors_pf[:, 0]) *
              (priors_pf[:, 3] - priors_pf[:, 1])).reshape(1, P).astype(jnp.float32)
    bt_ov, bt_idx, bp_ov, bp_idx = pl.pallas_call(
        _jaccard_kernel,
        out_shape=(
            jax.ShapeDtypeStruct((B, 1, P), jnp.float32),
            jax.ShapeDtypeStruct((B, 1, P), jnp.int32),
            jax.ShapeDtypeStruct((B, A, 1), jnp.float32),
            jax.ShapeDtypeStruct((B, A, 1), jnp.int32),
        ),
        grid=(B,),
        in_specs=[
            pl.BlockSpec((1, A, 4), lambda b: (b, 0, 0)),
            pl.BlockSpec((4, P), lambda b: (0, 0)),
            pl.BlockSpec((1, P), lambda b: (0, 0)),
        ],
        out_specs=(
            pl.BlockSpec((1, 1, P), lambda b: (b, 0, 0)),
            pl.BlockSpec((1, 1, P), lambda b: (b, 0, 0)),
            pl.BlockSpec((1, A, 1), lambda b: (b, 0, 0)),
            pl.BlockSpec((1, A, 1), lambda b: (b, 0, 0)),
        ),
        compiler_params=pltpu.CompilerParams(dimension_semantics=("parallel",)),
    )(truths.astype(jnp.float32), priors_t, area_b)
    return bt_ov[:, 0], bt_idx[:, 0], bp_ov[:, :, 0], bp_idx[:, :, 0]


# ------------------------------------------------------------------------
# Kernel 2: per-image loss partials (smooth-L1, single row-layout CE,
#           roll-based exact hard-negative-mining rank)
# ------------------------------------------------------------------------
def _loss_kernel(negpos_ratio, roll_chunk,
                 loc_p_ref, loc_t_ref, landm_p_ref, landm_t_ref,
                 conf_r_ref, conf_t_col_ref, conf_t_row_ref, out_ref):
    P = conf_r_ref.shape[2]

    # --- column-layout masks only for the masked smooth-L1 sums ---
    ct_col = conf_t_col_ref[0]                               # [P,1] in {-1,0,1}
    posf_col = (ct_col != 0.0).astype(jnp.float32)           # pos  = conf_t != 0
    pos1f_col = (ct_col > 0.0).astype(jnp.float32)           # pos1 = conf_t > 0

    d = loc_p_ref[0] - loc_t_ref[0]                          # [P,4]
    ad = jnp.abs(d)
    sl = jnp.where(ad < 1.0, 0.5 * d * d, ad - 0.5)
    loss_l = jnp.sum(sl * posf_col)

    dl = landm_p_ref[0] - landm_t_ref[0]                     # [P,10]
    adl = jnp.abs(dl)
    sll = jnp.where(adl < 1.0, 0.5 * dl * dl, adl - 0.5)
    loss_landm = jnp.sum(sll * pos1f_col)

    # --- single cross-entropy pass in lane-dense row layout [C, P] ---
    xr = conf_r_ref[0]                                       # [C,P]
    ct_row = conf_t_row_ref[0]                               # [1,P]
    posf_row = (ct_row != 0.0).astype(jnp.float32)
    pos1f_row = (ct_row > 0.0).astype(jnp.float32)
    tgt_row = posf_row.astype(jnp.int32)                     # conf_t[pos] = 1
    cls_iota = lax.broadcasted_iota(jnp.int32, xr.shape, 0)
    onehot = (cls_iota == tgt_row).astype(jnp.float32)
    x_t = jnp.sum(xr * onehot, axis=0, keepdims=True)        # target logit [1,P]
    xmax = jnp.max(xr, axis=0, keepdims=True)
    lse = jnp.log(jnp.sum(jnp.exp(xr - xmax), axis=0, keepdims=True)) + xmax
    ce = lse - x_t                                           # [1,P]
    score = jnp.where(posf_row > 0.0, 0.0, ce)               # mining score

    num_pos = jnp.sum(posf_row)
    num_pos_landm = jnp.sum(pos1f_row)
    num_neg = jnp.minimum(negpos_ratio * num_pos, float(P - 1))

    # --- exact rank via rolling lane rotation: rank_i = #{j: score_j > score_i}
    # Uses only [1,P] rows (no [P,P] / [tile,P] intermediate) -> O(P) live VMEM;
    # rolls go to the XLU slot and overlap the VALU compare/accumulate.
    def mine(_, carry):
        rolled, rank = carry
        for _ in range(roll_chunk):
            rolled = pltpu.roll(rolled, shift=1, axis=1)
            rank = rank + (rolled > score).astype(jnp.float32)
        return rolled, rank

    num_steps = P // roll_chunk        # wrapper guarantees divisibility;
    _, rank = lax.fori_loop(0, num_steps, mine,              # final shift == P
                            (score, jnp.zeros_like(score)))  # compares equal -> +0

    negf = (rank < num_neg).astype(jnp.float32)
    sel = jnp.maximum(posf_row, negf)                        # (pos + neg) > 0
    loss_c = jnp.sum(ce * sel)

    lane = lax.broadcasted_iota(jnp.int32, (1, 128), 1)
    vec = jnp.where(lane == 0, loss_l, 0.0)
    vec = vec + jnp.where(lane == 1, loss_c, 0.0)
    vec = vec + jnp.where(lane == 2, loss_landm, 0.0)
    vec = vec + jnp.where(lane == 3, num_pos, 0.0)
    vec = vec + jnp.where(lane == 4, num_pos_landm, 0.0)
    out_ref[0] = vec


def multibox_losses_pallas(loc_data, loc_t, landm_data, landm_t, conf_data, conf_t):
    B, P, C = conf_data.shape
    conf_row = jnp.transpose(conf_data, (0, 2, 1))           # (B, C, P), C=2: cheap
    conf_t_col = conf_t.reshape(B, P, 1).astype(jnp.float32)
    conf_t_row = conf_t.reshape(B, 1, P).astype(jnp.float32)

    roll_chunk = 8 if P % 8 == 0 else (4 if P % 4 == 0 else (2 if P % 2 == 0 else 1))
    kernel = functools.partial(_loss_kernel, float(NEGPOS_RATIO), roll_chunk)
    partials = pl.pallas_call(
        kernel,
        out_shape=jax.ShapeDtypeStruct((B, 1, 128), jnp.float32),
        grid=(B,),
        in_specs=[
            pl.BlockSpec((1, P, 4), lambda b: (b, 0, 0)),
            pl.BlockSpec((1, P, 4), lambda b: (b, 0, 0)),
            pl.BlockSpec((1, P, 10), lambda b: (b, 0, 0)),
            pl.BlockSpec((1, P, 10), lambda b: (b, 0, 0)),
            pl.BlockSpec((1, C, P), lambda b: (b, 0, 0)),
            pl.BlockSpec((1, P, 1), lambda b: (b, 0, 0)),
            pl.BlockSpec((1, 1, P), lambda b: (b, 0, 0)),
        ],
        out_specs=pl.BlockSpec((1, 1, 128), lambda b: (b, 0, 0)),
        compiler_params=pltpu.CompilerParams(dimension_semantics=("parallel",)),
    )(loc_data, loc_t, landm_data, landm_t, conf_row, conf_t_col, conf_t_row)

    sums = jnp.sum(partials, axis=(0, 1))                    # [128]
    loss_l_sum, loss_c_sum, loss_landm_sum = sums[0], sums[1], sums[2]
    num_pos_total, num_pos_landm_total = sums[3], sums[4]
    N = jnp.maximum(num_pos_total, 1.0)
    N1 = jnp.maximum(num_pos_landm_total, 1.0)
    return loss_l_sum / N, loss_c_sum / N, loss_landm_sum / N1


# ------------------------------------------------------------------------
# JAX glue reproducing the matching / encoding logic of match()
# ------------------------------------------------------------------------
def point_form(boxes):
    return jnp.concatenate(
        [boxes[:, :2] - boxes[:, 2:] / 2, boxes[:, :2] + boxes[:, 2:] / 2], axis=1)


def encode(matched, priors, variances):
    g_cxcy = (matched[:, :2] + matched[:, 2:]) / 2 - priors[:, :2]
    g_cxcy = g_cxcy / (variances[0] * priors[:, 2:])
    g_wh = (matched[:, 2:] - matched[:, :2]) / priors[:, 2:]
    g_wh = jnp.log(g_wh) / variances[1]
    return jnp.concatenate([g_cxcy, g_wh], axis=1)


def encode_landm(matched, priors, variances):
    P = matched.shape[0]
    m = matched.reshape(P, 5, 2)
    pr = jnp.broadcast_to(priors[:, None, :], (P, 5, 4))
    g_cxcy = (m - pr[:, :, :2]) / (variances[0] * pr[:, :, 2:])
    return g_cxcy.reshape(P, 10)


def match_one(threshold, truths_b, priors, variances, labels_b, landms_b,
              bt_ov_b, bt_idx_b, bp_ov_b, bp_idx_b):
    """Per-image matching from the fused jaccard-kernel reductions."""
    A = truths_b.shape[0]
    best_prior_overlap = bp_ov_b                              # [A]
    best_prior_idx = bp_idx_b                                 # [A]
    valid_gt = best_prior_overlap >= 0.2
    has_valid = jnp.any(valid_gt)

    best_truth_overlap = bt_ov_b                              # [P]
    best_truth_idx = bt_idx_b                                 # [P]

    # best_truth_overlap.index_fill_(0, best_prior_idx_filter, 2)
    for j in range(A):
        best_truth_overlap = jnp.where(
            valid_gt[j],
            best_truth_overlap.at[best_prior_idx[j]].set(2.0),
            best_truth_overlap)
    # for j in range(...): best_truth_idx[best_prior_idx[j]] = j
    for j in range(A):
        best_truth_idx = best_truth_idx.at[best_prior_idx[j]].set(j)

    matches = truths_b[best_truth_idx]                        # [P,4]
    conf = labels_b[best_truth_idx]                           # [P]
    conf = jnp.where(best_truth_overlap < threshold, 0.0, conf)
    loc = encode(matches, priors, variances)
    landm = encode_landm(landms_b[best_truth_idx], priors, variances)

    # early-return path of match(): no valid GT -> loc_t = 0, conf_t = 0
    # TODO(synk): gradients through log() on padded/degenerate boxes not handled
    loc = jnp.where(has_valid, loc, 0.0)
    conf = jnp.where(has_valid, conf, 0.0)
    return loc, conf, landm


@jax.jit
def multibox_loss(loc_data, conf_data, landm_data, priors, targets):
    B = loc_data.shape[0]
    truths = targets[:, :, :4]
    landms = targets[:, :, 4:14]
    labels = targets[:, :, 14]

    priors_pf = point_form(priors)
    bt_ov, bt_idx, bp_ov, bp_idx = jaccard_best_matches(truths, priors_pf)  # kernel 1

    loc_t_l, conf_t_l, landm_t_l = [], [], []
    for idx in range(B):
        l, c, lm = match_one(OVERLAP_THRESH, truths[idx], priors, VARIANCE,
                             labels[idx], landms[idx],
                             bt_ov[idx], bt_idx[idx], bp_ov[idx], bp_idx[idx])
        loc_t_l.append(l); conf_t_l.append(c); landm_t_l.append(lm)
    loc_t = jnp.stack(loc_t_l)                                # (B, P, 4)
    conf_t = jnp.stack(conf_t_l)                              # (B, P)  in {-1,0,1}
    landm_t = jnp.stack(landm_t_l)                            # (B, P, 10)

    return multibox_losses_pallas(loc_data, loc_t, landm_data, landm_t,
                                  conf_data, conf_t)          # kernel 2


# ------------------------------------------------------------------------
if __name__ == "__main__":
    B, A, C = 2, 4, NUM_CLASSES
    n = 16
    P = n * n  # 256 priors

    # deterministic priors: 16x16 grid of centers, fixed size 0.125
    cs = (jnp.arange(n, dtype=jnp.float32) + 0.5) / n
    cy, cx = jnp.meshgrid(cs, cs, indexing="ij")
    priors = jnp.stack(
        [cx.ravel(), cy.ravel(),
         jnp.full((P,), 0.125, jnp.float32), jnp.full((P,), 0.125, jnp.float32)],
        axis=1)

    key = jax.random.PRNGKey(0)
    k1, k2, k3, k4, k5, k6 = jax.random.split(key, 6)
    centers = jax.random.uniform(k1, (B, A, 2), minval=0.15, maxval=0.85)
    sizes = jax.random.uniform(k2, (B, A, 2), minval=0.10, maxval=0.15)
    boxes = jnp.concatenate([centers - sizes / 2, centers + sizes / 2], axis=-1)
    landm_gt = jax.random.uniform(k3, (B, A, 10))
    labels = jnp.array([[1.0, 1.0, 1.0, -1.0], [1.0, 1.0, -1.0, 1.0]], jnp.float32)
    targets = jnp.concatenate([boxes, landm_gt, labels[..., None]], axis=-1)  # (B,A,15)

    loc_data = 0.1 * jax.random.normal(k4, (B, P, 4), jnp.float32)
    conf_data = jax.random.normal(k5, (B, P, C), jnp.float32)
    landm_data = 0.1 * jax.random.normal(k6, (B, P, 10), jnp.float32)

    loss_l, loss_c, loss_landm = multibox_loss(
        loc_data, conf_data, landm_data, priors, targets)
    jax.block_until_ready((loss_l, loss_c, loss_landm))
    print("loss_l =", float(loss_l), "loss_c =", float(loss_c),
          "loss_landm =", float(loss_landm))
    print("KERNEL_OK")
</pallas_src>

<mosaic_0001>
module attributes {stable_mosaic.version = 11 : i64} {
  func.func @_jaccard_kernel(%arg0: i32, %arg1: memref<1x4x4xf32, #tpu.memory_space<vmem>>, %arg2: memref<4x256xf32, #tpu.memory_space<vmem>>, %arg3: memref<1x256xf32, #tpu.memory_space<vmem>>, %arg4: memref<1x1x256xf32, #tpu.memory_space<vmem>>, %arg5: memref<1x1x256xi32, #tpu.memory_space<vmem>>, %arg6: memref<1x4x1xf32, #tpu.memory_space<vmem>>, %arg7: memref<1x4x1xi32, #tpu.memory_space<vmem>>) attributes {dimension_semantics = [#tpu.dimension_semantics<parallel>], iteration_bounds = array<i64: 2>, scalar_prefetch = 0 : i64, scratch_operands = 0 : i64, tpu.core_type = #tpu.core_type<tc>, window_params = [{transform_indices = @transform_0, window_bounds = array<i64: 1, 4, 4>}, {pipeline_mode = #tpu.pipeline_mode<synchronous>, transform_indices = @transform_1, window_bounds = array<i64: 4, 256>}, {pipeline_mode = #tpu.pipeline_mode<synchronous>, transform_indices = @transform_2, window_bounds = array<i64: 1, 256>}, {transform_indices = @transform_3, window_bounds = array<i64: 1, 1, 256>}, {transform_indices = @transform_4, window_bounds = array<i64: 1, 1, 256>}, {transform_indices = @transform_5, window_bounds = array<i64: 1, 4, 1>}, {transform_indices = @transform_6, window_bounds = array<i64: 1, 4, 1>}]} {
    %c0 = arith.constant 0 : index
    %c0_0 = arith.constant 0 : index
    %c0_1 = arith.constant 0 : index
    %0 = vector.load %arg1[%c0, %c0_0, %c0_1] : memref<1x4x4xf32, #tpu.memory_space<vmem>>, vector<1x4x4xf32>
    %1 = vector.shape_cast %0 : vector<1x4x4xf32> to vector<4x4xf32>
    %c0_2 = arith.constant 0 : index
    %c0_3 = arith.constant 0 : index
    %2 = vector.load %arg2[%c0_2, %c0_3] : memref<4x256xf32, #tpu.memory_space<vmem>>, vector<4x256xf32>
    %c0_4 = arith.constant 0 : index
    %c0_5 = arith.constant 0 : index
    %3 = vector.load %arg3[%c0_4, %c0_5] : memref<1x256xf32, #tpu.memory_space<vmem>>, vector<1x256xf32>
    %4 = vector.extract_strided_slice %1 {offsets = [0, 0], sizes = [4, 1], strides = [1, 1]} : vector<4x4xf32> to vector<4x1xf32>
    %5 = vector.extract_strided_slice %1 {offsets = [0, 1], sizes = [4, 1], strides = [1, 1]} : vector<4x4xf32> to vector<4x1xf32>
    %6 = vector.extract_strided_slice %1 {offsets = [0, 2], sizes = [4, 1], strides = [1, 1]} : vector<4x4xf32> to vector<4x1xf32>
    %7 = vector.extract_strided_slice %1 {offsets = [0, 3], sizes = [4, 1], strides = [1, 1]} : vector<4x4xf32> to vector<4x1xf32>
    %8 = vector.extract_strided_slice %2 {offsets = [0, 0], sizes = [1, 256], strides = [1, 1]} : vector<4x256xf32> to vector<1x256xf32>
    %9 = vector.extract_strided_slice %2 {offsets = [1, 0], sizes = [1, 256], strides = [1, 1]} : vector<4x256xf32> to vector<1x256xf32>
    %10 = vector.extract_strided_slice %2 {offsets = [2, 0], sizes = [1, 256], strides = [1, 1]} : vector<4x256xf32> to vector<1x256xf32>
    %11 = vector.extract_strided_slice %2 {offsets = [3, 0], sizes = [1, 256], strides = [1, 1]} : vector<4x256xf32> to vector<1x256xf32>
    %12 = vector.broadcast %6 : vector<4x1xf32> to vector<4x256xf32>
    %13 = vector.broadcast %10 : vector<1x256xf32> to vector<4x256xf32>
    %14 = arith.minimumf %12, %13 : vector<4x256xf32>
    %15 = vector.broadcast %4 : vector<4x1xf32> to vector<4x256xf32>
    %16 = vector.broadcast %8 : vector<1x256xf32> to vector<4x256xf32>
    %17 = arith.maximumf %15, %16 : vector<4x256xf32>
    %18 = arith.subf %14, %17 : vector<4x256xf32>
    %cst = arith.constant 0.000000e+00 : f32
    %19 = vector.broadcast %cst : f32 to vector<4x256xf32>
    %20 = arith.maximumf %18, %19 : vector<4x256xf32>
    %21 = vector.broadcast %7 : vector<4x1xf32> to vector<4x256xf32>
    %22 = vector.broadcast %11 : vector<1x256xf32> to vector<4x256xf32>
    %23 = arith.minimumf %21, %22 : vector<4x256xf32>
    %24 = vector.broadcast %5 : vector<4x1xf32> to vector<4x256xf32>
    %25 = vector.broadcast %9 : vector<1x256xf32> to vector<4x256xf32>
    %26 = arith.maximumf %24, %25 : vector<4x256xf32>
    %27 = arith.subf %23, %26 : vector<4x256xf32>
    %cst_6 = arith.constant 0.000000e+00 : f32
    %28 = vector.broadcast %cst_6 : f32 to vector<4x256xf32>
    %29 = arith.maximumf %27, %28 : vector<4x256xf32>
    %30 = arith.mulf %20, %29 : vector<4x256xf32>
    %31 = arith.subf %6, %4 : vector<4x1xf32>
    %32 = arith.subf %7, %5 : vector<4x1xf32>
    %33 = arith.mulf %31, %32 : vector<4x1xf32>
    %34 = vector.broadcast %33 : vector<4x1xf32> to vector<4x256xf32>
    %35 = vector.broadcast %3 : vector<1x256xf32> to vector<4x256xf32>
    %36 = arith.addf %34, %35 : vector<4x256xf32>
    %37 = arith.subf %36, %30 : vector<4x256xf32>
    %cst_7 = arith.constant 0.000000e+00 : f32
    %38 = vector.broadcast %cst_7 : f32 to vector<4x256xf32>
    %39 = arith.cmpf oeq, %37, %38 : vector<4x256xf32>
    %cst_8 = arith.constant 1.000000e+00 : f32
    %40 = vector.broadcast %cst_8 : f32 to vector<4x256xf32>
    %41 = arith.select %39, %40, %37 : vector<4x256xi1>, vector<4x256xf32>
    %42 = tpu.reciprocal %41 : vector<4x256xf32> -> vector<4x256xf32>
    %43 = arith.mulf %30, %42 : vector<4x256xf32>
    %cst_9 = arith.constant dense<0xFF800000> : vector<256xf32>
    %44 = vector.multi_reduction <maximumf>, %43, %cst_9 [0] : vector<4x256xf32> to vector<256xf32>
    %45 = vector.shape_cast %44 : vector<256xf32> to vector<1x256xf32>
    %46 = tpu.iota {dimensions = array<i32: 0>} : vector<4x256xi32>
    %47 = vector.broadcast %45 : vector<1x256xf32> to vector<4x256xf32>
    %48 = arith.cmpf oeq, %43, %47 : vector<4x256xf32>
    %c4_i32 = arith.constant 4 : i32
    %49 = vector.broadcast %c4_i32 : i32 to vector<4x256xi32>
    %50 = arith.select %48, %46, %49 : vector<4x256xi1>, vector<4x256xi32>
    %cst_10 = arith.constant dense<2147483647> : vector<256xi32>
    %51 = vector.multi_reduction <minsi>, %50, %cst_10 [0] : vector<4x256xi32> to vector<256xi32>
    %52 = vector.shape_cast %51 : vector<256xi32> to vector<1x256xi32>
    %c0_11 = arith.constant 0 : index
    %c0_12 = arith.constant 0 : index
    %c0_13 = arith.constant 0 : index
    %53 = vector.load %arg4[%c0_11, %c0_12, %c0_13] : memref<1x1x256xf32, #tpu.memory_space<vmem>>, vector<1x1x256xf32>
    %54 = vector.shape_cast %53 : vector<1x1x256xf32> to vector<1x256xf32>
    %55 = vector.shape_cast %45 : vector<1x256xf32> to vector<1x1x256xf32>
    tpu.vector_store %arg4[%c0_11, %c0_12, %c0_13], %55 {strides = array<i32>} : memref<1x1x256xf32, #tpu.memory_space<vmem>>, vector<1x1x256xf32>,
    %c0_14 = arith.constant 0 : index
    %c0_15 = arith.constant 0 : index
    %c0_16 = arith.constant 0 : index
    %56 = vector.load %arg5[%c0_14, %c0_15, %c0_16] : memref<1x1x256xi32, #tpu.memory_space<vmem>>, vector<1x1x256xi32>
    %57 = vector.shape_cast %56 : vector<1x1x256xi32> to vector<1x256xi32>
    %58 = vector.shape_cast %52 : vector<1x256xi32> to vector<1x1x256xi32>
    tpu.vector_store %arg5[%c0_14, %c0_15, %c0_16], %58 {strides = array<i32>} : memref<1x1x256xi32, #tpu.memory_space<vmem>>, vector<1x1x256xi32>,
    %cst_17 = arith.constant dense<0xFF800000> : vector<4xf32>
    %59 = vector.multi_reduction <maximumf>, %43, %cst_17 [1] : vector<4x256xf32> to vector<4xf32>
    %60 = vector.shape_cast %59 : vector<4xf32> to vector<4x1xf32>
    %61 = tpu.iota {dimensions = array<i32: 1>} : vector<4x256xi32>
    %62 = vector.broadcast %60 : vector<4x1xf32> to vector<4x256xf32>
    %63 = arith.cmpf oeq, %43, %62 : vector<4x256xf32>
    %c256_i32 = arith.constant 256 : i32
    %64 = vector.broadcast %c256_i32 : i32 to vector<4x256xi32>
    %65 = arith.select %63, %61, %64 : vector<4x256xi1>, vector<4x256xi32>
    %cst_18 = arith.constant dense<2147483647> : vector<4xi32>
    %66 = vector.multi_reduction <minsi>, %65, %cst_18 [1] : vector<4x256xi32> to vector<4xi32>
    %67 = vector.shape_cast %66 : vector<4xi32> to vector<4x1xi32>
    %c0_19 = arith.constant 0 : index
    %c0_20 = arith.constant 0 : index
    %c0_21 = arith.constant 0 : index
    %68 = vector.load %arg6[%c0_19, %c0_20, %c0_21] : memref<1x4x1xf32, #tpu.memory_space<vmem>>, vector<1x4x1xf32>
    %69 = vector.shape_cast %68 : vector<1x4x1xf32> to vector<4x1xf32>
    %70 = vector.shape_cast %60 : vector<4x1xf32> to vector<1x4x1xf32>
    tpu.vector_store %arg6[%c0_19, %c0_20, %c0_21], %70 {strides = array<i32>} : memref<1x4x1xf32, #tpu.memory_space<vmem>>, vector<1x4x1xf32>,
    %c0_22 = arith.constant 0 : index
    %c0_23 = arith.constant 0 : index
    %c0_24 = arith.constant 0 : index
    %71 = vector.load %arg7[%c0_22, %c0_23, %c0_24] : memref<1x4x1xi32, #tpu.memory_space<vmem>>, vector<1x4x1xi32>
    %72 = vector.shape_cast %71 : vector<1x4x1xi32> to vector<4x1xi32>
    %73 = vector.shape_cast %67 : vector<4x1xi32> to vector<1x4x1xi32>
    tpu.vector_store %arg7[%c0_22, %c0_23, %c0_24], %73 {strides = array<i32>} : memref<1x4x1xi32, #tpu.memory_space<vmem>>, vector<1x4x1xi32>,
    return
  }
  func.func @transform_0(%arg0: i32) -> (i32, i32, i32) {
    %c0_i32 = arith.constant 0 : i32
    %c0_i32_0 = arith.constant 0 : i32
    %c0_i32_1 = arith.constant 0 : i32
    return %arg0, %c0_i32, %c0_i32_0 : i32, i32, i32
  }
  func.func @transform_1(%arg0: i32) -> (i32, i32) {
    %c0_i32 = arith.constant 0 : i32
    %c0_i32_0 = arith.constant 0 : i32
    %c0_i32_1 = arith.constant 0 : i32
    return %c0_i32, %c0_i32_0 : i32, i32
  }
  func.func @transform_2(%arg0: i32) -> (i32, i32) {
    %c0_i32 = arith.constant 0 : i32
    %c0_i32_0 = arith.constant 0 : i32
    %c0_i32_1 = arith.constant 0 : i32
    return %c0_i32, %c0_i32_0 : i32, i32
  }
  func.func @transform_3(%arg0: i32) -> (i32, i32, i32) {
    %c0_i32 = arith.constant 0 : i32
    %c0_i32_0 = arith.constant 0 : i32
    %c0_i32_1 = arith.constant 0 : i32
    return %arg0, %c0_i32, %c0_i32_0 : i32, i32, i32
  }
  func.func @transform_4(%arg0: i32) -> (i32, i32, i32) {
    %c0_i32 = arith.constant 0 : i32
    %c0_i32_0 = arith.constant 0 : i32
    %c0_i32_1 = arith.constant 0 : i32
    return %arg0, %c0_i32, %c0_i32_0 : i32, i32, i32
  }
  func.func @transform_5(%arg0: i32) -> (i32, i32, i32) {
    %c0_i32 = arith.constant 0 : i32
    %c0_i32_0 = arith.constant 0 : i32
    %c0_i32_1 = arith.constant 0 : i32
    return %arg0, %c0_i32, %c0_i32_0 : i32, i32, i32
  }
  func.func @transform_6(%arg0: i32) -> (i32, i32, i32) {
    %c0_i32 = arith.constant 0 : i32
    %c0_i32_0 = arith.constant 0 : i32
    %c0_i32_1 = arith.constant 0 : i32
    return %arg0, %c0_i32, %c0_i32_0 : i32, i32, i32
  }
}

module attributes {stable_mosaic.version = 11 : i64} {
  func.func @_loss_kernel(%arg0: i32, %arg1: memref<1x256x4xf32, #tpu.memory_space<vmem>>, %arg2: memref<1x256x4xf32, #tpu.memory_space<vmem>>, %arg3: memref<1x256x10xf32, #tpu.memory_space<vmem>>, %arg4: memref<1x256x10xf32, #tpu.memory_space<vmem>>, %arg5: memref<1x2x256xf32, #tpu.memory_space<vmem>>, %arg6: memref<1x256x1xf32, #tpu.memory_space<vmem>>, %arg7: memref<1x1x256xf32, #tpu.memory_space<vmem>>, %arg8: memref<1x1x128xf32, #tpu.memory_space<vmem>>) attributes {dimension_semantics = [#tpu.dimension_semantics<parallel>], iteration_bounds = array<i64: 2>, scalar_prefetch = 0 : i64, scratch_operands = 0 : i64, tpu.core_type = #tpu.core_type<tc>, window_params = [{transform_indices = @transform_0, window_bounds = array<i64: 1, 256, 4>}, {transform_indices = @transform_1, window_bounds = array<i64: 1, 256, 4>}, {transform_indices = @transform_2, window_bounds = array<i64: 1, 256, 10>}, {transform_indices = @transform_3, window_bounds = array<i64: 1, 256, 10>}, {transform_indices = @transform_4, window_bounds = array<i64: 1, 2, 256>}, {transform_indices = @transform_5, window_bounds = array<i64: 1, 256, 1>}, {transform_indices = @transform_6, window_bounds = array<i64: 1, 1, 256>}, {transform_indices = @transform_7, window_bounds = array<i64: 1, 1, 128>}]} {
    %c0 = arith.constant 0 : index
    %c0_0 = arith.constant 0 : index
    %c0_1 = arith.constant 0 : index
    %0 = vector.load %arg6[%c0, %c0_0, %c0_1] : memref<1x256x1xf32, #tpu.memory_space<vmem>>, vector<1x256x1xf32>
    %1 = vector.shape_cast %0 : vector<1x256x1xf32> to vector<256x1xf32>
    %cst = arith.constant 0.000000e+00 : f32
    %2 = vector.broadcast %cst : f32 to vector<256x1xf32>
    %3 = arith.cmpf one, %1, %2 : vector<256x1xf32>
    %4 = arith.extui %3 : vector<256x1xi1> to vector<256x1xi32>
    %5 = arith.sitofp %4 : vector<256x1xi32> to vector<256x1xf32>
    %cst_2 = arith.constant 0.000000e+00 : f32
    %6 = vector.broadcast %cst_2 : f32 to vector<256x1xf32>
    %7 = arith.cmpf ogt, %1, %6 : vector<256x1xf32>
    %8 = arith.extui %7 : vector<256x1xi1> to vector<256x1xi32>
    %9 = arith.sitofp %8 : vector<256x1xi32> to vector<256x1xf32>
    %c0_3 = arith.constant 0 : index
    %c0_4 = arith.constant 0 : index
    %c0_5 = arith.constant 0 : index
    %10 = vector.load %arg1[%c0_3, %c0_4, %c0_5] : memref<1x256x4xf32, #tpu.memory_space<vmem>>, vector<1x256x4xf32>
    %11 = vector.shape_cast %10 : vector<1x256x4xf32> to vector<256x4xf32>
    %c0_6 = arith.constant 0 : index
    %c0_7 = arith.constant 0 : index
    %c0_8 = arith.constant 0 : index
    %12 = vector.load %arg2[%c0_6, %c0_7, %c0_8] : memref<1x256x4xf32, #tpu.memory_space<vmem>>, vector<1x256x4xf32>
    %13 = vector.shape_cast %12 : vector<1x256x4xf32> to vector<256x4xf32>
    %14 = arith.subf %11, %13 : vector<256x4xf32>
    %15 = math.absf %14 : vector<256x4xf32>
    %cst_9 = arith.constant 1.000000e+00 : f32
    %16 = vector.broadcast %cst_9 : f32 to vector<256x4xf32>
    %17 = arith.cmpf olt, %15, %16 : vector<256x4xf32>
    %cst_10 = arith.constant 5.000000e-01 : f32
    %18 = vector.broadcast %cst_10 : f32 to vector<256x4xf32>
    %19 = arith.mulf %18, %14 : vector<256x4xf32>
    %20 = arith.mulf %19, %14 : vector<256x4xf32>
    %cst_11 = arith.constant 5.000000e-01 : f32
    %21 = vector.broadcast %cst_11 : f32 to vector<256x4xf32>
    %22 = arith.subf %15, %21 : vector<256x4xf32>
    %23 = arith.select %17, %20, %22 : vector<256x4xi1>, vector<256x4xf32>
    %24 = vector.broadcast %5 : vector<256x1xf32> to vector<256x4xf32>
    %25 = arith.mulf %23, %24 : vector<256x4xf32>
    %26 = vector.shape_cast %25 : vector<256x4xf32> to vector<1x256x4xf32>
    %cst_12 = arith.constant dense<0.000000e+00> : vector<1xf32>
    %27 = vector.multi_reduction <add>, %26, %cst_12 [1, 2] : vector<1x256x4xf32> to vector<1xf32>
    %28 = vector.shape_cast %27 : vector<1xf32> to vector<1x1x1xf32>
    %29 = vector.extract %28[0, 0, 0] : f32 from vector<1x1x1xf32>
    %c0_13 = arith.constant 0 : index
    %c0_14 = arith.constant 0 : index
    %c0_15 = arith.constant 0 : index
    %30 = vector.load %arg3[%c0_13, %c0_14, %c0_15] : memref<1x256x10xf32, #tpu.memory_space<vmem>>, vector<1x256x10xf32>
    %31 = vector.shape_cast %30 : vector<1x256x10xf32> to vector<256x10xf32>
    %c0_16 = arith.constant 0 : index
    %c0_17 = arith.constant 0 : index
    %c0_18 = arith.constant 0 : index
    %32 = vector.load %arg4[%c0_16, %c0_17, %c0_18] : memref<1x256x10xf32, #tpu.memory_space<vmem>>, vector<1x256x10xf32>
    %33 = vector.shape_cast %32 : vector<1x256x10xf32> to vector<256x10xf32>
    %34 = arith.subf %31, %33 : vector<256x10xf32>
    %35 = math.absf %34 : vector<256x10xf32>
    %cst_19 = arith.constant 1.000000e+00 : f32
    %36 = vector.broadcast %cst_19 : f32 to vector<256x10xf32>
    %37 = arith.cmpf olt, %35, %36 : vector<256x10xf32>
    %cst_20 = arith.constant 5.000000e-01 : f32
    %38 = vector.broadcast %cst_20 : f32 to vector<256x10xf32>
    %39 = arith.mulf %38, %34 : vector<256x10xf32>
    %40 = arith.mulf %39, %34 : vector<256x10xf32>
    %cst_21 = arith.constant 5.000000e-01 : f32
    %41 = vector.broadcast %cst_21 : f32 to vector<256x10xf32>
    %42 = arith.subf %35, %41 : vector<256x10xf32>
    %43 = arith.select %37, %40, %42 : vector<256x10xi1>, vector<256x10xf32>
    %44 = vector.broadcast %9 : vector<256x1xf32> to vector<256x10xf32>
    %45 = arith.mulf %43, %44 : vector<256x10xf32>
    %46 = vector.shape_cast %45 : vector<256x10xf32> to vector<1x256x10xf32>
    %cst_22 = arith.constant dense<0.000000e+00> : vector<1xf32>
    %47 = vector.multi_reduction <add>, %46, %cst_22 [1, 2] : vector<1x256x10xf32> to vector<1xf32>
    %48 = vector.shape_cast %47 : vector<1xf32> to vector<1x1x1xf32>
    %49 = vector.extract %48[0, 0, 0] : f32 from vector<1x1x1xf32>
    %c0_23 = arith.constant 0 : index
    %c0_24 = arith.constant 0 : index
    %c0_25 = arith.constant 0 : index
    %50 = vector.load %arg5[%c0_23, %c0_24, %c0_25] : memref<1x2x256xf32, #tpu.memory_space<vmem>>, vector<1x2x256xf32>
    %51 = vector.shape_cast %50 : vector<1x2x256xf32> to vector<2x256xf32>
    %c0_26 = arith.constant 0 : index
    %c0_27 = arith.constant 0 : index
    %c0_28 = arith.constant 0 : index
    %52 = vector.load %arg7[%c0_26, %c0_27, %c0_28] : memref<1x1x256xf32, #tpu.memory_space<vmem>>, vector<1x1x256xf32>
    %53 = vector.shape_cast %52 : vector<1x1x256xf32> to vector<1x256xf32>
    %cst_29 = arith.constant 0.000000e+00 : f32
    %54 = vector.broadcast %cst_29 : f32 to vector<1x256xf32>
    %55 = arith.cmpf one, %53, %54 : vector<1x256xf32>
    %56 = arith.extui %55 : vector<1x256xi1> to vector<1x256xi32>
    %57 = arith.sitofp %56 : vector<1x256xi32> to vector<1x256xf32>
    %cst_30 = arith.constant 0.000000e+00 : f32
    %58 = vector.broadcast %cst_30 : f32 to vector<1x256xf32>
    %59 = arith.cmpf ogt, %53, %58 : vector<1x256xf32>
    %60 = arith.extui %59 : vector<1x256xi1> to vector<1x256xi32>
    %61 = arith.sitofp %60 : vector<1x256xi32> to vector<1x256xf32>
    %62 = arith.fptosi %57 : vector<1x256xf32> to vector<1x256xi32>
    %63 = tpu.iota {dimensions = array<i32: 0>} : vector<2x256xi32>
    %64 = vector.broadcast %62 : vector<1x256xi32> to vector<2x256xi32>
    %65 = arith.cmpi eq, %63, %64 : vector<2x256xi32>
    %66 = arith.extui %65 : vector<2x256xi1> to vector<2x256xi32>
    %67 = arith.sitofp %66 : vector<2x256xi32> to vector<2x256xf32>
    %68 = arith.mulf %51, %67 : vector<2x256xf32>
    %cst_31 = arith.constant dense<0.000000e+00> : vector<256xf32>
    %69 = vector.multi_reduction <add>, %68, %cst_31 [0] : vector<2x256xf32> to vector<256xf32>
    %70 = vector.shape_cast %69 : vector<256xf32> to vector<1x256xf32>
    %cst_32 = arith.constant dense<0xFF800000> : vector<256xf32>
    %71 = vector.multi_reduction <maximumf>, %51, %cst_32 [0] : vector<2x256xf32> to vector<256xf32>
    %72 = vector.shape_cast %71 : vector<256xf32> to vector<1x256xf32>
    %73 = vector.broadcast %72 : vector<1x256xf32> to vector<2x256xf32>
    %74 = arith.subf %51, %73 : vector<2x256xf32>
    %75 = math.exp %74 : vector<2x256xf32>
    %cst_33 = arith.constant dense<0.000000e+00> : vector<256xf32>
    %76 = vector.multi_reduction <add>, %75, %cst_33 [0] : vector<2x256xf32> to vector<256xf32>
    %77 = vector.shape_cast %76 : vector<256xf32> to vector<1x256xf32>
    %78 = math.log %77 : vector<1x256xf32>
    %79 = arith.addf %78, %72 : vector<1x256xf32>
    %80 = arith.subf %79, %70 : vector<1x256xf32>
    %cst_34 = arith.constant 0.000000e+00 : f32
    %81 = vector.broadcast %cst_34 : f32 to vector<1x256xf32>
    %82 = arith.cmpf ogt, %57, %81 : vector<1x256xf32>
    %cst_35 = arith.constant 0.000000e+00 : f32
    %83 = vector.broadcast %cst_35 : f32 to vector<1x256xf32>
    %84 = arith.select %82, %83, %80 : vector<1x256xi1>, vector<1x256xf32>
    %85 = vector.shape_cast %57 : vector<1x256xf32> to vector<1x1x256xf32>
    %cst_36 = arith.constant dense<0.000000e+00> : vector<1xf32>
    %86 = vector.multi_reduction <add>, %85, %cst_36 [1, 2] : vector<1x1x256xf32> to vector<1xf32>
    %87 = vector.shape_cast %86 : vector<1xf32> to vector<1x1x1xf32>
    %88 = vector.extract %87[0, 0, 0] : f32 from vector<1x1x1xf32>
    %89 = vector.shape_cast %61 : vector<1x256xf32> to vector<1x1x256xf32>
    %cst_37 = arith.constant dense<0.000000e+00> : vector<1xf32>
    %90 = vector.multi_reduction <add>, %89, %cst_37 [1, 2] : vector<1x1x256xf32> to vector<1xf32>
    %91 = vector.shape_cast %90 : vector<1xf32> to vector<1x1x1xf32>
    %92 = vector.extract %91[0, 0, 0] : f32 from vector<1x1x1xf32>
    %cst_38 = arith.constant 7.000000e+00 : f32
    %93 = arith.mulf %cst_38, %88 : f32
    %cst_39 = arith.constant 2.550000e+02 : f32
    %94 = arith.minimumf %93, %cst_39 : f32
    %cst_40 = arith.constant 0.000000e+00 : f32
    %95 = vector.broadcast %cst_40 : f32 to vector<1x256xf32>
    %c0_i32 = arith.constant 0 : i32
    %c32_i32 = arith.constant 32 : i32
    %96 = arith.addi %c0_i32, %c32_i32 : i32
    %c1_i32 = arith.constant 1 : i32
    %97:2 = scf.for %arg9 = %c0_i32 to %96 step %c1_i32 iter_args(%arg10 = %84, %arg11 = %95) -> (vector<1x256xf32>, vector<1x256xf32>)  : i32 {
      %c1_i32_52 = arith.constant 1 : i32
      %141 = tpu.dynamic_rotate %arg10 by %c1_i32_52 dim 1 : vector<1x256xf32>, i32 -> vector<1x256xf32>
      %142 = arith.cmpf ogt, %141, %84 : vector<1x256xf32>
      %143 = arith.extui %142 : vector<1x256xi1> to vector<1x256xi32>
      %144 = arith.sitofp %143 : vector<1x256xi32> to vector<1x256xf32>
      %145 = arith.addf %arg11, %144 : vector<1x256xf32>
      %c1_i32_53 = arith.constant 1 : i32
      %146 = tpu.dynamic_rotate %141 by %c1_i32_53 dim 1 : vector<1x256xf32>, i32 -> vector<1x256xf32>
      %147 = arith.cmpf ogt, %146, %84 : vector<1x256xf32>
      %148 = arith.extui %147 : vector<1x256xi1> to vector<1x256xi32>
      %149 = arith.sitofp %148 : vector<1x256xi32> to vector<1x256xf32>
      %150 = arith.addf %145, %149 : vector<1x256xf32>
      %c1_i32_54 = arith.constant 1 : i32
      %151 = tpu.dynamic_rotate %146 by %c1_i32_54 dim 1 : vector<1x256xf32>, i32 -> vector<1x256xf32>
      %152 = arith.cmpf ogt, %151, %84 : vector<1x256xf32>
      %153 = arith.extui %152 : vector<1x256xi1> to vector<1x256xi32>
      %154 = arith.sitofp %153 : vector<1x256xi32> to vector<1x256xf32>
      %155 = arith.addf %150, %154 : vector<1x256xf32>
      %c1_i32_55 = arith.constant 1 : i32
      %156 = tpu.dynamic_rotate %151 by %c1_i32_55 dim 1 : vector<1x256xf32>, i32 -> vector<1x256xf32>
      %157 = arith.cmpf ogt, %156, %84 : vector<1x256xf32>
      %158 = arith.extui %157 : vector<1x256xi1> to vector<1x256xi32>
      %159 = arith.sitofp %158 : vector<1x256xi32> to vector<1x256xf32>
      %160 = arith.addf %155, %159 : vector<1x256xf32>
      %c1_i32_56 = arith.constant 1 : i32
      %161 = tpu.dynamic_rotate %156 by %c1_i32_56 dim 1 : vector<1x256xf32>, i32 -> vector<1x256xf32>
      %162 = arith.cmpf ogt, %161, %84 : vector<1x256xf32>
      %163 = arith.extui %162 : vector<1x256xi1> to vector<1x256xi32>
      %164 = arith.sitofp %163 : vector<1x256xi32> to vector<1x256xf32>
      %165 = arith.addf %160, %164 : vector<1x256xf32>
      %c1_i32_57 = arith.constant 1 : i32
      %166 = tpu.dynamic_rotate %161 by %c1_i32_57 dim 1 : vector<1x256xf32>, i32 -> vector<1x256xf32>
      %167 = arith.cmpf ogt, %166, %84 : vector<1x256xf32>
      %168 = arith.extui %167 : vector<1x256xi1> to vector<1x256xi32>
      %169 = arith.sitofp %168 : vector<1x256xi32> to vector<1x256xf32>
      %170 = arith.addf %165, %169 : vector<1x256xf32>
      %c1_i32_58 = arith.constant 1 : i32
      %171 = tpu.dynamic_rotate %166 by %c1_i32_58 dim 1 : vector<1x256xf32>, i32 -> vector<1x256xf32>
      %172 = arith.cmpf ogt, %171, %84 : vector<1x256xf32>
      %173 = arith.extui %172 : vector<1x256xi1> to vector<1x256xi32>
      %174 = arith.sitofp %173 : vector<1x256xi32> to vector<1x256xf32>
      %175 = arith.addf %170, %174 : vector<1x256xf32>
      %c1_i32_59 = arith.constant 1 : i32
      %176 = tpu.dynamic_rotate %171 by %c1_i32_59 dim 1 : vector<1x256xf32>, i32 -> vector<1x256xf32>
      %177 = arith.cmpf ogt, %176, %84 : vector<1x256xf32>
      %178 = arith.extui %177 : vector<1x256xi1> to vector<1x256xi32>
      %179 = arith.sitofp %178 : vector<1x256xi32> to vector<1x256xf32>
      %180 = arith.addf %175, %179 : vector<1x256xf32>
      scf.yield %176, %180 : vector<1x256xf32>, vector<1x256xf32>
    }
    %98 = vector.broadcast %94 : f32 to vector<1x256xf32>
    %99 = arith.cmpf olt, %97#1, %98 : vector<1x256xf32>
    %100 = arith.extui %99 : vector<1x256xi1> to vector<1x256xi32>
    %101 = arith.sitofp %100 : vector<1x256xi32> to vector<1x256xf32>
    %102 = arith.maximumf %57, %101 : vector<1x256xf32>
    %103 = arith.mulf %80, %102 : vector<1x256xf32>
    %104 = vector.shape_cast %103 : vector<1x256xf32> to vector<1x1x256xf32>
    %cst_41 = arith.constant dense<0.000000e+00> : vector<1xf32>
    %105 = vector.multi_reduction <add>, %104, %cst_41 [1, 2] : vector<1x1x256xf32> to vector<1xf32>
    %106 = vector.shape_cast %105 : vector<1xf32> to vector<1x1x1xf32>
    %107 = vector.extract %106[0, 0, 0] : f32 from vector<1x1x1xf32>
    %108 = tpu.iota {dimensions = array<i32: 1>} : vector<1x128xi32>
    %c0_i32_42 = arith.constant 0 : i32
    %109 = vector.broadcast %c0_i32_42 : i32 to vector<1x128xi32>
    %110 = arith.cmpi eq, %108, %109 : vector<1x128xi32>
    %cst_43 = arith.constant 0.000000e+00 : f32
    %111 = vector.broadcast %29 : f32 to vector<1x128xf32>
    %112 = vector.broadcast %cst_43 : f32 to vector<1x128xf32>
    %113 = arith.select %110, %111, %112 : vector<1x128xi1>, vector<1x128xf32>
    %c1_i32_44 = arith.constant 1 : i32
    %114 = vector.broadcast %c1_i32_44 : i32 to vector<1x128xi32>
    %115 = arith.cmpi eq, %108, %114 : vector<1x128xi32>
    %cst_45 = arith.constant 0.000000e+00 : f32
    %116 = vector.broadcast %107 : f32 to vector<1x128xf32>
    %117 = vector.broadcast %cst_45 : f32 to vector<1x128xf32>
    %118 = arith.select %115, %116, %117 : vector<1x128xi1>, vector<1x128xf32>
    %119 = arith.addf %113, %118 : vector<1x128xf32>
    %c2_i32 = arith.constant 2 : i32
    %120 = vector.broadcast %c2_i32 : i32 to vector<1x128xi32>
    %121 = arith.cmpi eq, %108, %120 : vector<1x128xi32>
    %cst_46 = arith.constant 0.000000e+00 : f32
    %122 = vector.broadcast %49 : f32 to vector<1x128xf32>
    %123 = vector.broadcast %cst_46 : f32 to vector<1x128xf32>
    %124 = arith.select %121, %122, %123 : vector<1x128xi1>, vector<1x128xf32>
    %125 = arith.addf %119, %124 : vector<1x128xf32>
    %c3_i32 = arith.constant 3 : i32
    %126 = vector.broadcast %c3_i32 : i32 to vector<1x128xi32>
    %127 = arith.cmpi eq, %108, %126 : vector<1x128xi32>
    %cst_47 = arith.constant 0.000000e+00 : f32
    %128 = vector.broadcast %88 : f32 to vector<1x128xf32>
    %129 = vector.broadcast %cst_47 : f32 to vector<1x128xf32>
    %130 = arith.select %127, %128, %129 : vector<1x128xi1>, vector<1x128xf32>
    %131 = arith.addf %125, %130 : vector<1x128xf32>
    %c4_i32 = arith.constant 4 : i32
    %132 = vector.broadcast %c4_i32 : i32 to vector<1x128xi32>
    %133 = arith.cmpi eq, %108, %132 : vector<1x128xi32>
    %cst_48 = arith.constant 0.000000e+00 : f32
    %134 = vector.broadcast %92 : f32 to vector<1x128xf32>
    %135 = vector.broadcast %cst_48 : f32 to vector<1x128xf32>
    %136 = arith.select %133, %134, %135 : vector<1x128xi1>, vector<1x128xf32>
    %137 = arith.addf %131, %136 : vector<1x128xf32>
    %c0_49 = arith.constant 0 : index
    %c0_50 = arith.constant 0 : index
    %c0_51 = arith.constant 0 : index
    %138 = vector.load %arg8[%c0_49, %c0_50, %c0_51] : memref<1x1x128xf32, #tpu.memory_space<vmem>>, vector<1x1x128xf32>
    %139 = vector.shape_cast %138 : vector<1x1x128xf32> to vector<1x128xf32>
    %140 = vector.shape_cast %137 : vector<1x128xf32> to vector<1x1x128xf32>
    tpu.vector_store %arg8[%c0_49, %c0_50, %c0_51], %140 {strides = array<i32>} : memref<1x1x128xf32, #tpu.memory_space<vmem>>, vector<1x1x128xf32>,
    return
  }
  func.func @transform_0(%arg0: i32) -> (i32, i32, i32) {
    %c0_i32 = arith.constant 0 : i32
    %c0_i32_0 = arith.constant 0 : i32
    %c0_i32_1 = arith.constant 0 : i32
    return %arg0, %c0_i32, %c0_i32_0 : i32, i32, i32
  }
  func.func @transform_1(%arg0: i32) -> (i32, i32, i32) {
    %c0_i32 = arith.constant 0 : i32
    %c0_i32_0 = arith.constant 0 : i32
    %c0_i32_1 = arith.constant 0 : i32
    return %arg0, %c0_i32, %c0_i32_0 : i32, i32, i32
  }
  func.func @transform_2(%arg0: i32) -> (i32, i32, i32) {
    %c0_i32 = arith.constant 0 : i32
    %c0_i32_0 = arith.constant 0 : i32
    %c0_i32_1 = arith.constant 0 : i32
    return %arg0, %c0_i32, %c0_i32_0 : i32, i32, i32
  }
  func.func @transform_3(%arg0: i32) -> (i32, i32, i32) {
    %c0_i32 = arith.constant 0 : i32
    %c0_i32_0 = arith.constant 0 : i32
    %c0_i32_1 = arith.constant 0 : i32
    return %arg0, %c0_i32, %c0_i32_0 : i32, i32, i32
  }
  func.func @transform_4(%arg0: i32) -> (i32, i32, i32) {
    %c0_i32 = arith.constant 0 : i32
    %c0_i32_0 = arith.constant 0 : i32
    %c0_i32_1 = arith.constant 0 : i32
    return %arg0, %c0_i32, %c0_i32_0 : i32, i32, i32
  }
  func.func @transform_5(%arg0: i32) -> (i32, i32, i32) {
    %c0_i32 = arith.constant 0 : i32
    %c0_i32_0 = arith.constant 0 : i32
    %c0_i32_1 = arith.constant 0 : i32
    return %arg0, %c0_i32, %c0_i32_0 : i32, i32, i32
  }
  func.func @transform_6(%arg0: i32) -> (i32, i32, i32) {
    %c0_i32 = arith.constant 0 : i32
    %c0_i32_0 = arith.constant 0 : i32
    %c0_i32_1 = arith.constant 0 : i32
    return %arg0, %c0_i32, %c0_i32_0 : i32, i32, i32
  }
  func.func @transform_7(%arg0: i32) -> (i32, i32, i32) {
    %c0_i32 = arith.constant 0 : i32
    %c0_i32_0 = arith.constant 0 : i32
    %c0_i32_1 = arith.constant 0 : i32
    return %arg0, %c0_i32, %c0_i32_0 : i32, i32, i32
  }
}

</mosaic_0001>

<llo_original>
// kernel: multibox_loss.2
$region0: #{multibox_loss.2}
  #allocation0 [shape = 'u32[]', space=smem, size = 0x4, offset = 0x4, fixed_abs, tag = 'smem constant byte address 0x4 - core index']
  #allocation1 [shape = 'u32[144,128]{1,0:T(1,128)}', space=vmem, size = 0x12000, scoped, tag = 'internal scratch']
  %s0 = inlined_call_operand.vmem [shape: f32[2,4,4], index: 0, kind: input, shape index: {}]
  %s1 = inlined_call_operand.vmem [shape: f32[4,256], index: 1, kind: input, shape index: {}]
  %s2 = inlined_call_operand.vmem [shape: f32[1,256], index: 2, kind: input, shape index: {}]
  %s3 = inlined_call_operand.vmem [shape: f32[2,1,256], index: 3, kind: output, shape index: {0}]
  %s4 = inlined_call_operand.vmem [shape: s32[2,1,256], index: 4, kind: output, shape index: {1}]
  %s5 = inlined_call_operand.vmem [shape: f32[2,4,1], index: 5, kind: output, shape index: {2}]
  %s6 = inlined_call_operand.vmem [shape: s32[2,4,1], index: 6, kind: output, shape index: {3}]
  %7 = xla_tuple %s3, %s4, %s5, %s6
  %s8 = sld [smem:[#allocation0]]
  $region69: #{multibox_loss.2} parent=0
    _
  %s10 = ssub.s32 1, %s8
  %s11 = scalar_select 0, %s10, %s8
  loop: start=0, step=1, limit=4
  $region2: #{multibox_loss.2} parent=0 // loop_pre_header
    _
  $region3: #{multibox_loss.2} parent=0 // loop_header
    %s13 = sphi 0, %s17
    %p14 = scmp.ge.s32.totalorder %s13, 4
    %s23 = sphi 0, %s25
    %s26 = sphi 0, %s23
    %s27 = sphi 0, %s26
    %s43 = sphi 0, %s27
    %s47 = sphi 0, %s47
    %s49 = sphi 0, %s47
    %s50 = sphi 0, %s49
    %s64 = sphi 0, %s50
    %s68 = sphi 0, %s68
    %s70 = sphi 0, %s68
    %s71 = sphi 0, %s70
    %s85 = sphi 0, %s71
    %s91 = sphi 0, %s93
    %s94 = sphi 0, %s91
    %s95 = sphi 0, %s94
    %s111 = sphi 0, %s95
    %s117 = sphi 0, %s119
    %s120 = sphi 0, %s117
    %s121 = sphi 0, %s120
    %s137 = sphi 0, %s121
    %s143 = sphi 0, %s145
    %s146 = sphi 0, %s143
    %s147 = sphi 0, %s146
    %s163 = sphi 0, %s147
    %s169 = sphi 0, %s171
    %s172 = sphi 0, %s169
    %s173 = sphi 0, %s172
    %s189 = sphi 0, %s173
  $region4: #{multibox_loss.2} parent=0 // loop_header_branch
    %16 = sbr.rel (%p14) target = $region8
  $region5: #{multibox_loss.2} parent=0 // loop_body
    %s18 = ssub.s32 %s13, 1
    %s19 = ssub.s32 %s13, 2
    %s20 = sadd.s32 %s13, 1
    %s21 = ssub.s32 %s13, %s20
    %p22 = scmp.eq.s32.totalorder %s21, 0
    %s24 = sadd.s32 %s23, 1
    %s25 = scalar_select %p22, %s23, %s24
    %p28 = pneg %p22
    %p29 = scmp.eq.s32.totalorder %s13, 1
    %p30 = por %p28, %p29
    %p31 = scmp.ne.s32.totalorder %s23, %s26
    %p32 = scmp.eq.s32.totalorder %s13, 0
    %p33 = por %p31, %p32
    %p34 = scmp.ne.s32.totalorder %s23, %s26
    %p35 = scmp.eq.s32.totalorder %s18, 1
    %p36 = por %p34, %p35
    %p37 = scmp.ne.s32.totalorder %s26, %s27
    %p38 = scmp.eq.s32.totalorder %s18, 0
    %p39 = por %p37, %p38
    %p40 = scmp.ne.s32.totalorder %s26, %s27
    %p41 = scmp.eq.s32.totalorder %s19, 1
    %p42 = por %p40, %p41
    %p44 = scmp.ne.s32.totalorder %s27, %s43
    %p45 = scmp.eq.s32.totalorder %s19, 0
    %p46 = por %p44, %p45
    %s48 = sadd.s32 %s47, 1
    %p51 = scmp.eq.s32.totalorder %s13, 1
    %p52 = scmp.ne.s32.totalorder %s47, %s49
    %p53 = scmp.eq.s32.totalorder %s13, 0
    %p54 = por %p52, %p53
    %p55 = scmp.ne.s32.totalorder %s47, %s49
    %p56 = scmp.eq.s32.totalorder %s18, 1
    %p57 = por %p55, %p56
    %p58 = scmp.ne.s32.totalorder %s49, %s50
    %p59 = scmp.eq.s32.totalorder %s18, 0
    %p60 = por %p58, %p59
    %p61 = scmp.ne.s32.totalorder %s49, %s50
    %p62 = scmp.eq.s32.totalorder %s19, 1
    %p63 = por %p61, %p62
    %p65 = scmp.ne.s32.totalorder %s50, %s64
    %p66 = scmp.eq.s32.totalorder %s19, 0
    %p67 = por %p65, %p66
    %s69 = sadd.s32 %s68, 1
    %p72 = scmp.eq.s32.totalorder %s13, 1
    %p73 = scmp.ne.s32.totalorder %s68, %s70
    %p74 = scmp.eq.s32.totalorder %s13, 0
    %p75 = por %p73, %p74
    %p76 = scmp.ne.s32.totalorder %s68, %s70
    %p77 = scmp.eq.s32.totalorder %s18, 1
    %p78 = por %p76, %p77
    %p79 = scmp.ne.s32.totalorder %s70, %s71
    %p80 = scmp.eq.s32.totalorder %s18, 0
    %p81 = por %p79, %p80
    %p82 = scmp.ne.s32.totalorder %s70, %s71
    %p83 = scmp.eq.s32.totalorder %s19, 1
    %p84 = por %p82, %p83
    %p86 = scmp.ne.s32.totalorder %s71, %s85
    %p87 = scmp.eq.s32.totalorder %s19, 0
    %p88 = por %p86, %p87
    %s89 = ssub.s32 %s13, %s20
    %p90 = scmp.eq.s32.totalorder %s89, 0
    %s92 = sadd.s32 %s91, 1
    %s93 = scalar_select %p90, %s91, %s92
    %p96 = pneg %p90
    %p97 = scmp.eq.s32.totalorder %s13, 1
    %p98 = por %p96, %p97
    %p99 = scmp.ne.s32.totalorder %s91, %s94
    %p100 = scmp.eq.s32.totalorder %s13, 0
    %p101 = por %p99, %p100
    %p102 = scmp.ne.s32.totalorder %s91, %s94
    %p103 = scmp.eq.s32.totalorder %s18, 1
    %p104 = por %p102, %p103
    %p105 = scmp.ne.s32.totalorder %s94, %s95
    %p106 = scmp.eq.s32.totalorder %s18, 0
    %p107 = por %p105, %p106
    %p108 = scmp.ne.s32.totalorder %s94, %s95
    %p109 = scmp.eq.s32.totalorder %s19, 1
    %p110 = por %p108, %p109
    %p112 = scmp.ne.s32.totalorder %s95, %s111
    %p113 = scmp.eq.s32.totalorder %s19, 0
    %p114 = por %p112, %p113
    %s115 = ssub.s32 %s13, %s20
    %p116 = scmp.eq.s32.totalorder %s115, 0
    %s118 = sadd.s32 %s117, 1
    %s119 = scalar_select %p116, %s117, %s118
    %p122 = pneg %p116
    %p123 = scmp.eq.s32.totalorder %s13, 1
    %p124 = por %p122, %p123
    %p125 = scmp.ne.s32.totalorder %s117, %s120
    %p126 = scmp.eq.s32.totalorder %s13, 0
    %p127 = por %p125, %p126
    %p128 = scmp.ne.s32.totalorder %s117, %s120
    %p129 = scmp.eq.s32.totalorder %s18, 1
    %p130 = por %p128, %p129
    %p131 = scmp.ne.s32.totalorder %s120, %s121
    %p132 = scmp.eq.s32.totalorder %s18, 0
    %p133 = por %p131, %p132
    %p134 = scmp.ne.s32.totalorder %s120, %s121
    %p135 = scmp.eq.s32.totalorder %s19, 1
    %p136 = por %p134, %p135
    %p138 = scmp.ne.s32.totalorder %s121, %s137
    %p139 = scmp.eq.s32.totalorder %s19, 0
    %p140 = por %p138, %p139
    %s141 = ssub.s32 %s13, %s20
    %p142 = scmp.eq.s32.totalorder %s141, 0
    %s144 = sadd.s32 %s143, 1
    %s145 = scalar_select %p142, %s143, %s144
    %p148 = pneg %p142
    %p149 = scmp.eq.s32.totalorder %s13, 1
    %p150 = por %p148, %p149
    %p151 = scmp.ne.s32.totalorder %s143, %s146
    %p152 = scmp.eq.s32.totalorder %s13, 0
    %p153 = por %p151, %p152
    %p154 = scmp.ne.s32.totalorder %s143, %s146
    %p155 = scmp.eq.s32.totalorder %s18, 1
    %p156 = por %p154, %p155
    %p157 = scmp.ne.s32.totalorder %s146, %s147
    %p158 = scmp.eq.s32.totalorder %s18, 0
    %p159 = por %p157, %p158
    %p160 = scmp.ne.s32.totalorder %s146, %s147
    %p161 = scmp.eq.s32.totalorder %s19, 1
    %p162 = por %p160, %p161
    %p164 = scmp.ne.s32.totalorder %s147, %s163
    %p165 = scmp.eq.s32.totalorder %s19, 0
    %p166 = por %p164, %p165
    %s167 = ssub.s32 %s13, %s20
    %p168 = scmp.eq.s32.totalorder %s167, 0
    %s170 = sadd.s32 %s169, 1
    %s171 = scalar_select %p168, %s169, %s170
    %p174 = pneg %p168
    %p175 = scmp.eq.s32.totalorder %s13, 1
    %p176 = por %p174, %p175
    %p177 = scmp.ne.s32.totalorder %s169, %s172
    %p178 = scmp.eq.s32.totalorder %s13, 0
    %p179 = por %p177, %p178
    %p180 = scmp.ne.s32.totalorder %s169, %s172
    %p181 = scmp.eq.s32.totalorder %s18, 1
    %p182 = por %p180, %p181
    %p183 = scmp.ne.s32.totalorder %s172, %s173
    %p184 = scmp.eq.s32.totalorder %s18, 0
    %p185 = por %p183, %p184
    %p186 = scmp.ne.s32.totalorder %s172, %s173
    %p187 = scmp.eq.s32.totalorder %s19, 1
    %p188 = por %p186, %p187
    %p190 = scmp.ne.s32.totalorder %s173, %s189
    %p191 = scmp.eq.s32.totalorder %s19, 0
    %p192 = por %p190, %p191
    %p193 = scmp.le.s32.totalorder 1, %s13
    %p194 = scmp.lt.s32.totalorder %s13, 3
    %p195 = pnand %p193, %p194
    %p196 = pneg %p195
    // Predicated region
    $region9: #{multibox_loss.2} parent=5 // pred_check
      _
    $region10: #{multibox_loss.2} parent=5 // pred_check_branch
      %198 = sbr.rel (%p195) target = $region12
    $region11: #{multibox_loss.2} parent=5 // pred_region
      %s199 = ssub.s32 %s13, 1
      // Predicated region
      $region13: #{multibox_loss.2} parent=11 // pred_check
        %p200 = pneg %p60
      $region14: #{multibox_loss.2} parent=11 // pred_check_branch
        %202 = sbr.rel (%p200) target = $region16
      $region15: #{multibox_loss.2} parent=11 // pred_region
        _
      $region16: #{multibox_loss.2} parent=11 // pred_fallthru
        _
      // Predicated region
      $region17: #{multibox_loss.2} parent=11 // pred_check
        %p203 = pneg %p81
      $region18: #{multibox_loss.2} parent=11 // pred_check_branch
        %205 = sbr.rel (%p203) target = $region20
      $region19: #{multibox_loss.2} parent=11 // pred_region
        _
      $region20: #{multibox_loss.2} parent=11 // pred_fallthru
        _
    $region12: #{multibox_loss.2} parent=5 // pred_fallthru
      _
    %p206 = scmp.lt.s32.totalorder %s13, 2
    // Predicated region
    $region21: #{multibox_loss.2} parent=5 // pred_check
      %p207 = pneg %p206
    $region22: #{multibox_loss.2} parent=5 // pred_check_branch
      %209 = sbr.rel (%p207) target = $region24
    $region23: #{multibox_loss.2} parent=5 // pred_region
      // Predicated region
      $region25: #{multibox_loss.2} parent=23 // pred_check
        %p210 = pneg %p33
      $region26: #{multibox_loss.2} parent=23 // pred_check_branch
        %212 = sbr.rel (%p210) target = $region28
      $region27: #{multibox_loss.2} parent=23 // pred_region
        %p213 = scmp.lt.s32.totalorder %s13, 1
        %s214 = scalar_select %p213, %s13, 1
        %s215 = smul.addr %s214, 4
        %s216 = scalar_lea.vmem %s0, %s215
      $region28: #{multibox_loss.2} parent=23 // pred_fallthru
        _
    $region24: #{multibox_loss.2} parent=5 // pred_fallthru
      _
    %p217 = scmp.le.s32.totalorder 1, %s13
    %p218 = scmp.lt.s32.totalorder %s13, 3
    %p219 = pnand %p217, %p218
    %p220 = pneg %p219
    // Predicated region
    $region29: #{multibox_loss.2} parent=5 // pred_check
      _
    $region30: #{multibox_loss.2} parent=5 // pred_check_branch
      %222 = sbr.rel (%p219) target = $region32
    $region31: #{multibox_loss.2} parent=5 // pred_region
      %s223 = ssub.s32 %s13, 1
      %p224 = scmp.lt.s32.totalorder %s18, 1
      %s225 = scalar_select %p224, %s18, 1
      %s226 = smul.addr %s225, 4
      %s227 = scalar_lea.vmem %s0, %s226
      %p228 = pneg %p39
      %p229 = pneg %p36
      %p230 = pneg %p60
      %p231 = pneg %p57
      %p232 = pneg %p81
      %p233 = pneg %p78
      %p234 = pneg %p107
      %p235 = pneg %p104
      %p236 = scmp.lt.s32.totalorder %s18, 1
      %s237 = scalar_select %p236, %s18, 1
      %s238 = smul.addr %s237, 2
      %s239 = scalar_lea.vmem %s3, %s238
      %p240 = pneg %p133
      %p241 = pneg %p130
      %p242 = scmp.lt.s32.totalorder %s18, 1
      %s243 = scalar_select %p242, %s18, 1
      %s244 = smul.addr %s243, 2
      %s245 = scalar_lea.vmem %s4, %s244
      %p246 = pneg %p159
      %p247 = pneg %p156
      %p248 = scmp.lt.s32.totalorder %s18, 1
      %s249 = scalar_select %p248, %s18, 1
      %s250 = smul.addr %s249, 4
      %s251 = scalar_lea.vmem %s5, %s250
      %p252 = pneg %p185
      %p253 = pneg %p182
      %p254 = scmp.lt.s32.totalorder %s18, 1
      %s255 = scalar_select %p254, %s18, 1
      %s256 = smul.addr %s255, 4
      %s257 = scalar_lea.vmem %s6, %s256
      %p258 = scmp.lt.s32.totalorder %s18, 1
      %s259 = scalar_select %p258, %s18, 1
      %s260 = smul.addr %s259, 4
      %s261 = scalar_lea.vmem %s0, %s260
      %p262 = scmp.lt.s32.totalorder %s18, 1
      %s263 = scalar_select %p262, %s18, 1
      %s264 = smul.addr %s263, 2
      %s265 = scalar_lea.vmem %s3, %s264
      %p266 = scmp.lt.s32.totalorder %s18, 1
      %s267 = scalar_select %p266, %s18, 1
      %s268 = smul.addr %s267, 2
      %s269 = scalar_lea.vmem %s4, %s268
      %p270 = scmp.lt.s32.totalorder %s18, 1
      %s271 = scalar_select %p270, %s18, 1
      %s272 = smul.addr %s271, 4
      %s273 = scalar_lea.vmem %s5, %s272
      %p274 = scmp.lt.s32.totalorder %s18, 1
      %s275 = scalar_select %p274, %s18, 1
      %s276 = smul.addr %s275, 4
      %s277 = scalar_lea.vmem %s6, %s276
      %v278 = vld [vmem:[%s261] sm:$0xf]
      %v279 = vld [vmem:[%s1] sm:$0xff]
      %v280 = vld [vmem:[%s2] sm:$0x3]
      %282 = vset.pattern.permute.xlu0 2
      %283 = vperm.xlu0 %282, %v278
      %v284 = vpop.permute.xlu0 %283
      %v287 = vlaneseq
      %v288 = vshrl.u32 %v287, 7
      %v289 = vsub.s32 2, %v288
      %v290 = vrot.slane %v279, %v289
      %v291 = vlaneseq
      %v292 = vshrl.u32 %v291, 7
      %v293 = vsub.s32 6, %v292
      %v294 = vrot.slane %v279, %v293
      %v297 = vlaneseq
      %v298 = vshrl.u32 %v297, 7
      %v299 = vsub.s32 2, %v298
      %v300 = vrot.slane %v290, %v299
      %v301 = vlaneseq
      %v302 = vshrl.u32 %v301, 7
      %v303 = vsub.s32 2, %v302
      %v304 = vrot.slane %v294, %v303
      %v305 = vmin.f32 %v284, %v300
      %v306 = vmin.f32 %v284, %v304
      %307 = vset.pattern.permute.xlu0 0
      %308 = vperm.xlu0 %307, %v278
      %v309 = vpop.permute.xlu0 %308
      %v311 = vlaneseq
      %v312 = vshrl.u32 %v311, 7
      %v313 = vsub.s32 0, %v312
      %v314 = vrot.slane %v279, %v313
      %v315 = vlaneseq
      %v316 = vshrl.u32 %v315, 7
      %v317 = vsub.s32 4, %v316
      %v318 = vrot.slane %v279, %v317
      %v321 = vlaneseq
      %v322 = vshrl.u32 %v321, 7
      %v323 = vsub.s32 0, %v322
      %v324 = vrot.slane %v314, %v323
      %v325 = vlaneseq
      %v326 = vshrl.u32 %v325, 7
      %v327 = vsub.s32 0, %v326
      %v328 = vrot.slane %v318, %v327
      %v329 = vmax.f32 %v309, %v324
      %v330 = vmax.f32 %v309, %v328
      %v331 = vsub.f32 %v305, %v329
      %v332 = vsub.f32 %v306, %v330
      %v333 = vmax.f32 %v331, 0.0
      %v334 = vmax.f32 %v332, 0.0
      %335 = vset.pattern.permute.xlu0 3
      %336 = vperm.xlu0 %335, %v278
      %v337 = vpop.permute.xlu0 %336
      %v339 = vlaneseq
      %v340 = vshrl.u32 %v339, 7
      %v341 = vsub.s32 3, %v340
      %v342 = vrot.slane %v279, %v341
      %v343 = vlaneseq
      %v344 = vshrl.u32 %v343, 7
      %v345 = vsub.s32 7, %v344
      %v346 = vrot.slane %v279, %v345
      %v349 = vlaneseq
      %v350 = vshrl.u32 %v349, 7
      %v351 = vsub.s32 3, %v350
      %v352 = vrot.slane %v342, %v351
      %v353 = vlaneseq
      %v354 = vshrl.u32 %v353, 7
      %v355 = vsub.s32 3, %v354
      %v356 = vrot.slane %v346, %v355
      %v357 = vmin.f32 %v337, %v352
      %v358 = vmin.f32 %v337, %v356
      %359 = vset.pattern.permute.xlu0 1
      %360 = vperm.xlu0 %359, %v278
      %v361 = vpop.permute.xlu0 %360
      %v363 = vlaneseq
      %v364 = vshrl.u32 %v363, 7
      %v365 = vsub.s32 1, %v364
      %v366 = vrot.slane %v279, %v365
      %v367 = vlaneseq
      %v368 = vshrl.u32 %v367, 7
      %v369 = vsub.s32 5, %v368
      %v370 = vrot.slane %v279, %v369
      %v373 = vlaneseq
      %v374 = vshrl.u32 %v373, 7
      %v375 = vsub.s32 1, %v374
      %v376 = vrot.slane %v366, %v375
      %v377 = vlaneseq
      %v378 = vshrl.u32 %v377, 7
      %v379 = vsub.s32 1, %v378
      %v380 = vrot.slane %v370, %v379
      %v381 = vmax.f32 %v361, %v376
      %v382 = vmax.f32 %v361, %v380
      %v383 = vsub.f32 %v357, %v381
      %v384 = vsub.f32 %v358, %v382
      %v385 = vmax.f32 %v383, 0.0
      %v386 = vmax.f32 %v384, 0.0
      %v387 = vmul.f32 %v333, %v385
      %v388 = vmul.f32 %v334, %v386
      %389 = vrot.lane.b32.xlu0 %v278, 2
      %v390 = vpop.permute.xlu0 %389
      %v392 = vsub.f32 %v278, %v390
      %394 = vrot.lane.b32.xlu0 %v392, 127
      %v395 = vpop.permute.xlu0 %394
      %v397 = vmul.f32 %v392, %v395
      %399 = vset.pattern.permute.xlu0 2
      %400 = vperm.xlu0 %399, %v397
      %v401 = vpop.permute.xlu0 %400
      %v404 = vlaneseq
      %v405 = vshrl.u32 %v404, 7
      %v406 = vsub.s32 0, %v405
      %v407 = vrot.slane %v280, %v406
      %v408 = vlaneseq
      %v409 = vshrl.u32 %v408, 7
      %v410 = vsub.s32 1, %v409
      %v411 = vrot.slane %v280, %v410
      %v414 = vadd.f32 %v401, %v407
      %v415 = vadd.f32 %v401, %v411
      %v416 = vsub.f32 %v414, %v387
      %v417 = vsub.f32 %v415, %v388
      %vm418 = vcmp.eq.f32.partialorder %v416, 0.0
      %vm419 = vcmp.eq.f32.partialorder %v417, 0.0
      %v420 = vsel %vm418, 1.0, %v416
      %v421 = vsel %vm419, 1.0, %v417
      %v422 = vrcp.pop %v420
      %v423 = vrcp.pop %v421
      %v424 = vmul.f32 %v387, %v422
      %v425 = vmul.f32 %v388, %v423
      %vm426 = vcmask 1043456
      %v427 = vsel %vm426, %v424, -inf
      %v428 = vrot.slane %v427, 4
      %v429 = vmax.f32 %v427, %v428
      %v430 = vrot.slane %v429, 2
      %v431 = vmax.f32 %v429, %v430
      %v432 = vrot.slane %v431, 1
      %v433 = vmax.f32 %v431, %v432
      %v434 = vsel %vm426, %v425, -inf
      %v435 = vrot.slane %v434, 4
      %v436 = vmax.f32 %v434, %v435
      %v437 = vrot.slane %v436, 2
      %v438 = vmax.f32 %v436, %v437
      %v439 = vrot.slane %v438, 1
      %v440 = vmax.f32 %v438, %v439
      %v441 = vlaneseq
      %v442 = vshrl.u32 %v441, 7
      %vm443 = vcmp.eq.f32.partialorder %v424, %v433
      %vm444 = vcmp.eq.f32.partialorder %v425, %v440
      %v445 = vsel %vm443, %v442, 4
      %v446 = vsel %vm444, %v442, 4
      %v447 = vsel %vm426, %v445, 2147483647
      %v448 = vrot.slane %v447, 4
      %vm449 = vcmp.lt.s32.totalorder %v447, %v448
      %v450 = vsel %vm449, %v447, %v448
      %v451 = vrot.slane %v450, 2
      %vm452 = vcmp.lt.s32.totalorder %v450, %v451
      %v453 = vsel %vm452, %v450, %v451
      %v454 = vrot.slane %v453, 1
      %vm455 = vcmp.lt.s32.totalorder %v453, %v454
      %v456 = vsel %vm455, %v453, %v454
      %v457 = vsel %vm426, %v446, 2147483647
      %v458 = vrot.slane %v457, 4
      %vm459 = vcmp.lt.s32.totalorder %v457, %v458
      %v460 = vsel %vm459, %v457, %v458
      %v461 = vrot.slane %v460, 2
      %vm462 = vcmp.lt.s32.totalorder %v460, %v461
      %v463 = vsel %vm462, %v460, %v461
      %v464 = vrot.slane %v463, 1
      %vm465 = vcmp.lt.s32.totalorder %v463, %v464
      %v466 = vsel %vm465, %v463, %v464
      %v469 = vcombine.low %v433, %v440
      %v471 = vunpack.c.l.s4 1966171168
      %v472 = vunpack.c.0.s8 %v471
      %v473 = vlaneseq
      %v474 = vshrl.u32 %v473, 7
      %v475 = vsub.s32 %v472, %v474
      %v476 = vrot.slane %v469, %v475
      %v478 = vunpack.c.l.s4 1966171168
      %v479 = vunpack.c.0.s8 %v478
      %v480 = vlaneseq
      %v481 = vshrl.u32 %v480, 7
      %v482 = vsub.s32 %v479, %v481
      %v483 = vrot.slane %v476, %v482
      %v485 = vlaneseq
      %vm486 = vcmp.ge.s32.totalorder %v485, 0
      %vm487 = vcmp.lt.s32.totalorder %v485, 256
      %vm488 = vmand %vm486, %vm487
      %489 = vst.msk [vmem:[%s265] sm:$0x3] %vm488, %v483
      %v490 = vcombine.low %v456, %v466
      %v492 = vunpack.c.l.s4 1966171168
      %v493 = vunpack.c.0.s8 %v492
      %v494 = vlaneseq
      %v495 = vshrl.u32 %v494, 7
      %v496 = vsub.s32 %v493, %v495
      %v497 = vrot.slane %v490, %v496
      %v499 = vunpack.c.l.s4 1966171168
      %v500 = vunpack.c.0.s8 %v499
      %v501 = vlaneseq
      %v502 = vshrl.u32 %v501, 7
      %v503 = vsub.s32 %v500, %v502
      %v504 = vrot.slane %v497, %v503
      %505 = vst.msk [vmem:[%s269] sm:$0x3] %vm488, %v504
      %v506 = vmax.f32 %v427, %v434
      %507 = vmax.xlane.f32.xlu0 %v506
      %v508 = vpop.xlane.xlu0 %507
      %v509 = vlaneseq
      %v510 = vand.u32 %v509, 127
      %v511 = vadd.s32 %v510, 128
      %vm512 = vcmp.eq.f32.partialorder %v424, %v508
      %vm513 = vcmp.eq.f32.partialorder %v425, %v508
      %v514 = vsel %vm512, %v510, 256
      %v515 = vsel %vm513, %v511, 256
      %v516 = vsel %vm426, %v514, 2147483647
      %v517 = vsel %vm426, %v515, 2147483647
      %vm518 = vcmp.lt.s32.totalorder %v516, %v517
      %v519 = vsel %vm518, %v516, %v517
      %v520 = vand.u32 %v519, 65535
      %v521 = vshra.s32 %v519, 16
      %v522 = vcvt.s32.f32 %v520
      %v523 = vcvt.s32.f32 %v521
      %524 = vmin.xlane.f32.xlu0 %v523
      %v525 = vpop.xlane.xlu0 %524
      %vm526 = vcmp.eq.f32.partialorder %v523, %v525
      %v527 = vsel %vm526, %v522, inf
      %528 = vmin.xlane.f32.xlu0 %v527
      %v529 = vpop.xlane.xlu0 %528
      %v530 = vcvt.f32.s32 %v529
      %v531 = vcvt.f32.s32 %v525
      %v532 = vshll.u32 %v531, 16
      %v533 = vadd.s32 %v532, %v530
      %vm534 = vcmask 3072
      %535 = vst.msk [vmem:[%s273] sm:$0xf] %vm534, %v508
      %536 = vst.msk [vmem:[%s277] sm:$0xf] %vm534, %v533
      %p537 = scmp.lt.s32.totalorder %s18, 1
      %s538 = scalar_select %p537, %s18, 1
      %s539 = smul.addr %s538, 2
      %s540 = scalar_lea.vmem %s3, %s539
      %p541 = scmp.lt.s32.totalorder %s18, 1
      %s542 = scalar_select %p541, %s18, 1
      %s543 = smul.addr %s542, 2
      %s544 = scalar_lea.vmem %s4, %s543
      %p545 = scmp.lt.s32.totalorder %s18, 1
      %s546 = scalar_select %p545, %s18, 1
      %s547 = smul.addr %s546, 4
      %s548 = scalar_lea.vmem %s5, %s547
      %p549 = scmp.lt.s32.totalorder %s18, 1
      %s550 = scalar_select %p549, %s18, 1
      %s551 = smul.addr %s550, 4
      %s552 = scalar_lea.vmem %s6, %s551
      // Predicated region
      $region33: #{multibox_loss.2} parent=31 // pred_check
        %p553 = pneg %p104
      $region34: #{multibox_loss.2} parent=31 // pred_check_branch
        %555 = sbr.rel (%p553) target = $region36
      $region35: #{multibox_loss.2} parent=31 // pred_region
        _
      $region36: #{multibox_loss.2} parent=31 // pred_fallthru
        _
      // Predicated region
      $region37: #{multibox_loss.2} parent=31 // pred_check
        %p556 = pneg %p130
      $region38: #{multibox_loss.2} parent=31 // pred_check_branch
        %558 = sbr.rel (%p556) target = $region40
      $region39: #{multibox_loss.2} parent=31 // pred_region
        _
      $region40: #{multibox_loss.2} parent=31 // pred_fallthru
        _
      // Predicated region
      $region41: #{multibox_loss.2} parent=31 // pred_check
        %p559 = pneg %p156
      $region42: #{multibox_loss.2} parent=31 // pred_check_branch
        %561 = sbr.rel (%p559) target = $region44
      $region43: #{multibox_loss.2} parent=31 // pred_region
        _
      $region44: #{multibox_loss.2} parent=31 // pred_fallthru
        _
      // Predicated region
      $region45: #{multibox_loss.2} parent=31 // pred_check
        %p562 = pneg %p182
      $region46: #{multibox_loss.2} parent=31 // pred_check_branch
        %564 = sbr.rel (%p562) target = $region48
      $region47: #{multibox_loss.2} parent=31 // pred_region
        _
      $region48: #{multibox_loss.2} parent=31 // pred_fallthru
        _
    $region32: #{multibox_loss.2} parent=5 // pred_fallthru
      _
    %p565 = scmp.le.s32.totalorder 2, %s13
    // Predicated region
    $region49: #{multibox_loss.2} parent=5 // pred_check
      %p566 = pneg %p565
    $region50: #{multibox_loss.2} parent=5 // pred_check_branch
      %568 = sbr.rel (%p566) target = $region52
    $region51: #{multibox_loss.2} parent=5 // pred_region
      %s569 = ssub.s32 %s13, 2
      // Predicated region
      $region53: #{multibox_loss.2} parent=51 // pred_check
        %p570 = pneg %p110
      $region54: #{multibox_loss.2} parent=51 // pred_check_branch
        %572 = sbr.rel (%p570) target = $region56
      $region55: #{multibox_loss.2} parent=51 // pred_region
        %p573 = scmp.lt.s32.totalorder %s19, 1
        %s574 = scalar_select %p573, %s19, 1
        %s575 = smul.addr %s574, 2
        %s576 = scalar_lea.vmem %s3, %s575
      $region56: #{multibox_loss.2} parent=51 // pred_fallthru
        _
      // Predicated region
      $region57: #{multibox_loss.2} parent=51 // pred_check
        %p577 = pneg %p136
      $region58: #{multibox_loss.2} parent=51 // pred_check_branch
        %579 = sbr.rel (%p577) target = $region60
      $region59: #{multibox_loss.2} parent=51 // pred_region
        %p580 = scmp.lt.s32.totalorder %s19, 1
        %s581 = scalar_select %p580, %s19, 1
        %s582 = smul.addr %s581, 2
        %s583 = scalar_lea.vmem %s4, %s582
      $region60: #{multibox_loss.2} parent=51 // pred_fallthru
        _
      // Predicated region
      $region61: #{multibox_loss.2} parent=51 // pred_check
        %p584 = pneg %p162
      $region62: #{multibox_loss.2} parent=51 // pred_check_branch
        %586 = sbr.rel (%p584) target = $region64
      $region63: #{multibox_loss.2} parent=51 // pred_region
        %p587 = scmp.lt.s32.totalorder %s19, 1
        %s588 = scalar_select %p587, %s19, 1
        %s589 = smul.addr %s588, 4
        %s590 = scalar_lea.vmem %s5, %s589
      $region64: #{multibox_loss.2} parent=51 // pred_fallthru
        _
      // Predicated region
      $region65: #{multibox_loss.2} parent=51 // pred_check
        %p591 = pneg %p188
      $region66: #{multibox_loss.2} parent=51 // pred_check_branch
        %593 = sbr.rel (%p591) target = $region68
      $region67: #{multibox_loss.2} parent=51 // pred_region
        %p594 = scmp.lt.s32.totalorder %s19, 1
        %s595 = scalar_select %p594, %s19, 1
        %s596 = smul.addr %s595, 4
        %s597 = scalar_lea.vmem %s6, %s596
      $region68: #{multibox_loss.2} parent=51 // pred_fallthru
        _
    $region52: #{multibox_loss.2} parent=5 // pred_fallthru
      _
  $region6: #{multibox_loss.2} parent=0 // loop_footer
    %s17 = sadd.s32 1, %s13
  $region7: #{multibox_loss.2} parent=0 // loop_footer_branch
    %12 = sbr.rel target = $region3
  $region8: #{multibox_loss.2} parent=0 // loop_exit
    _

// kernel: multibox_loss.3
$region0: #{multibox_loss.3}
  #allocation0 [shape = 'u32[]', space=smem, size = 0x4, offset = 0x4, fixed_abs, tag = 'smem constant byte address 0x4 - core index']
  #allocation1 [shape = 'u32[144,128]{1,0:T(1,128)}', space=vmem, size = 0x12000, scoped, tag = 'internal scratch']
  %s0 = inlined_call_operand.vmem [shape: f32[2,256,4], index: 0, kind: input, shape index: {}]
  %s1 = inlined_call_operand.vmem [shape: f32[2,256,4], index: 1, kind: input, shape index: {}]
  %s2 = inlined_call_operand.vmem [shape: f32[2,256,10], index: 2, kind: input, shape index: {}]
  %s3 = inlined_call_operand.vmem [shape: f32[2,256,10], index: 3, kind: input, shape index: {}]
  %s4 = inlined_call_operand.vmem [shape: f32[2,2,256], index: 4, kind: input, shape index: {}]
  %s5 = inlined_call_operand.vmem [shape: f32[2,256,1], index: 5, kind: input, shape index: {}]
  %s6 = inlined_call_operand.vmem [shape: f32[2,1,256], index: 6, kind: input, shape index: {}]
  %s7 = inlined_call_operand.vmem [shape: f32[2,1,128], index: 7, kind: output, shape index: {}]
  %s8 = sld [smem:[#allocation0]]
  $region68: #{multibox_loss.3} parent=0
    _
  %s10 = ssub.s32 1, %s8
  %s11 = scalar_select 0, %s10, %s8
  loop: start=0, step=1, limit=4
  $region2: #{multibox_loss.3} parent=0 // loop_pre_header
    _
  $region3: #{multibox_loss.3} parent=0 // loop_header
    %s13 = sphi 0, %s17
    %p14 = scmp.ge.s32.totalorder %s13, 4
    %s23 = sphi 0, %s25
    %s26 = sphi 0, %s23
    %s27 = sphi 0, %s26
    %s43 = sphi 0, %s27
    %s49 = sphi 0, %s51
    %s52 = sphi 0, %s49
    %s53 = sphi 0, %s52
    %s69 = sphi 0, %s53
    %s75 = sphi 0, %s77
    %s78 = sphi 0, %s75
    %s79 = sphi 0, %s78
    %s95 = sphi 0, %s79
    %s101 = sphi 0, %s103
    %s104 = sphi 0, %s101
    %s105 = sphi 0, %s104
    %s121 = sphi 0, %s105
    %s127 = sphi 0, %s129
    %s130 = sphi 0, %s127
    %s131 = sphi 0, %s130
    %s147 = sphi 0, %s131
    %s153 = sphi 0, %s155
    %s156 = sphi 0, %s153
    %s157 = sphi 0, %s156
    %s173 = sphi 0, %s157
    %s179 = sphi 0, %s181
    %s182 = sphi 0, %s179
    %s183 = sphi 0, %s182
    %s199 = sphi 0, %s183
    %s205 = sphi 0, %s207
    %s208 = sphi 0, %s205
    %s209 = sphi 0, %s208
    %s225 = sphi 0, %s209
  $region4: #{multibox_loss.3} parent=0 // loop_header_branch
    %16 = sbr.rel (%p14) target = $region8
  $region5: #{multibox_loss.3} parent=0 // loop_body
    %s18 = ssub.s32 %s13, 1
    %s19 = ssub.s32 %s13, 2
    %s20 = sadd.s32 %s13, 1
    %s21 = ssub.s32 %s13, %s20
    %p22 = scmp.eq.s32.totalorder %s21, 0
    %s24 = sadd.s32 %s23, 1
    %s25 = scalar_select %p22, %s23, %s24
    %p28 = pneg %p22
    %p29 = scmp.eq.s32.totalorder %s13, 1
    %p30 = por %p28, %p29
    %p31 = scmp.ne.s32.totalorder %s23, %s26
    %p32 = scmp.eq.s32.totalorder %s13, 0
    %p33 = por %p31, %p32
    %p34 = scmp.ne.s32.totalorder %s23, %s26
    %p35 = scmp.eq.s32.totalorder %s18, 1
    %p36 = por %p34, %p35
    %p37 = scmp.ne.s32.totalorder %s26, %s27
    %p38 = scmp.eq.s32.totalorder %s18, 0
    %p39 = por %p37, %p38
    %p40 = scmp.ne.s32.totalorder %s26, %s27
    %p41 = scmp.eq.s32.totalorder %s19, 1
    %p42 = por %p40, %p41
    %p44 = scmp.ne.s32.totalorder %s27, %s43
    %p45 = scmp.eq.s32.totalorder %s19, 0
    %p46 = por %p44, %p45
    %s47 = ssub.s32 %s13, %s20
    %p48 = scmp.eq.s32.totalorder %s47, 0
    %s50 = sadd.s32 %s49, 1
    %s51 = scalar_select %p48, %s49, %s50
    %p54 = pneg %p48
    %p55 = scmp.eq.s32.totalorder %s13, 1
    %p56 = por %p54, %p55
    %p57 = scmp.ne.s32.totalorder %s49, %s52
    %p58 = scmp.eq.s32.totalorder %s13, 0
    %p59 = por %p57, %p58
    %p60 = scmp.ne.s32.totalorder %s49, %s52
    %p61 = scmp.eq.s32.totalorder %s18, 1
    %p62 = por %p60, %p61
    %p63 = scmp.ne.s32.totalorder %s52, %s53
    %p64 = scmp.eq.s32.totalorder %s18, 0
    %p65 = por %p63, %p64
    %p66 = scmp.ne.s32.totalorder %s52, %s53
    %p67 = scmp.eq.s32.totalorder %s19, 1
    %p68 = por %p66, %p67
    %p70 = scmp.ne.s32.totalorder %s53, %s69
    %p71 = scmp.eq.s32.totalorder %s19, 0
    %p72 = por %p70, %p71
    %s73 = ssub.s32 %s13, %s20
    %p74 = scmp.eq.s32.totalorder %s73, 0
    %s76 = sadd.s32 %s75, 1
    %s77 = scalar_select %p74, %s75, %s76
    %p80 = pneg %p74
    %p81 = scmp.eq.s32.totalorder %s13, 1
    %p82 = por %p80, %p81
    %p83 = scmp.ne.s32.totalorder %s75, %s78
    %p84 = scmp.eq.s32.totalorder %s13, 0
    %p85 = por %p83, %p84
    %p86 = scmp.ne.s32.totalorder %s75, %s78
    %p87 = scmp.eq.s32.totalorder %s18, 1
    %p88 = por %p86, %p87
    %p89 = scmp.ne.s32.totalorder %s78, %s79
    %p90 = scmp.eq.s32.totalorder %s18, 0
    %p91 = por %p89, %p90
    %p92 = scmp.ne.s32.totalorder %s78, %s79
    %p93 = scmp.eq.s32.totalorder %s19, 1
    %p94 = por %p92, %p93
    %p96 = scmp.ne.s32.totalorder %s79, %s95
    %p97 = scmp.eq.s32.totalorder %s19, 0
    %p98 = por %p96, %p97
    %s99 = ssub.s32 %s13, %s20
    %p100 = scmp.eq.s32.totalorder %s99, 0
    %s102 = sadd.s32 %s101, 1
    %s103 = scalar_select %p100, %s101, %s102
    %p106 = pneg %p100
    %p107 = scmp.eq.s32.totalorder %s13, 1
    %p108 = por %p106, %p107
    %p109 = scmp.ne.s32.totalorder %s101, %s104
    %p110 = scmp.eq.s32.totalorder %s13, 0
    %p111 = por %p109, %p110
    %p112 = scmp.ne.s32.totalorder %s101, %s104
    %p113 = scmp.eq.s32.totalorder %s18, 1
    %p114 = por %p112, %p113
    %p115 = scmp.ne.s32.totalorder %s104, %s105
    %p116 = scmp.eq.s32.totalorder %s18, 0
    %p117 = por %p115, %p116
    %p118 = scmp.ne.s32.totalorder %s104, %s105
    %p119 = scmp.eq.s32.totalorder %s19, 1
    %p120 = por %p118, %p119
    %p122 = scmp.ne.s32.totalorder %s105, %s121
    %p123 = scmp.eq.s32.totalorder %s19, 0
    %p124 = por %p122, %p123
    %s125 = ssub.s32 %s13, %s20
    %p126 = scmp.eq.s32.totalorder %s125, 0
    %s128 = sadd.s32 %s127, 1
    %s129 = scalar_select %p126, %s127, %s128
    %p132 = pneg %p126
    %p133 = scmp.eq.s32.totalorder %s13, 1
    %p134 = por %p132, %p133
    %p135 = scmp.ne.s32.totalorder %s127, %s130
    %p136 = scmp.eq.s32.totalorder %s13, 0
    %p137 = por %p135, %p136
    %p138 = scmp.ne.s32.totalorder %s127, %s130
    %p139 = scmp.eq.s32.totalorder %s18, 1
    %p140 = por %p138, %p139
    %p141 = scmp.ne.s32.totalorder %s130, %s131
    %p142 = scmp.eq.s32.totalorder %s18, 0
    %p143 = por %p141, %p142
    %p144 = scmp.ne.s32.totalorder %s130, %s131
    %p145 = scmp.eq.s32.totalorder %s19, 1
    %p146 = por %p144, %p145
    %p148 = scmp.ne.s32.totalorder %s131, %s147
    %p149 = scmp.eq.s32.totalorder %s19, 0
    %p150 = por %p148, %p149
    %s151 = ssub.s32 %s13, %s20
    %p152 = scmp.eq.s32.totalorder %s151, 0
    %s154 = sadd.s32 %s153, 1
    %s155 = scalar_select %p152, %s153, %s154
    %p158 = pneg %p152
    %p159 = scmp.eq.s32.totalorder %s13, 1
    %p160 = por %p158, %p159
    %p161 = scmp.ne.s32.totalorder %s153, %s156
    %p162 = scmp.eq.s32.totalorder %s13, 0
    %p163 = por %p161, %p162
    %p164 = scmp.ne.s32.totalorder %s153, %s156
    %p165 = scmp.eq.s32.totalorder %s18, 1
    %p166 = por %p164, %p165
    %p167 = scmp.ne.s32.totalorder %s156, %s157
    %p168 = scmp.eq.s32.totalorder %s18, 0
    %p169 = por %p167, %p168
    %p170 = scmp.ne.s32.totalorder %s156, %s157
    %p171 = scmp.eq.s32.totalorder %s19, 1
    %p172 = por %p170, %p171
    %p174 = scmp.ne.s32.totalorder %s157, %s173
    %p175 = scmp.eq.s32.totalorder %s19, 0
    %p176 = por %p174, %p175
    %s177 = ssub.s32 %s13, %s20
    %p178 = scmp.eq.s32.totalorder %s177, 0
    %s180 = sadd.s32 %s179, 1
    %s181 = scalar_select %p178, %s179, %s180
    %p184 = pneg %p178
    %p185 = scmp.eq.s32.totalorder %s13, 1
    %p186 = por %p184, %p185
    %p187 = scmp.ne.s32.totalorder %s179, %s182
    %p188 = scmp.eq.s32.totalorder %s13, 0
    %p189 = por %p187, %p188
    %p190 = scmp.ne.s32.totalorder %s179, %s182
    %p191 = scmp.eq.s32.totalorder %s18, 1
    %p192 = por %p190, %p191
    %p193 = scmp.ne.s32.totalorder %s182, %s183
    %p194 = scmp.eq.s32.totalorder %s18, 0
    %p195 = por %p193, %p194
    %p196 = scmp.ne.s32.totalorder %s182, %s183
    %p197 = scmp.eq.s32.totalorder %s19, 1
    %p198 = por %p196, %p197
    %p200 = scmp.ne.s32.totalorder %s183, %s199
    %p201 = scmp.eq.s32.totalorder %s19, 0
    %p202 = por %p200, %p201
    %s203 = ssub.s32 %s13, %s20
    %p204 = scmp.eq.s32.totalorder %s203, 0
    %s206 = sadd.s32 %s205, 1
    %s207 = scalar_select %p204, %s205, %s206
    %p210 = pneg %p204
    %p211 = scmp.eq.s32.totalorder %s13, 1
    %p212 = por %p210, %p211
    %p213 = scmp.ne.s32.totalorder %s205, %s208
    %p214 = scmp.eq.s32.totalorder %s13, 0
    %p215 = por %p213, %p214
    %p216 = scmp.ne.s32.totalorder %s205, %s208
    %p217 = scmp.eq.s32.totalorder %s18, 1
    %p218 = por %p216, %p217
    %p219 = scmp.ne.s32.totalorder %s208, %s209
    %p220 = scmp.eq.s32.totalorder %s18, 0
    %p221 = por %p219, %p220
    %p222 = scmp.ne.s32.totalorder %s208, %s209
    %p223 = scmp.eq.s32.totalorder %s19, 1
    %p224 = por %p222, %p223
    %p226 = scmp.ne.s32.totalorder %s209, %s225
    %p227 = scmp.eq.s32.totalorder %s19, 0
    %p228 = por %p226, %p227
    %p229 = scmp.le.s32.totalorder 1, %s13
    %p230 = scmp.lt.s32.totalorder %s13, 3
    %p231 = pnand %p229, %p230
    %p232 = pneg %p231
    // Predicated region
    $region9: #{multibox_loss.3} parent=5 // pred_check
      _
    $region10: #{multibox_loss.3} parent=5 // pred_check_branch
      %234 = sbr.rel (%p231) target = $region12
    $region11: #{multibox_loss.3} parent=5 // pred_region
      %s235 = ssub.s32 %s13, 1
    $region12: #{multibox_loss.3} parent=5 // pred_fallthru
      _
    %p236 = scmp.lt.s32.totalorder %s13, 2
    // Predicated region
    $region13: #{multibox_loss.3} parent=5 // pred_check
      %p237 = pneg %p236
    $region14: #{multibox_loss.3} parent=5 // pred_check_branch
      %239 = sbr.rel (%p237) target = $region16
    $region15: #{multibox_loss.3} parent=5 // pred_region
      // Predicated region
      $region17: #{multibox_loss.3} parent=15 // pred_check
        %p240 = pneg %p33
      $region18: #{multibox_loss.3} parent=15 // pred_check_branch
        %242 = sbr.rel (%p240) target = $region20
      $region19: #{multibox_loss.3} parent=15 // pred_region
        %p243 = scmp.lt.s32.totalorder %s13, 1
        %s244 = scalar_select %p243, %s13, 1
        %s245 = smul.addr %s244, 32
        %s246 = smul.addr %s245, 8
        %s247 = scalar_lea.vmem %s0, %s246
      $region20: #{multibox_loss.3} parent=15 // pred_fallthru
        _
      // Predicated region
      $region21: #{multibox_loss.3} parent=15 // pred_check
        %p248 = pneg %p59
      $region22: #{multibox_loss.3} parent=15 // pred_check_branch
        %250 = sbr.rel (%p248) target = $region24
      $region23: #{multibox_loss.3} parent=15 // pred_region
        %p251 = scmp.lt.s32.totalorder %s13, 1
        %s252 = scalar_select %p251, %s13, 1
        %s253 = smul.addr %s252, 32
        %s254 = smul.addr %s253, 8
        %s255 = scalar_lea.vmem %s1, %s254
      $region24: #{multibox_loss.3} parent=15 // pred_fallthru
        _
      // Predicated region
      $region25: #{multibox_loss.3} parent=15 // pred_check
        %p256 = pneg %p85
      $region26: #{multibox_loss.3} parent=15 // pred_check_branch
        %258 = sbr.rel (%p256) target = $region28
      $region27: #{multibox_loss.3} parent=15 // pred_region
        %p259 = scmp.lt.s32.totalorder %s13, 1
        %s260 = scalar_select %p259, %s13, 1
        %s261 = smul.addr %s260, 32
        %s262 = smul.addr %s261, 8
        %s263 = scalar_lea.vmem %s2, %s262
      $region28: #{multibox_loss.3} parent=15 // pred_fallthru
        _
      // Predicated region
      $region29: #{multibox_loss.3} parent=15 // pred_check
        %p264 = pneg %p111
      $region30: #{multibox_loss.3} parent=15 // pred_check_branch
        %266 = sbr.rel (%p264) target = $region32
      $region31: #{multibox_loss.3} parent=15 // pred_region
        %p267 = scmp.lt.s32.totalorder %s13, 1
        %s268 = scalar_select %p267, %s13, 1
        %s269 = smul.addr %s268, 32
        %s270 = smul.addr %s269, 8
        %s271 = scalar_lea.vmem %s3, %s270
      $region32: #{multibox_loss.3} parent=15 // pred_fallthru
        _
      // Predicated region
      $region33: #{multibox_loss.3} parent=15 // pred_check
        %p272 = pneg %p137
      $region34: #{multibox_loss.3} parent=15 // pred_check_branch
        %274 = sbr.rel (%p272) target = $region36
      $region35: #{multibox_loss.3} parent=15 // pred_region
        %p275 = scmp.lt.s32.totalorder %s13, 1
        %s276 = scalar_select %p275, %s13, 1
        %s277 = smul.addr %s276, 2
        %s278 = smul.addr %s277, 2
        %s279 = scalar_lea.vmem %s4, %s278
      $region36: #{multibox_loss.3} parent=15 // pred_fallthru
        _
      // Predicated region
      $region37: #{multibox_loss.3} parent=15 // pred_check
        %p280 = pneg %p163
      $region38: #{multibox_loss.3} parent=15 // pred_check_branch
        %282 = sbr.rel (%p280) target = $region40
      $region39: #{multibox_loss.3} parent=15 // pred_region
        %p283 = scmp.lt.s32.totalorder %s13, 1
        %s284 = scalar_select %p283, %s13, 1
        %s285 = smul.addr %s284, 32
        %s286 = smul.addr %s285, 8
        %s287 = scalar_lea.vmem %s5, %s286
      $region40: #{multibox_loss.3} parent=15 // pred_fallthru
        _
      // Predicated region
      $region41: #{multibox_loss.3} parent=15 // pred_check
        %p288 = pneg %p189
      $region42: #{multibox_loss.3} parent=15 // pred_check_branch
        %290 = sbr.rel (%p288) target = $region44
      $region43: #{multibox_loss.3} parent=15 // pred_region
        %p291 = scmp.lt.s32.totalorder %s13, 1
        %s292 = scalar_select %p291, %s13, 1
        %s293 = smul.addr %s292, 2
        %s294 = scalar_lea.vmem %s6, %s293
      $region44: #{multibox_loss.3} parent=15 // pred_fallthru
        _
    $region16: #{multibox_loss.3} parent=5 // pred_fallthru
      _
    %p295 = scmp.le.s32.totalorder 1, %s13
    %p296 = scmp.lt.s32.totalorder %s13, 3
    %p297 = pnand %p295, %p296
    %p298 = pneg %p297
    // Predicated region
    $region45: #{multibox_loss.3} parent=5 // pred_check
      _
    $region46: #{multibox_loss.3} parent=5 // pred_check_branch
      %300 = sbr.rel (%p297) target = $region48
    $region47: #{multibox_loss.3} parent=5 // pred_region
      %s301 = ssub.s32 %s13, 1
      %p302 = scmp.lt.s32.totalorder %s18, 1
      %s303 = scalar_select %p302, %s18, 1
      %s304 = smul.addr %s303, 32
      %s305 = smul.addr %s304, 8
      %s306 = scalar_lea.vmem %s0, %s305
      %p307 = pneg %p39
      %p308 = pneg %p36
      %p309 = scmp.lt.s32.totalorder %s18, 1
      %s310 = scalar_select %p309, %s18, 1
      %s311 = smul.addr %s310, 32
      %s312 = smul.addr %s311, 8
      %s313 = scalar_lea.vmem %s1, %s312
      %p314 = pneg %p65
      %p315 = pneg %p62
      %p316 = scmp.lt.s32.totalorder %s18, 1
      %s317 = scalar_select %p316, %s18, 1
      %s318 = smul.addr %s317, 32
      %s319 = smul.addr %s318, 8
      %s320 = scalar_lea.vmem %s2, %s319
      %p321 = pneg %p91
      %p322 = pneg %p88
      %p323 = scmp.lt.s32.totalorder %s18, 1
      %s324 = scalar_select %p323, %s18, 1
      %s325 = smul.addr %s324, 32
      %s326 = smul.addr %s325, 8
      %s327 = scalar_lea.vmem %s3, %s326
      %p328 = pneg %p117
      %p329 = pneg %p114
      %p330 = scmp.lt.s32.totalorder %s18, 1
      %s331 = scalar_select %p330, %s18, 1
      %s332 = smul.addr %s331, 2
      %s333 = smul.addr %s332, 2
      %s334 = scalar_lea.vmem %s4, %s333
      %p335 = pneg %p143
      %p336 = pneg %p140
      %p337 = scmp.lt.s32.totalorder %s18, 1
      %s338 = scalar_select %p337, %s18, 1
      %s339 = smul.addr %s338, 32
      %s340 = smul.addr %s339, 8
      %s341 = scalar_lea.vmem %s5, %s340
      %p342 = pneg %p169
      %p343 = pneg %p166
      %p344 = scmp.lt.s32.totalorder %s18, 1
      %s345 = scalar_select %p344, %s18, 1
      %s346 = smul.addr %s345, 2
      %s347 = scalar_lea.vmem %s6, %s346
      %p348 = pneg %p195
      %p349 = pneg %p192
      %p350 = pneg %p221
      %p351 = pneg %p218
      %p352 = scmp.lt.s32.totalorder %s18, 1
      %s353 = scalar_select %p352, %s18, 1
      %s354 = scalar_lea.vmem %s7, %s353
      %p355 = scmp.lt.s32.totalorder %s18, 1
      %s356 = scalar_select %p355, %s18, 1
      %s357 = smul.addr %s356, 32
      %s358 = smul.addr %s357, 8
      %s359 = scalar_lea.vmem %s0, %s358
      %p360 = scmp.lt.s32.totalorder %s18, 1
      %s361 = scalar_select %p360, %s18, 1
      %s362 = smul.addr %s361, 32
      %s363 = smul.addr %s362, 8
      %s364 = scalar_lea.vmem %s1, %s363
      %p365 = scmp.lt.s32.totalorder %s18, 1
      %s366 = scalar_select %p365, %s18, 1
      %s367 = smul.addr %s366, 32
      %s368 = smul.addr %s367, 8
      %s369 = scalar_lea.vmem %s2, %s368
      %p370 = scmp.lt.s32.totalorder %s18, 1
      %s371 = scalar_select %p370, %s18, 1
      %s372 = smul.addr %s371, 32
      %s373 = smul.addr %s372, 8
      %s374 = scalar_lea.vmem %s3, %s373
      %p375 = scmp.lt.s32.totalorder %s18, 1
      %s376 = scalar_select %p375, %s18, 1
      %s377 = smul.addr %s376, 2
      %s378 = smul.addr %s377, 2
      %s379 = scalar_lea.vmem %s4, %s378
      %p380 = scmp.lt.s32.totalorder %s18, 1
      %s381 = scalar_select %p380, %s18, 1
      %s382 = smul.addr %s381, 32
      %s383 = smul.addr %s382, 8
      %s384 = scalar_lea.vmem %s5, %s383
      %p385 = scmp.lt.s32.totalorder %s18, 1
      %s386 = scalar_select %p385, %s18, 1
      %s387 = smul.addr %s386, 2
      %s388 = scalar_lea.vmem %s6, %s387
      %p389 = scmp.lt.s32.totalorder %s18, 1
      %s390 = scalar_select %p389, %s18, 1
      %s391 = scalar_lea.vmem %s7, %s390
      %v392 = vld [vmem:[%s384] sm:$0xff]
      %v393 = vld [vmem:[%s384 + $0x8] sm:$0xff]
      %v394 = vld [vmem:[%s384 + $0x10] sm:$0xff]
      %v395 = vld [vmem:[%s384 + $0x18] sm:$0xff]
      %v396 = vld [vmem:[%s384 + $0x20] sm:$0xff]
      %v397 = vld [vmem:[%s384 + $0x28] sm:$0xff]
      %v398 = vld [vmem:[%s384 + $0x30] sm:$0xff]
      %v399 = vld [vmem:[%s384 + $0x38] sm:$0xff]
      %v400 = vld [vmem:[%s384 + $0x40] sm:$0xff]
      %v401 = vld [vmem:[%s384 + $0x48] sm:$0xff]
      %v402 = vld [vmem:[%s384 + $0x50] sm:$0xff]
      %v403 = vld [vmem:[%s384 + $0x58] sm:$0xff]
      %v404 = vld [vmem:[%s384 + $0x60] sm:$0xff]
      %v405 = vld [vmem:[%s384 + $0x68] sm:$0xff]
      %v406 = vld [vmem:[%s384 + $0x70] sm:$0xff]
      %v407 = vld [vmem:[%s384 + $0x78] sm:$0xff]
      %v408 = vld [vmem:[%s384 + $0x80] sm:$0xff]
      %v409 = vld [vmem:[%s384 + $0x88] sm:$0xff]
      %v410 = vld [vmem:[%s384 + $0x90] sm:$0xff]
      %v411 = vld [vmem:[%s384 + $0x98] sm:$0xff]
      %v412 = vld [vmem:[%s384 + $0xa0] sm:$0xff]
      %v413 = vld [vmem:[%s384 + $0xa8] sm:$0xff]
      %v414 = vld [vmem:[%s384 + $0xb0] sm:$0xff]
      %v415 = vld [vmem:[%s384 + $0xb8] sm:$0xff]
      %v416 = vld [vmem:[%s384 + $0xc0] sm:$0xff]
      %v417 = vld [vmem:[%s384 + $0xc8] sm:$0xff]
      %v418 = vld [vmem:[%s384 + $0xd0] sm:$0xff]
      %v419 = vld [vmem:[%s384 + $0xd8] sm:$0xff]
      %v420 = vld [vmem:[%s384 + $0xe0] sm:$0xff]
      %v421 = vld [vmem:[%s384 + $0xe8] sm:$0xff]
      %v422 = vld [vmem:[%s384 + $0xf0] sm:$0xff]
      %v423 = vld [vmem:[%s384 + $0xf8] sm:$0xff]
      %vm424 = vcmp.ne.f32.partialorder %v392, 0.0
      %vm425 = vcmp.ne.f32.partialorder %v393, 0.0
      %vm426 = vcmp.ne.f32.partialorder %v394, 0.0
      %vm427 = vcmp.ne.f32.partialorder %v395, 0.0
      %vm428 = vcmp.ne.f32.partialorder %v396, 0.0
      %vm429 = vcmp.ne.f32.partialorder %v397, 0.0
      %vm430 = vcmp.ne.f32.partialorder %v398, 0.0
      %vm431 = vcmp.ne.f32.partialorder %v399, 0.0
      %vm432 = vcmp.ne.f32.partialorder %v400, 0.0
      %vm433 = vcmp.ne.f32.partialorder %v401, 0.0
      %vm434 = vcmp.ne.f32.partialorder %v402, 0.0
      %vm435 = vcmp.ne.f32.partialorder %v403, 0.0
      %vm436 = vcmp.ne.f32.partialorder %v404, 0.0
      %vm437 = vcmp.ne.f32.partialorder %v405, 0.0
      %vm438 = vcmp.ne.f32.partialorder %v406, 0.0
      %vm439 = vcmp.ne.f32.partialorder %v407, 0.0
      %vm440 = vcmp.ne.f32.partialorder %v408, 0.0
      %vm441 = vcmp.ne.f32.partialorder %v409, 0.0
      %vm442 = vcmp.ne.f32.partialorder %v410, 0.0
      %vm443 = vcmp.ne.f32.partialorder %v411, 0.0
      %vm444 = vcmp.ne.f32.partialorder %v412, 0.0
      %vm445 = vcmp.ne.f32.partialorder %v413, 0.0
      %vm446 = vcmp.ne.f32.partialorder %v414, 0.0
      %vm447 = vcmp.ne.f32.partialorder %v415, 0.0
      %vm448 = vcmp.ne.f32.partialorder %v416, 0.0
      %vm449 = vcmp.ne.f32.partialorder %v417, 0.0
      %vm450 = vcmp.ne.f32.partialorder %v418, 0.0
      %vm451 = vcmp.ne.f32.partialorder %v419, 0.0
      %vm452 = vcmp.ne.f32.partialorder %v420, 0.0
      %vm453 = vcmp.ne.f32.partialorder %v421, 0.0
      %vm454 = vcmp.ne.f32.partialorder %v422, 0.0
      %vm455 = vcmp.ne.f32.partialorder %v423, 0.0
      %v456 = vsel %vm424, 1, 0
      %v457 = vsel %vm425, 1, 0
      %v458 = vsel %vm426, 1, 0
      %v459 = vsel %vm427, 1, 0
      %v460 = vsel %vm428, 1, 0
      %v461 = vsel %vm429, 1, 0
      %v462 = vsel %vm430, 1, 0
      %v463 = vsel %vm431, 1, 0
      %v464 = vsel %vm432, 1, 0
      %v465 = vsel %vm433, 1, 0
      %v466 = vsel %vm434, 1, 0
      %v467 = vsel %vm435, 1, 0
      %v468 = vsel %vm436, 1, 0
      %v469 = vsel %vm437, 1, 0
      %v470 = vsel %vm438, 1, 0
      %v471 = vsel %vm439, 1, 0
      %v472 = vsel %vm440, 1, 0
      %v473 = vsel %vm441, 1, 0
      %v474 = vsel %vm442, 1, 0
      %v475 = vsel %vm443, 1, 0
      %v476 = vsel %vm444, 1, 0
      %v477 = vsel %vm445, 1, 0
      %v478 = vsel %vm446, 1, 0
      %v479 = vsel %vm447, 1, 0
      %v480 = vsel %vm448, 1, 0
      %v481 = vsel %vm449, 1, 0
      %v482 = vsel %vm450, 1, 0
      %v483 = vsel %vm451, 1, 0
      %v484 = vsel %vm452, 1, 0
      %v485 = vsel %vm453, 1, 0
      %v486 = vsel %vm454, 1, 0
      %v487 = vsel %vm455, 1, 0
      %v488 = vcvt.s32.f32 %v456
      %v489 = vcvt.s32.f32 %v457
      %v490 = vcvt.s32.f32 %v458
      %v491 = vcvt.s32.f32 %v459
      %v492 = vcvt.s32.f32 %v460
      %v493 = vcvt.s32.f32 %v461
      %v494 = vcvt.s32.f32 %v462
      %v495 = vcvt.s32.f32 %v463
      %v496 = vcvt.s32.f32 %v464
      %v497 = vcvt.s32.f32 %v465
      %v498 = vcvt.s32.f32 %v466
      %v499 = vcvt.s32.f32 %v467
      %v500 = vcvt.s32.f32 %v468
      %v501 = vcvt.s32.f32 %v469
      %v502 = vcvt.s32.f32 %v470
      %v503 = vcvt.s32.f32 %v471
      %v504 = vcvt.s32.f32 %v472
      %v505 = vcvt.s32.f32 %v473
      %v506 = vcvt.s32.f32 %v474
      %v507 = vcvt.s32.f32 %v475
      %v508 = vcvt.s32.f32 %v476
      %v509 = vcvt.s32.f32 %v477
      %v510 = vcvt.s32.f32 %v478
      %v511 = vcvt.s32.f32 %v479
      %v512 = vcvt.s32.f32 %v480
      %v513 = vcvt.s32.f32 %v481
      %v514 = vcvt.s32.f32 %v482
      %v515 = vcvt.s32.f32 %v483
      %v516 = vcvt.s32.f32 %v484
      %v517 = vcvt.s32.f32 %v485
      %v518 = vcvt.s32.f32 %v486
      %v519 = vcvt.s32.f32 %v487
      %vm520 = vcmp.gt.f32.partialorder %v392, 0.0
      %vm521 = vcmp.gt.f32.partialorder %v393, 0.0
      %vm522 = vcmp.gt.f32.partialorder %v394, 0.0
      %vm523 = vcmp.gt.f32.partialorder %v395, 0.0
      %vm524 = vcmp.gt.f32.partialorder %v396, 0.0
      %vm525 = vcmp.gt.f32.partialorder %v397, 0.0
      %vm526 = vcmp.gt.f32.partialorder %v398, 0.0
      %vm527 = vcmp.gt.f32.partialorder %v399, 0.0
      %vm528 = vcmp.gt.f32.partialorder %v400, 0.0
      %vm529 = vcmp.gt.f32.partialorder %v401, 0.0
      %vm530 = vcmp.gt.f32.partialorder %v402, 0.0
      %vm531 = vcmp.gt.f32.partialorder %v403, 0.0
      %vm532 = vcmp.gt.f32.partialorder %v404, 0.0
      %vm533 = vcmp.gt.f32.partialorder %v405, 0.0
      %vm534 = vcmp.gt.f32.partialorder %v406, 0.0
      %vm535 = vcmp.gt.f32.partialorder %v407, 0.0
      %vm536 = vcmp.gt.f32.partialorder %v408, 0.0
      %vm537 = vcmp.gt.f32.partialorder %v409, 0.0
      %vm538 = vcmp.gt.f32.partialorder %v410, 0.0
      %vm539 = vcmp.gt.f32.partialorder %v411, 0.0
      %vm540 = vcmp.gt.f32.partialorder %v412, 0.0
      %vm541 = vcmp.gt.f32.partialorder %v413, 0.0
      %vm542 = vcmp.gt.f32.partialorder %v414, 0.0
      %vm543 = vcmp.gt.f32.partialorder %v415, 0.0
      %vm544 = vcmp.gt.f32.partialorder %v416, 0.0
      %vm545 = vcmp.gt.f32.partialorder %v417, 0.0
      %vm546 = vcmp.gt.f32.partialorder %v418, 0.0
      %vm547 = vcmp.gt.f32.partialorder %v419, 0.0
      %vm548 = vcmp.gt.f32.partialorder %v420, 0.0
      %vm549 = vcmp.gt.f32.partialorder %v421, 0.0
      %vm550 = vcmp.gt.f32.partialorder %v422, 0.0
      %vm551 = vcmp.gt.f32.partialorder %v423, 0.0
      %v552 = vsel %vm520, 1, 0
      %v553 = vsel %vm521, 1, 0
      %v554 = vsel %vm522, 1, 0
      %v555 = vsel %vm523, 1, 0
      %v556 = vsel %vm524, 1, 0
      %v557 = vsel %vm525, 1, 0
      %v558 = vsel %vm526, 1, 0
      %v559 = vsel %vm527, 1, 0
      %v560 = vsel %vm528, 1, 0
      %v561 = vsel %vm529, 1, 0
      %v562 = vsel %vm530, 1, 0
      %v563 = vsel %vm531, 1, 0
      %v564 = vsel %vm532, 1, 0
      %v565 = vsel %vm533, 1, 0
      %v566 = vsel %vm534, 1, 0
      %v567 = vsel %vm535, 1, 0
      %v568 = vsel %vm536, 1, 0
      %v569 = vsel %vm537, 1, 0
      %v570 = vsel %vm538, 1, 0
      %v571 = vsel %vm539, 1, 0
      %v572 = vsel %vm540, 1, 0
      %v573 = vsel %vm541, 1, 0
      %v574 = vsel %vm542, 1, 0
      %v575 = vsel %vm543, 1, 0
      %v576 = vsel %vm544, 1, 0
      %v577 = vsel %vm545, 1, 0
      %v578 = vsel %vm546, 1, 0
      %v579 = vsel %vm547, 1, 0
      %v580 = vsel %vm548, 1, 0
      %v581 = vsel %vm549, 1, 0
      %v582 = vsel %vm550, 1, 0
      %v583 = vsel %vm551, 1, 0
      %v584 = vcvt.s32.f32 %v552
      %v585 = vcvt.s32.f32 %v553
      %v586 = vcvt.s32.f32 %v554
      %v587 = vcvt.s32.f32 %v555
      %v588 = vcvt.s32.f32 %v556
      %v589 = vcvt.s32.f32 %v557
      %v590 = vcvt.s32.f32 %v558
      %v591 = vcvt.s32.f32 %v559
      %v592 = vcvt.s32.f32 %v560
      %v593 = vcvt.s32.f32 %v561
      %v594 = vcvt.s32.f32 %v562
      %v595 = vcvt.s32.f32 %v563
      %v596 = vcvt.s32.f32 %v564
      %v597 = vcvt.s32.f32 %v565
      %v598 = vcvt.s32.f32 %v566
      %v599 = vcvt.s32.f32 %v567
      %v600 = vcvt.s32.f32 %v568
      %v601 = vcvt.s32.f32 %v569
      %v602 = vcvt.s32.f32 %v570
      %v603 = vcvt.s32.f32 %v571
      %v604 = vcvt.s32.f32 %v572
      %v605 = vcvt.s32.f32 %v573
      %v606 = vcvt.s32.f32 %v574
      %v607 = vcvt.s32.f32 %v575
      %v608 = vcvt.s32.f32 %v576
      %v609 = vcvt.s32.f32 %v577
      %v610 = vcvt.s32.f32 %v578
      %v611 = vcvt.s32.f32 %v579
      %v612 = vcvt.s32.f32 %v580
      %v613 = vcvt.s32.f32 %v581
      %v614 = vcvt.s32.f32 %v582
      %v615 = vcvt.s32.f32 %v583
      %v616 = vld [vmem:[%s359] sm:$0xff]
      %v617 = vld [vmem:[%s359 + $0x8] sm:$0xff]
      %v618 = vld [vmem:[%s359 + $0x10] sm:$0xff]
      %v619 = vld [vmem:[%s359 + $0x18] sm:$0xff]
      %v620 = vld [vmem:[%s359 + $0x20] sm:$0xff]
      %v621 = vld [vmem:[%s359 + $0x28] sm:$0xff]
      %v622 = vld [vmem:[%s359 + $0x30] sm:$0xff]
      %v623 = vld [vmem:[%s359 + $0x38] sm:$0xff]
      %v624 = vld [vmem:[%s359 + $0x40] sm:$0xff]
      %v625 = vld [vmem:[%s359 + $0x48] sm:$0xff]
      %v626 = vld [vmem:[%s359 + $0x50] sm:$0xff]
      %v627 = vld [vmem:[%s359 + $0x58] sm:$0xff]
      %v628 = vld [vmem:[%s359 + $0x60] sm:$0xff]
      %v629 = vld [vmem:[%s359 + $0x68] sm:$0xff]
      %v630 = vld [vmem:[%s359 + $0x70] sm:$0xff]
      %v631 = vld [vmem:[%s359 + $0x78] sm:$0xff]
      %v632 = vld [vmem:[%s359 + $0x80] sm:$0xff]
      %v633 = vld [vmem:[%s359 + $0x88] sm:$0xff]
      %v634 = vld [vmem:[%s359 + $0x90] sm:$0xff]
      %v635 = vld [vmem:[%s359 + $0x98] sm:$0xff]
      %v636 = vld [vmem:[%s359 + $0xa0] sm:$0xff]
      %v637 = vld [vmem:[%s359 + $0xa8] sm:$0xff]
      %v638 = vld [vmem:[%s359 + $0xb0] sm:$0xff]
      %v639 = vld [vmem:[%s359 + $0xb8] sm:$0xff]
      %v640 = vld [vmem:[%s359 + $0xc0] sm:$0xff]
      %v641 = vld [vmem:[%s359 + $0xc8] sm:$0xff]
      %v642 = vld [vmem:[%s359 + $0xd0] sm:$0xff]
      %v643 = vld [vmem:[%s359 + $0xd8] sm:$0xff]
      %v644 = vld [vmem:[%s359 + $0xe0] sm:$0xff]
      %v645 = vld [vmem:[%s359 + $0xe8] sm:$0xff]
      %v646 = vld [vmem:[%s359 + $0xf0] sm:$0xff]
      %v647 = vld [vmem:[%s359 + $0xf8] sm:$0xff]
      %v648 = vld [vmem:[%s364] sm:$0xff]
      %v649 = vld [vmem:[%s364 + $0x8] sm:$0xff]
      %v650 = vld [vmem:[%s364 + $0x10] sm:$0xff]
      %v651 = vld [vmem:[%s364 + $0x18] sm:$0xff]
      %v652 = vld [vmem:[%s364 + $0x20] sm:$0xff]
      %v653 = vld [vmem:[%s364 + $0x28] sm:$0xff]
      %v654 = vld [vmem:[%s364 + $0x30] sm:$0xff]
      %v655 = vld [vmem:[%s364 + $0x38] sm:$0xff]
      %v656 = vld [vmem:[%s364 + $0x40] sm:$0xff]
      %v657 = vld [vmem:[%s364 + $0x48] sm:$0xff]
      %v658 = vld [vmem:[%s364 + $0x50] sm:$0xff]
      %v659 = vld [vmem:[%s364 + $0x58] sm:$0xff]
      %v660 = vld [vmem:[%s364 + $0x60] sm:$0xff]
      %v661 = vld [vmem:[%s364 + $0x68] sm:$0xff]
      %v662 = vld [vmem:[%s364 + $0x70] sm:$0xff]
      %v663 = vld [vmem:[%s364 + $0x78] sm:$0xff]
      %v664 = vld [vmem:[%s364 + $0x80] sm:$0xff]
      %v665 = vld [vmem:[%s364 + $0x88] sm:$0xff]
      %v666 = vld [vmem:[%s364 + $0x90] sm:$0xff]
      %v667 = vld [vmem:[%s364 + $0x98] sm:$0xff]
      %v668 = vld [vmem:[%s364 + $0xa0] sm:$0xff]
      %v669 = vld [vmem:[%s364 + $0xa8] sm:$0xff]
      %v670 = vld [vmem:[%s364 + $0xb0] sm:$0xff]
      %v671 = vld [vmem:[%s364 + $0xb8] sm:$0xff]
      %v672 = vld [vmem:[%s364 + $0xc0] sm:$0xff]
      %v673 = vld [vmem:[%s364 + $0xc8] sm:$0xff]
      %v674 = vld [vmem:[%s364 + $0xd0] sm:$0xff]
      %v675 = vld [vmem:[%s364 + $0xd8] sm:$0xff]
      %v676 = vld [vmem:[%s364 + $0xe0] sm:$0xff]
      %v677 = vld [vmem:[%s364 + $0xe8] sm:$0xff]
      %v678 = vld [vmem:[%s364 + $0xf0] sm:$0xff]
      %v679 = vld [vmem:[%s364 + $0xf8] sm:$0xff]
      %v680 = vsub.f32 %v616, %v648
      %v681 = vsub.f32 %v617, %v649
      %v682 = vsub.f32 %v618, %v650
      %v683 = vsub.f32 %v619, %v651
      %v684 = vsub.f32 %v620, %v652
      %v685 = vsub.f32 %v621, %v653
      %v686 = vsub.f32 %v622, %v654
      %v687 = vsub.f32 %v623, %v655
      %v688 = vsub.f32 %v624, %v656
      %v689 = vsub.f32 %v625, %v657
      %v690 = vsub.f32 %v626, %v658
      %v691 = vsub.f32 %v627, %v659
      %v692 = vsub.f32 %v628, %v660
      %v693 = vsub.f32 %v629, %v661
      %v694 = vsub.f32 %v630, %v662
      %v695 = vsub.f32 %v631, %v663
      %v696 = vsub.f32 %v632, %v664
      %v697 = vsub.f32 %v633, %v665
      %v698 = vsub.f32 %v634, %v666
      %v699 = vsub.f32 %v635, %v667
      %v700 = vsub.f32 %v636, %v668
      %v701 = vsub.f32 %v637, %v669
      %v702 = vsub.f32 %v638, %v670
      %v703 = vsub.f32 %v639, %v671
      %v704 = vsub.f32 %v640, %v672
      %v705 = vsub.f32 %v641, %v673
      %v706 = vsub.f32 %v642, %v674
      %v707 = vsub.f32 %v643, %v675
      %v708 = vsub.f32 %v644, %v676
      %v709 = vsub.f32 %v645, %v677
      %v710 = vsub.f32 %v646, %v678
      %v711 = vsub.f32 %v647, %v679
      %v712 = vand.u32 2147483647, %v680
      %v713 = vand.u32 2147483647, %v681
      %v714 = vand.u32 2147483647, %v682
      %v715 = vand.u32 2147483647, %v683
      %v716 = vand.u32 2147483647, %v684
      %v717 = vand.u32 2147483647, %v685
      %v718 = vand.u32 2147483647, %v686
      %v719 = vand.u32 2147483647, %v687
      %v720 = vand.u32 2147483647, %v688
      %v721 = vand.u32 2147483647, %v689
      %v722 = vand.u32 2147483647, %v690
      %v723 = vand.u32 2147483647, %v691
      %v724 = vand.u32 2147483647, %v692
      %v725 = vand.u32 2147483647, %v693
      %v726 = vand.u32 2147483647, %v694
      %v727 = vand.u32 2147483647, %v695
      %v728 = vand.u32 2147483647, %v696
      %v729 = vand.u32 2147483647, %v697
      %v730 = vand.u32 2147483647, %v698
      %v731 = vand.u32 2147483647, %v699
      %v732 = vand.u32 2147483647, %v700
      %v733 = vand.u32 2147483647, %v701
      %v734 = vand.u32 2147483647, %v702
      %v735 = vand.u32 2147483647, %v703
      %v736 = vand.u32 2147483647, %v704
      %v737 = vand.u32 2147483647, %v705
      %v738 = vand.u32 2147483647, %v706
      %v739 = vand.u32 2147483647, %v707
      %v740 = vand.u32 2147483647, %v708
      %v741 = vand.u32 2147483647, %v709
      %v742 = vand.u32 2147483647, %v710
      %v743 = vand.u32 2147483647, %v711
      %vm744 = vcmp.lt.f32.partialorder %v712, 1.0
      %vm745 = vcmp.lt.f32.partialorder %v713, 1.0
      %vm746 = vcmp.lt.f32.partialorder %v714, 1.0
      %vm747 = vcmp.lt.f32.partialorder %v715, 1.0
      %vm748 = vcmp.lt.f32.partialorder %v716, 1.0
      %vm749 = vcmp.lt.f32.partialorder %v717, 1.0
      %vm750 = vcmp.lt.f32.partialorder %v718, 1.0
      %vm751 = vcmp.lt.f32.partialorder %v719, 1.0
      %vm752 = vcmp.lt.f32.partialorder %v720, 1.0
      %vm753 = vcmp.lt.f32.partialorder %v721, 1.0
      %vm754 = vcmp.lt.f32.partialorder %v722, 1.0
      %vm755 = vcmp.lt.f32.partialorder %v723, 1.0
      %vm756 = vcmp.lt.f32.partialorder %v724, 1.0
      %vm757 = vcmp.lt.f32.partialorder %v725, 1.0
      %vm758 = vcmp.lt.f32.partialorder %v726, 1.0
      %vm759 = vcmp.lt.f32.partialorder %v727, 1.0
      %vm760 = vcmp.lt.f32.partialorder %v728, 1.0
      %vm761 = vcmp.lt.f32.partialorder %v729, 1.0
      %vm762 = vcmp.lt.f32.partialorder %v730, 1.0
      %vm763 = vcmp.lt.f32.partialorder %v731, 1.0
      %vm764 = vcmp.lt.f32.partialorder %v732, 1.0
      %vm765 = vcmp.lt.f32.partialorder %v733, 1.0
      %vm766 = vcmp.lt.f32.partialorder %v734, 1.0
      %vm767 = vcmp.lt.f32.partialorder %v735, 1.0
      %vm768 = vcmp.lt.f32.partialorder %v736, 1.0
      %vm769 = vcmp.lt.f32.partialorder %v737, 1.0
      %vm770 = vcmp.lt.f32.partialorder %v738, 1.0
      %vm771 = vcmp.lt.f32.partialorder %v739, 1.0
      %vm772 = vcmp.lt.f32.partialorder %v740, 1.0
      %vm773 = vcmp.lt.f32.partialorder %v741, 1.0
      %vm774 = vcmp.lt.f32.partialorder %v742, 1.0
      %vm775 = vcmp.lt.f32.partialorder %v743, 1.0
      %v776 = vmul.f32 %v680, 0.5
      %v777 = vmul.f32 %v681, 0.5
      %v778 = vmul.f32 %v682, 0.5
      %v779 = vmul.f32 %v683, 0.5
      %v780 = vmul.f32 %v684, 0.5
      %v781 = vmul.f32 %v685, 0.5
      %v782 = vmul.f32 %v686, 0.5
      %v783 = vmul.f32 %v687, 0.5
      %v784 = vmul.f32 %v688, 0.5
      %v785 = vmul.f32 %v689, 0.5
      %v786 = vmul.f32 %v690, 0.5
      %v787 = vmul.f32 %v691, 0.5
      %v788 = vmul.f32 %v692, 0.5
      %v789 = vmul.f32 %v693, 0.5
      %v790 = vmul.f32 %v694, 0.5
      %v791 = vmul.f32 %v695, 0.5
      %v792 = vmul.f32 %v696, 0.5
      %v793 = vmul.f32 %v697, 0.5
      %v794 = vmul.f32 %v698, 0.5
      %v795 = vmul.f32 %v699, 0.5
      %v796 = vmul.f32 %v700, 0.5
      %v797 = vmul.f32 %v701, 0.5
      %v798 = vmul.f32 %v702, 0.5
      %v799 = vmul.f32 %v703, 0.5
      %v800 = vmul.f32 %v704, 0.5
      %v801 = vmul.f32 %v705, 0.5
      %v802 = vmul.f32 %v706, 0.5
      %v803 = vmul.f32 %v707, 0.5
      %v804 = vmul.f32 %v708, 0.5
      %v805 = vmul.f32 %v709, 0.5
      %v806 = vmul.f32 %v710, 0.5
      %v807 = vmul.f32 %v711, 0.5
      %v808 = vmul.f32 %v776, %v680
      %v809 = vmul.f32 %v777, %v681
      %v810 = vmul.f32 %v778, %v682
      %v811 = vmul.f32 %v779, %v683
      %v812 = vmul.f32 %v780, %v684
      %v813 = vmul.f32 %v781, %v685
      %v814 = vmul.f32 %v782, %v686
      %v815 = vmul.f32 %v783, %v687
      %v816 = vmul.f32 %v784, %v688
      %v817 = vmul.f32 %v785, %v689
      %v818 = vmul.f32 %v786, %v690
      %v819 = vmul.f32 %v787, %v691
      %v820 = vmul.f32 %v788, %v692
      %v821 = vmul.f32 %v789, %v693
      %v822 = vmul.f32 %v790, %v694
      %v823 = vmul.f32 %v791, %v695
      %v824 = vmul.f32 %v792, %v696
      %v825 = vmul.f32 %v793, %v697
      %v826 = vmul.f32 %v794, %v698
      %v827 = vmul.f32 %v795, %v699
      %v828 = vmul.f32 %v796, %v700
      %v829 = vmul.f32 %v797, %v701
      %v830 = vmul.f32 %v798, %v702
      %v831 = vmul.f32 %v799, %v703
      %v832 = vmul.f32 %v800, %v704
      %v833 = vmul.f32 %v801, %v705
      %v834 = vmul.f32 %v802, %v706
      %v835 = vmul.f32 %v803, %v707
      %v836 = vmul.f32 %v804, %v708
      %v837 = vmul.f32 %v805, %v709
      %v838 = vmul.f32 %v806, %v710
      %v839 = vmul.f32 %v807, %v711
      %v840 = vsub.f32 %v712, 0.5
      %v841 = vsub.f32 %v713, 0.5
      %v842 = vsub.f32 %v714, 0.5
      %v843 = vsub.f32 %v715, 0.5
      %v844 = vsub.f32 %v716, 0.5
      %v845 = vsub.f32 %v717, 0.5
      %v846 = vsub.f32 %v718, 0.5
      %v847 = vsub.f32 %v719, 0.5
      %v848 = vsub.f32 %v720, 0.5
      %v849 = vsub.f32 %v721, 0.5
      %v850 = vsub.f32 %v722, 0.5
      %v851 = vsub.f32 %v723, 0.5
      %v852 = vsub.f32 %v724, 0.5
      %v853 = vsub.f32 %v725, 0.5
      %v854 = vsub.f32 %v726, 0.5
      %v855 = vsub.f32 %v727, 0.5
      %v856 = vsub.f32 %v728, 0.5
      %v857 = vsub.f32 %v729, 0.5
      %v858 = vsub.f32 %v730, 0.5
      %v859 = vsub.f32 %v731, 0.5
      %v860 = vsub.f32 %v732, 0.5
      %v861 = vsub.f32 %v733, 0.5
      %v862 = vsub.f32 %v734, 0.5
      %v863 = vsub.f32 %v735, 0.5
      %v864 = vsub.f32 %v736, 0.5
      %v865 = vsub.f32 %v737, 0.5
      %v866 = vsub.f32 %v738, 0.5
      %v867 = vsub.f32 %v739, 0.5
      %v868 = vsub.f32 %v740, 0.5
      %v869 = vsub.f32 %v741, 0.5
      %v870 = vsub.f32 %v742, 0.5
      %v871 = vsub.f32 %v743, 0.5
      %v872 = vsel %vm744, %v808, %v840
      %v873 = vsel %vm745, %v809, %v841
      %v874 = vsel %vm746, %v810, %v842
      %v875 = vsel %vm747, %v811, %v843
      %v876 = vsel %vm748, %v812, %v844
      %v877 = vsel %vm749, %v813, %v845
      %v878 = vsel %vm750, %v814, %v846
      %v879 = vsel %vm751, %v815, %v847
      %v880 = vsel %vm752, %v816, %v848
      %v881 = vsel %vm753, %v817, %v849
      %v882 = vsel %vm754, %v818, %v850
      %v883 = vsel %vm755, %v819, %v851
      %v884 = vsel %vm756, %v820, %v852
      %v885 = vsel %vm757, %v821, %v853
      %v886 = vsel %vm758, %v822, %v854
      %v887 = vsel %vm759, %v823, %v855
      %v888 = vsel %vm760, %v824, %v856
      %v889 = vsel %vm761, %v825, %v857
      %v890 = vsel %vm762, %v826, %v858
      %v891 = vsel %vm763, %v827, %v859
      %v892 = vsel %vm764, %v828, %v860
      %v893 = vsel %vm765, %v829, %v861
      %v894 = vsel %vm766, %v830, %v862
      %v895 = vsel %vm767, %v831, %v863
      %v896 = vsel %vm768, %v832, %v864
      %v897 = vsel %vm769, %v833, %v865
      %v898 = vsel %vm770, %v834, %v866
      %v899 = vsel %vm771, %v835, %v867
      %v900 = vsel %vm772, %v836, %v868
      %v901 = vsel %vm773, %v837, %v869
      %v902 = vsel %vm774, %v838, %v870
      %v903 = vsel %vm775, %v839, %v871
      %905 = vset.pattern.permute.xlu0 0
      %906 = vperm.xlu0 %905, %v488
      %v907 = vpop.permute.xlu0 %906
      %910 = vset.pattern.permute.xlu0 0
      %911 = vperm.xlu0 %910, %v489
      %v912 = vpop.permute.xlu0 %911
      %915 = vset.pattern.permute.xlu0 0
      %916 = vperm.xlu0 %915, %v490
      %v917 = vpop.permute.xlu0 %916
      %920 = vset.pattern.permute.xlu0 0
      %921 = vperm.xlu0 %920, %v491
      %v922 = vpop.permute.xlu0 %921
      %925 = vset.pattern.permute.xlu0 0
      %926 = vperm.xlu0 %925, %v492
      %v927 = vpop.permute.xlu0 %926
      %930 = vset.pattern.permute.xlu0 0
      %931 = vperm.xlu0 %930, %v493
      %v932 = vpop.permute.xlu0 %931
      %935 = vset.pattern.permute.xlu0 0
      %936 = vperm.xlu0 %935, %v494
      %v937 = vpop.permute.xlu0 %936
      %940 = vset.pattern.permute.xlu0 0
      %941 = vperm.xlu0 %940, %v495
      %v942 = vpop.permute.xlu0 %941
      %945 = vset.pattern.permute.xlu0 0
      %946 = vperm.xlu0 %945, %v496
      %v947 = vpop.permute.xlu0 %946
      %950 = vset.pattern.permute.xlu0 0
      %951 = vperm.xlu0 %950, %v497
      %v952 = vpop.permute.xlu0 %951
      %955 = vset.pattern.permute.xlu0 0
      %956 = vperm.xlu0 %955, %v498
      %v957 = vpop.permute.xlu0 %956
      %960 = vset.pattern.permute.xlu0 0
      %961 = vperm.xlu0 %960, %v499
      %v962 = vpop.permute.xlu0 %961
      %965 = vset.pattern.permute.xlu0 0
      %966 = vperm.xlu0 %965, %v500
      %v967 = vpop.permute.xlu0 %966
      %970 = vset.pattern.permute.xlu0 0
      %971 = vperm.xlu0 %970, %v501
      %v972 = vpop.permute.xlu0 %971
      %975 = vset.pattern.permute.xlu0 0
      %976 = vperm.xlu0 %975, %v502
      %v977 = vpop.permute.xlu0 %976
      %980 = vset.pattern.permute.xlu0 0
      %981 = vperm.xlu0 %980, %v503
      %v982 = vpop.permute.xlu0 %981
      %985 = vset.pattern.permute.xlu0 0
      %986 = vperm.xlu0 %985, %v504
      %v987 = vpop.permute.xlu0 %986
      %990 = vset.pattern.permute.xlu0 0
      %991 = vperm.xlu0 %990, %v505
      %v992 = vpop.permute.xlu0 %991
      %995 = vset.pattern.permute.xlu0 0
      %996 = vperm.xlu0 %995, %v506
      %v997 = vpop.permute.xlu0 %996
      %1000 = vset.pattern.permute.xlu0 0
      %1001 = vperm.xlu0 %1000, %v507
      %v1002 = vpop.permute.xlu0 %1001
      %1005 = vset.pattern.permute.xlu0 0
      %1006 = vperm.xlu0 %1005, %v508
      %v1007 = vpop.permute.xlu0 %1006
      %1010 = vset.pattern.permute.xlu0 0
      %1011 = vperm.xlu0 %1010, %v509
      %v1012 = vpop.permute.xlu0 %1011
      %1015 = vset.pattern.permute.xlu0 0
      %1016 = vperm.xlu0 %1015, %v510
      %v1017 = vpop.permute.xlu0 %1016
      %1020 = vset.pattern.permute.xlu0 0
      %1021 = vperm.xlu0 %1020, %v511
      %v1022 = vpop.permute.xlu0 %1021
      %1025 = vset.pattern.permute.xlu0 0
      %1026 = vperm.xlu0 %1025, %v512
      %v1027 = vpop.permute.xlu0 %1026
      %1030 = vset.pattern.permute.xlu0 0
      %1031 = vperm.xlu0 %1030, %v513
      %v1032 = vpop.permute.xlu0 %1031
      %1035 = vset.pattern.permute.xlu0 0
      %1036 = vperm.xlu0 %1035, %v514
      %v1037 = vpop.permute.xlu0 %1036
      %1040 = vset.pattern.permute.xlu0 0
      %1041 = vperm.xlu0 %1040, %v515
      %v1042 = vpop.permute.xlu0 %1041
      %1045 = vset.pattern.permute.xlu0 0
      %1046 = vperm.xlu0 %1045, %v516
      %v1047 = vpop.permute.xlu0 %1046
      %1050 = vset.pattern.permute.xlu0 0
      %1051 = vperm.xlu0 %1050, %v517
      %v1052 = vpop.permute.xlu0 %1051
      %1055 = vset.pattern.permute.xlu0 0
      %1056 = vperm.xlu0 %1055, %v518
      %v1057 = vpop.permute.xlu0 %1056
      %1060 = vset.pattern.permute.xlu0 0
      %1061 = vperm.xlu0 %1060, %v519
      %v1062 = vpop.permute.xlu0 %1061
      %v1064 = vmul.f32 %v872, %v907
      %v1065 = vmul.f32 %v873, %v912
      %v1066 = vmul.f32 %v874, %v917
      %v1067 = vmul.f32 %v875, %v922
      %v1068 = vmul.f32 %v876, %v927
      %v1069 = vmul.f32 %v877, %v932
      %v1070 = vmul.f32 %v878, %v937
      %v1071 = vmul.f32 %v879, %v942
      %v1072 = vmul.f32 %v880, %v947
      %v1073 = vmul.f32 %v881, %v952
      %v1074 = vmul.f32 %v882, %v957
      %v1075 = vmul.f32 %v883, %v962
      %v1076 = vmul.f32 %v884, %v967
      %v1077 = vmul.f32 %v885, %v972
      %v1078 = vmul.f32 %v886, %v977
      %v1079 = vmul.f32 %v887, %v982
      %v1080 = vmul.f32 %v888, %v987
      %v1081 = vmul.f32 %v889, %v992
      %v1082 = vmul.f32 %v890, %v997
      %v1083 = vmul.f32 %v891, %v1002
      %v1084 = vmul.f32 %v892, %v1007
      %v1085 = vmul.f32 %v893, %v1012
      %v1086 = vmul.f32 %v894, %v1017
      %v1087 = vmul.f32 %v895, %v1022
      %v1088 = vmul.f32 %v896, %v1027
      %v1089 = vmul.f32 %v897, %v1032
      %v1090 = vmul.f32 %v898, %v1037
      %v1091 = vmul.f32 %v899, %v1042
      %v1092 = vmul.f32 %v900, %v1047
      %v1093 = vmul.f32 %v901, %v1052
      %v1094 = vmul.f32 %v902, %v1057
      %v1095 = vmul.f32 %v903, %v1062
      %vm1096 = vcmask 31744
      %v1097 = vsel %vm1096, %v1064, 0.0
      %v1098 = vsel %vm1096, %v1065, 0.0
      %v1099 = vadd.f32 %v1097, %v1098
      %v1100 = vsel %vm1096, %v1066, 0.0
      %v1101 = vadd.f32 %v1099, %v1100
      %v1102 = vsel %vm1096, %v1067, 0.0
      %v1103 = vadd.f32 %v1101, %v1102
      %v1104 = vsel %vm1096, %v1068, 0.0
      %v1105 = vadd.f32 %v1103, %v1104
      %v1106 = vsel %vm1096, %v1069, 0.0
      %v1107 = vadd.f32 %v1105, %v1106
      %v1108 = vsel %vm1096, %v1070, 0.0
      %v1109 = vadd.f32 %v1107, %v1108
      %v1110 = vsel %vm1096, %v1071, 0.0
      %v1111 = vadd.f32 %v1109, %v1110
      %v1112 = vsel %vm1096, %v1072, 0.0
      %v1113 = vadd.f32 %v1111, %v1112
      %v1114 = vsel %vm1096, %v1073, 0.0
      %v1115 = vadd.f32 %v1113, %v1114
      %v1116 = vsel %vm1096, %v1074, 0.0
      %v1117 = vadd.f32 %v1115, %v1116
      %v1118 = vsel %vm1096, %v1075, 0.0
      %v1119 = vadd.f32 %v1117, %v1118
      %v1120 = vsel %vm1096, %v1076, 0.0
      %v1121 = vadd.f32 %v1119, %v1120
      %v1122 = vsel %vm1096, %v1077, 0.0
      %v1123 = vadd.f32 %v1121, %v1122
      %v1124 = vsel %vm1096, %v1078, 0.0
      %v1125 = vadd.f32 %v1123, %v1124
      %v1126 = vsel %vm1096, %v1079, 0.0
      %v1127 = vadd.f32 %v1125, %v1126
      %v1128 = vsel %vm1096, %v1080, 0.0
      %v1129 = vadd.f32 %v1127, %v1128
      %v1130 = vsel %vm1096, %v1081, 0.0
      %v1131 = vadd.f32 %v1129, %v1130
      %v1132 = vsel %vm1096, %v1082, 0.0
      %v1133 = vadd.f32 %v1131, %v1132
      %v1134 = vsel %vm1096, %v1083, 0.0
      %v1135 = vadd.f32 %v1133, %v1134
      %v1136 = vsel %vm1096, %v1084, 0.0
      %v1137 = vadd.f32 %v1135, %v1136
      %v1138 = vsel %vm1096, %v1085, 0.0
      %v1139 = vadd.f32 %v1137, %v1138
      %v1140 = vsel %vm1096, %v1086, 0.0
      %v1141 = vadd.f32 %v1139, %v1140
      %v1142 = vsel %vm1096, %v1087, 0.0
      %v1143 = vadd.f32 %v1141, %v1142
      %v1144 = vsel %vm1096, %v1088, 0.0
      %v1145 = vadd.f32 %v1143, %v1144
      %v1146 = vsel %vm1096, %v1089, 0.0
      %v1147 = vadd.f32 %v1145, %v1146
      %v1148 = vsel %vm1096, %v1090, 0.0
      %v1149 = vadd.f32 %v1147, %v1148
      %v1150 = vsel %vm1096, %v1091, 0.0
      %v1151 = vadd.f32 %v1149, %v1150
      %v1152 = vsel %vm1096, %v1092, 0.0
      %v1153 = vadd.f32 %v1151, %v1152
      %v1154 = vsel %vm1096, %v1093, 0.0
      %v1155 = vadd.f32 %v1153, %v1154
      %v1156 = vsel %vm1096, %v1094, 0.0
      %v1157 = vadd.f32 %v1155, %v1156
      %v1158 = vsel %vm1096, %v1095, 0.0
      %v1159 = vadd.f32 %v1157, %v1158
      %1160 = vadd.xlane.f32.xlu0 %v1159
      %v1161 = vpop.xlane.xlu0 %1160
      %v1162 = vrot.slane %v1161, 4
      %v1163 = vadd.f32 %v1161, %v1162
      %v1164 = vrot.slane %v1163, 2
      %v1165 = vadd.f32 %v1163, %v1164
      %v1166 = vrot.slane %v1165, 1
      %v1167 = vadd.f32 %v1165, %v1166
      %s1168 = vtos %v1167
      %v1169 = vld [vmem:[%s369] sm:$0xff]
      %v1170 = vld [vmem:[%s369 + $0x8] sm:$0xff]
      %v1171 = vld [vmem:[%s369 + $0x10] sm:$0xff]
      %v1172 = vld [vmem:[%s369 + $0x18] sm:$0xff]
      %v1173 = vld [vmem:[%s369 + $0x20] sm:$0xff]
      %v1174 = vld [vmem:[%s369 + $0x28] sm:$0xff]
      %v1175 = vld [vmem:[%s369 + $0x30] sm:$0xff]
      %v1176 = vld [vmem:[%s369 + $0x38] sm:$0xff]
      %v1177 = vld [vmem:[%s369 + $0x40] sm:$0xff]
      %v1178 = vld [vmem:[%s369 + $0x48] sm:$0xff]
      %v1179 = vld [vmem:[%s369 + $0x50] sm:$0xff]
      %v1180 = vld [vmem:[%s369 + $0x58] sm:$0xff]
      %v1181 = vld [vmem:[%s369 + $0x60] sm:$0xff]
      %v1182 = vld [vmem:[%s369 + $0x68] sm:$0xff]
      %v1183 = vld [vmem:[%s369 + $0x70] sm:$0xff]
      %v1184 = vld [vmem:[%s369 + $0x78] sm:$0xff]
      %v1185 = vld [vmem:[%s369 + $0x80] sm:$0xff]
      %v1186 = vld [vmem:[%s369 + $0x88] sm:$0xff]
      %v1187 = vld [vmem:[%s369 + $0x90] sm:$0xff]
      %v1188 = vld [vmem:[%s369 + $0x98] sm:$0xff]
      %v1189 = vld [vmem:[%s369 + $0xa0] sm:$0xff]
      %v1190 = vld [vmem:[%s369 + $0xa8] sm:$0xff]
      %v1191 = vld [vmem:[%s369 + $0xb0] sm:$0xff]
      %v1192 = vld [vmem:[%s369 + $0xb8] sm:$0xff]
      %v1193 = vld [vmem:[%s369 + $0xc0] sm:$0xff]
      %v1194 = vld [vmem:[%s369 + $0xc8] sm:$0xff]
      %v1195 = vld [vmem:[%s369 + $0xd0] sm:$0xff]
      %v1196 = vld [vmem:[%s369 + $0xd8] sm:$0xff]
      %v1197 = vld [vmem:[%s369 + $0xe0] sm:$0xff]
      %v1198 = vld [vmem:[%s369 + $0xe8] sm:$0xff]
      %v1199 = vld [vmem:[%s369 + $0xf0] sm:$0xff]
      %v1200 = vld [vmem:[%s369 + $0xf8] sm:$0xff]
      %v1201 = vld [vmem:[%s374] sm:$0xff]
      %v1202 = vld [vmem:[%s374 + $0x8] sm:$0xff]
      %v1203 = vld [vmem:[%s374 + $0x10] sm:$0xff]
      %v1204 = vld [vmem:[%s374 + $0x18] sm:$0xff]
      %v1205 = vld [vmem:[%s374 + $0x20] sm:$0xff]
      %v1206 = vld [vmem:[%s374 + $0x28] sm:$0xff]
      %v1207 = vld [vmem:[%s374 + $0x30] sm:$0xff]
      %v1208 = vld [vmem:[%s374 + $0x38] sm:$0xff]
      %v1209 = vld [vmem:[%s374 + $0x40] sm:$0xff]
      %v1210 = vld [vmem:[%s374 + $0x48] sm:$0xff]
      %v1211 = vld [vmem:[%s374 + $0x50] sm:$0xff]
      %v1212 = vld [vmem:[%s374 + $0x58] sm:$0xff]
      %v1213 = vld [vmem:[%s374 + $0x60] sm:$0xff]
      %v1214 = vld [vmem:[%s374 + $0x68] sm:$0xff]
      %v1215 = vld [vmem:[%s374 + $0x70] sm:$0xff]
      %v1216 = vld [vmem:[%s374 + $0x78] sm:$0xff]
      %v1217 = vld [vmem:[%s374 + $0x80] sm:$0xff]
      %v1218 = vld [vmem:[%s374 + $0x88] sm:$0xff]
      %v1219 = vld [vmem:[%s374 + $0x90] sm:$0xff]
      %v1220 = vld [vmem:[%s374 + $0x98] sm:$0xff]
      %v1221 = vld [vmem:[%s374 + $0xa0] sm:$0xff]
      %v1222 = vld [vmem:[%s374 + $0xa8] sm:$0xff]
      %v1223 = vld [vmem:[%s374 + $0xb0] sm:$0xff]
      %v1224 = vld [vmem:[%s374 + $0xb8] sm:$0xff]
      %v1225 = vld [vmem:[%s374 + $0xc0] sm:$0xff]
      %v1226 = vld [vmem:[%s374 + $0xc8] sm:$0xff]
      %v1227 = vld [vmem:[%s374 + $0xd0] sm:$0xff]
      %v1228 = vld [vmem:[%s374 + $0xd8] sm:$0xff]
      %v1229 = vld [vmem:[%s374 + $0xe0] sm:$0xff]
      %v1230 = vld [vmem:[%s374 + $0xe8] sm:$0xff]
      %v1231 = vld [vmem:[%s374 + $0xf0] sm:$0xff]
      %v1232 = vld [vmem:[%s374 + $0xf8] sm:$0xff]
      %v1233 = vsub.f32 %v1169, %v1201
      %v1234 = vsub.f32 %v1170, %v1202
      %v1235 = vsub.f32 %v1171, %v1203
      %v1236 = vsub.f32 %v1172, %v1204
      %v1237 = vsub.f32 %v1173, %v1205
      %v1238 = vsub.f32 %v1174, %v1206
      %v1239 = vsub.f32 %v1175, %v1207
      %v1240 = vsub.f32 %v1176, %v1208
      %v1241 = vsub.f32 %v1177, %v1209
      %v1242 = vsub.f32 %v1178, %v1210
      %v1243 = vsub.f32 %v1179, %v1211
      %v1244 = vsub.f32 %v1180, %v1212
      %v1245 = vsub.f32 %v1181, %v1213
      %v1246 = vsub.f32 %v1182, %v1214
      %v1247 = vsub.f32 %v1183, %v1215
      %v1248 = vsub.f32 %v1184, %v1216
      %v1249 = vsub.f32 %v1185, %v1217
      %v1250 = vsub.f32 %v1186, %v1218
      %v1251 = vsub.f32 %v1187, %v1219
      %v1252 = vsub.f32 %v1188, %v1220
      %v1253 = vsub.f32 %v1189, %v1221
      %v1254 = vsub.f32 %v1190, %v1222
      %v1255 = vsub.f32 %v1191, %v1223
      %v1256 = vsub.f32 %v1192, %v1224
      %v1257 = vsub.f32 %v1193, %v1225
      %v1258 = vsub.f32 %v1194, %v1226
      %v1259 = vsub.f32 %v1195, %v1227
      %v1260 = vsub.f32 %v1196, %v1228
      %v1261 = vsub.f32 %v1197, %v1229
      %v1262 = vsub.f32 %v1198, %v1230
      %v1263 = vsub.f32 %v1199, %v1231
      %v1264 = vsub.f32 %v1200, %v1232
      %v1265 = vand.u32 2147483647, %v1233
      %v1266 = vand.u32 2147483647, %v1234
      %v1267 = vand.u32 2147483647, %v1235
      %v1268 = vand.u32 2147483647, %v1236
      %v1269 = vand.u32 2147483647, %v1237
      %v1270 = vand.u32 2147483647, %v1238
      %v1271 = vand.u32 2147483647, %v1239
      %v1272 = vand.u32 2147483647, %v1240
      %v1273 = vand.u32 2147483647, %v1241
      %v1274 = vand.u32 2147483647, %v1242
      %v1275 = vand.u32 2147483647, %v1243
      %v1276 = vand.u32 2147483647, %v1244
      %v1277 = vand.u32 2147483647, %v1245
      %v1278 = vand.u32 2147483647, %v1246
      %v1279 = vand.u32 2147483647, %v1247
      %v1280 = vand.u32 2147483647, %v1248
      %v1281 = vand.u32 2147483647, %v1249
      %v1282 = vand.u32 2147483647, %v1250
      %v1283 = vand.u32 2147483647, %v1251
      %v1284 = vand.u32 2147483647, %v1252
      %v1285 = vand.u32 2147483647, %v1253
      %v1286 = vand.u32 2147483647, %v1254
      %v1287 = vand.u32 2147483647, %v1255
      %v1288 = vand.u32 2147483647, %v1256
      %v1289 = vand.u32 2147483647, %v1257
      %v1290 = vand.u32 2147483647, %v1258
      %v1291 = vand.u32 2147483647, %v1259
      %v1292 = vand.u32 2147483647, %v1260
      %v1293 = vand.u32 2147483647, %v1261
      %v1294 = vand.u32 2147483647, %v1262
      %v1295 = vand.u32 2147483647, %v1263
      %v1296 = vand.u32 2147483647, %v1264
      %vm1297 = vcmp.lt.f32.partialorder %v1265, 1.0
      %vm1298 = vcmp.lt.f32.partialorder %v1266, 1.0
      %vm1299 = vcmp.lt.f32.partialorder %v1267, 1.0
      %vm1300 = vcmp.lt.f32.partialorder %v1268, 1.0
      %vm1301 = vcmp.lt.f32.partialorder %v1269, 1.0
      %vm1302 = vcmp.lt.f32.partialorder %v1270, 1.0
      %vm1303 = vcmp.lt.f32.partialorder %v1271, 1.0
      %vm1304 = vcmp.lt.f32.partialorder %v1272, 1.0
      %vm1305 = vcmp.lt.f32.partialorder %v1273, 1.0
      %vm1306 = vcmp.lt.f32.partialorder %v1274, 1.0
      %vm1307 = vcmp.lt.f32.partialorder %v1275, 1.0
      %vm1308 = vcmp.lt.f32.partialorder %v1276, 1.0
      %vm1309 = vcmp.lt.f32.partialorder %v1277, 1.0
      %vm1310 = vcmp.lt.f32.partialorder %v1278, 1.0
      %vm1311 = vcmp.lt.f32.partialorder %v1279, 1.0
      %vm1312 = vcmp.lt.f32.partialorder %v1280, 1.0
      %vm1313 = vcmp.lt.f32.partialorder %v1281, 1.0
      %vm1314 = vcmp.lt.f32.partialorder %v1282, 1.0
      %vm1315 = vcmp.lt.f32.partialorder %v1283, 1.0
      %vm1316 = vcmp.lt.f32.partialorder %v1284, 1.0
      %vm1317 = vcmp.lt.f32.partialorder %v1285, 1.0
      %vm1318 = vcmp.lt.f32.partialorder %v1286, 1.0
      %vm1319 = vcmp.lt.f32.partialorder %v1287, 1.0
      %vm1320 = vcmp.lt.f32.partialorder %v1288, 1.0
      %vm1321 = vcmp.lt.f32.partialorder %v1289, 1.0
      %vm1322 = vcmp.lt.f32.partialorder %v1290, 1.0
      %vm1323 = vcmp.lt.f32.partialorder %v1291, 1.0
      %vm1324 = vcmp.lt.f32.partialorder %v1292, 1.0
      %vm1325 = vcmp.lt.f32.partialorder %v1293, 1.0
      %vm1326 = vcmp.lt.f32.partialorder %v1294, 1.0
      %vm1327 = vcmp.lt.f32.partialorder %v1295, 1.0
      %vm1328 = vcmp.lt.f32.partialorder %v1296, 1.0
      %v1329 = vmul.f32 %v1233, 0.5
      %v1330 = vmul.f32 %v1234, 0.5
      %v1331 = vmul.f32 %v1235, 0.5
      %v1332 = vmul.f32 %v1236, 0.5
      %v1333 = vmul.f32 %v1237, 0.5
      %v1334 = vmul.f32 %v1238, 0.5
      %v1335 = vmul.f32 %v1239, 0.5
      %v1336 = vmul.f32 %v1240, 0.5
      %v1337 = vmul.f32 %v1241, 0.5
      %v1338 = vmul.f32 %v1242, 0.5
      %v1339 = vmul.f32 %v1243, 0.5
      %v1340 = vmul.f32 %v1244, 0.5
      %v1341 = vmul.f32 %v1245, 0.5
      %v1342 = vmul.f32 %v1246, 0.5
      %v1343 = vmul.f32 %v1247, 0.5
      %v1344 = vmul.f32 %v1248, 0.5
      %v1345 = vmul.f32 %v1249, 0.5
      %v1346 = vmul.f32 %v1250, 0.5
      %v1347 = vmul.f32 %v1251, 0.5
      %v1348 = vmul.f32 %v1252, 0.5
      %v1349 = vmul.f32 %v1253, 0.5
      %v1350 = vmul.f32 %v1254, 0.5
      %v1351 = vmul.f32 %v1255, 0.5
      %v1352 = vmul.f32 %v1256, 0.5
      %v1353 = vmul.f32 %v1257, 0.5
      %v1354 = vmul.f32 %v1258, 0.5
      %v1355 = vmul.f32 %v1259, 0.5
      %v1356 = vmul.f32 %v1260, 0.5
      %v1357 = vmul.f32 %v1261, 0.5
      %v1358 = vmul.f32 %v1262, 0.5
      %v1359 = vmul.f32 %v1263, 0.5
      %v1360 = vmul.f32 %v1264, 0.5
      %v1361 = vmul.f32 %v1329, %v1233
      %v1362 = vmul.f32 %v1330, %v1234
      %v1363 = vmul.f32 %v1331, %v1235
      %v1364 = vmul.f32 %v1332, %v1236
      %v1365 = vmul.f32 %v1333, %v1237
      %v1366 = vmul.f32 %v1334, %v1238
      %v1367 = vmul.f32 %v1335, %v1239
      %v1368 = vmul.f32 %v1336, %v1240
      %v1369 = vmul.f32 %v1337, %v1241
      %v1370 = vmul.f32 %v1338, %v1242
      %v1371 = vmul.f32 %v1339, %v1243
      %v1372 = vmul.f32 %v1340, %v1244
      %v1373 = vmul.f32 %v1341, %v1245
      %v1374 = vmul.f32 %v1342, %v1246
      %v1375 = vmul.f32 %v1343, %v1247
      %v1376 = vmul.f32 %v1344, %v1248
      %v1377 = vmul.f32 %v1345, %v1249
      %v1378 = vmul.f32 %v1346, %v1250
      %v1379 = vmul.f32 %v1347, %v1251
      %v1380 = vmul.f32 %v1348, %v1252
      %v1381 = vmul.f32 %v1349, %v1253
      %v1382 = vmul.f32 %v1350, %v1254
      %v1383 = vmul.f32 %v1351, %v1255
      %v1384 = vmul.f32 %v1352, %v1256
      %v1385 = vmul.f32 %v1353, %v1257
      %v1386 = vmul.f32 %v1354, %v1258
      %v1387 = vmul.f32 %v1355, %v1259
      %v1388 = vmul.f32 %v1356, %v1260
      %v1389 = vmul.f32 %v1357, %v1261
      %v1390 = vmul.f32 %v1358, %v1262
      %v1391 = vmul.f32 %v1359, %v1263
      %v1392 = vmul.f32 %v1360, %v1264
      %v1393 = vsub.f32 %v1265, 0.5
      %v1394 = vsub.f32 %v1266, 0.5
      %v1395 = vsub.f32 %v1267, 0.5
      %v1396 = vsub.f32 %v1268, 0.5
      %v1397 = vsub.f32 %v1269, 0.5
      %v1398 = vsub.f32 %v1270, 0.5
      %v1399 = vsub.f32 %v1271, 0.5
      %v1400 = vsub.f32 %v1272, 0.5
      %v1401 = vsub.f32 %v1273, 0.5
      %v1402 = vsub.f32 %v1274, 0.5
      %v1403 = vsub.f32 %v1275, 0.5
      %v1404 = vsub.f32 %v1276, 0.5
      %v1405 = vsub.f32 %v1277, 0.5
      %v1406 = vsub.f32 %v1278, 0.5
      %v1407 = vsub.f32 %v1279, 0.5
      %v1408 = vsub.f32 %v1280, 0.5
      %v1409 = vsub.f32 %v1281, 0.5
      %v1410 = vsub.f32 %v1282, 0.5
      %v1411 = vsub.f32 %v1283, 0.5
      %v1412 = vsub.f32 %v1284, 0.5
      %v1413 = vsub.f32 %v1285, 0.5
      %v1414 = vsub.f32 %v1286, 0.5
      %v1415 = vsub.f32 %v1287, 0.5
      %v1416 = vsub.f32 %v1288, 0.5
      %v1417 = vsub.f32 %v1289, 0.5
      %v1418 = vsub.f32 %v1290, 0.5
      %v1419 = vsub.f32 %v1291, 0.5
      %v1420 = vsub.f32 %v1292, 0.5
      %v1421 = vsub.f32 %v1293, 0.5
      %v1422 = vsub.f32 %v1294, 0.5
      %v1423 = vsub.f32 %v1295, 0.5
      %v1424 = vsub.f32 %v1296, 0.5
      %v1425 = vsel %vm1297, %v1361, %v1393
      %v1426 = vsel %vm1298, %v1362, %v1394
      %v1427 = vsel %vm1299, %v1363, %v1395
      %v1428 = vsel %vm1300, %v1364, %v1396
      %v1429 = vsel %vm1301, %v1365, %v1397
      %v1430 = vsel %vm1302, %v1366, %v1398
      %v1431 = vsel %vm1303, %v1367, %v1399
      %v1432 = vsel %vm1304, %v1368, %v1400
      %v1433 = vsel %vm1305, %v1369, %v1401
      %v1434 = vsel %vm1306, %v1370, %v1402
      %v1435 = vsel %vm1307, %v1371, %v1403
      %v1436 = vsel %vm1308, %v1372, %v1404
      %v1437 = vsel %vm1309, %v1373, %v1405
      %v1438 = vsel %vm1310, %v1374, %v1406
      %v1439 = vsel %vm1311, %v1375, %v1407
      %v1440 = vsel %vm1312, %v1376, %v1408
      %v1441 = vsel %vm1313, %v1377, %v1409
      %v1442 = vsel %vm1314, %v1378, %v1410
      %v1443 = vsel %vm1315, %v1379, %v1411
      %v1444 = vsel %vm1316, %v1380, %v1412
      %v1445 = vsel %vm1317, %v1381, %v1413
      %v1446 = vsel %vm1318, %v1382, %v1414
      %v1447 = vsel %vm1319, %v1383, %v1415
      %v1448 = vsel %vm1320, %v1384, %v1416
      %v1449 = vsel %vm1321, %v1385, %v1417
      %v1450 = vsel %vm1322, %v1386, %v1418
      %v1451 = vsel %vm1323, %v1387, %v1419
      %v1452 = vsel %vm1324, %v1388, %v1420
      %v1453 = vsel %vm1325, %v1389, %v1421
      %v1454 = vsel %vm1326, %v1390, %v1422
      %v1455 = vsel %vm1327, %v1391, %v1423
      %v1456 = vsel %vm1328, %v1392, %v1424
      %1458 = vset.pattern.permute.xlu0 0
      %1459 = vperm.xlu0 %1458, %v584
      %v1460 = vpop.permute.xlu0 %1459
      %1463 = vset.pattern.permute.xlu0 0
      %1464 = vperm.xlu0 %1463, %v585
      %v1465 = vpop.permute.xlu0 %1464
      %1468 = vset.pattern.permute.xlu0 0
      %1469 = vperm.xlu0 %1468, %v586
      %v1470 = vpop.permute.xlu0 %1469
      %1473 = vset.pattern.permute.xlu0 0
      %1474 = vperm.xlu0 %1473, %v587
      %v1475 = vpop.permute.xlu0 %1474
      %1478 = vset.pattern.permute.xlu0 0
      %1479 = vperm.xlu0 %1478, %v588
      %v1480 = vpop.permute.xlu0 %1479
      %1483 = vset.pattern.permute.xlu0 0
      %1484 = vperm.xlu0 %1483, %v589
      %v1485 = vpop.permute.xlu0 %1484
      %1488 = vset.pattern.permute.xlu0 0
      %1489 = vperm.xlu0 %1488, %v590
      %v1490 = vpop.permute.xlu0 %1489
      %1493 = vset.pattern.permute.xlu0 0
      %1494 = vperm.xlu0 %1493, %v591
      %v1495 = vpop.permute.xlu0 %1494
      %1498 = vset.pattern.permute.xlu0 0
      %1499 = vperm.xlu0 %1498, %v592
      %v1500 = vpop.permute.xlu0 %1499
      %1503 = vset.pattern.permute.xlu0 0
      %1504 = vperm.xlu0 %1503, %v593
      %v1505 = vpop.permute.xlu0 %1504
      %1508 = vset.pattern.permute.xlu0 0
      %1509 = vperm.xlu0 %1508, %v594
      %v1510 = vpop.permute.xlu0 %1509
      %1513 = vset.pattern.permute.xlu0 0
      %1514 = vperm.xlu0 %1513, %v595
      %v1515 = vpop.permute.xlu0 %1514
      %1518 = vset.pattern.permute.xlu0 0
      %1519 = vperm.xlu0 %1518, %v596
      %v1520 = vpop.permute.xlu0 %1519
      %1523 = vset.pattern.permute.xlu0 0
      %1524 = vperm.xlu0 %1523, %v597
      %v1525 = vpop.permute.xlu0 %1524
      %1528 = vset.pattern.permute.xlu0 0
      %1529 = vperm.xlu0 %1528, %v598
      %v1530 = vpop.permute.xlu0 %1529
      %1533 = vset.pattern.permute.xlu0 0
      %1534 = vperm.xlu0 %1533, %v599
      %v1535 = vpop.permute.xlu0 %1534
      %1538 = vset.pattern.permute.xlu0 0
      %1539 = vperm.xlu0 %1538, %v600
      %v1540 = vpop.permute.xlu0 %1539
      %1543 = vset.pattern.permute.xlu0 0
      %1544 = vperm.xlu0 %1543, %v601
      %v1545 = vpop.permute.xlu0 %1544
      %1548 = vset.pattern.permute.xlu0 0
      %1549 = vperm.xlu0 %1548, %v602
      %v1550 = vpop.permute.xlu0 %1549
      %1553 = vset.pattern.permute.xlu0 0
      %1554 = vperm.xlu0 %1553, %v603
      %v1555 = vpop.permute.xlu0 %1554
      %1558 = vset.pattern.permute.xlu0 0
      %1559 = vperm.xlu0 %1558, %v604
      %v1560 = vpop.permute.xlu0 %1559
      %1563 = vset.pattern.permute.xlu0 0
      %1564 = vperm.xlu0 %1563, %v605
      %v1565 = vpop.permute.xlu0 %1564
      %1568 = vset.pattern.permute.xlu0 0
      %1569 = vperm.xlu0 %1568, %v606
      %v1570 = vpop.permute.xlu0 %1569
      %1573 = vset.pattern.permute.xlu0 0
      %1574 = vperm.xlu0 %1573, %v607
      %v1575 = vpop.permute.xlu0 %1574
      %1578 = vset.pattern.permute.xlu0 0
      %1579 = vperm.xlu0 %1578, %v608
      %v1580 = vpop.permute.xlu0 %1579
      %1583 = vset.pattern.permute.xlu0 0
      %1584 = vperm.xlu0 %1583, %v609
      %v1585 = vpop.permute.xlu0 %1584
      %1588 = vset.pattern.permute.xlu0 0
      %1589 = vperm.xlu0 %1588, %v610
      %v1590 = vpop.permute.xlu0 %1589
      %1593 = vset.pattern.permute.xlu0 0
      %1594 = vperm.xlu0 %1593, %v611
      %v1595 = vpop.permute.xlu0 %1594
      %1598 = vset.pattern.permute.xlu0 0
      %1599 = vperm.xlu0 %1598, %v612
      %v1600 = vpop.permute.xlu0 %1599
      %1603 = vset.pattern.permute.xlu0 0
      %1604 = vperm.xlu0 %1603, %v613
      %v1605 = vpop.permute.xlu0 %1604
      %1608 = vset.pattern.permute.xlu0 0
      %1609 = vperm.xlu0 %1608, %v614
      %v1610 = vpop.permute.xlu0 %1609
      %1613 = vset.pattern.permute.xlu0 0
      %1614 = vperm.xlu0 %1613, %v615
      %v1615 = vpop.permute.xlu0 %1614
      %v1617 = vmul.f32 %v1425, %v1460
      %v1618 = vmul.f32 %v1426, %v1465
      %v1619 = vmul.f32 %v1427, %v1470
      %v1620 = vmul.f32 %v1428, %v1475
      %v1621 = vmul.f32 %v1429, %v1480
      %v1622 = vmul.f32 %v1430, %v1485
      %v1623 = vmul.f32 %v1431, %v1490
      %v1624 = vmul.f32 %v1432, %v1495
      %v1625 = vmul.f32 %v1433, %v1500
      %v1626 = vmul.f32 %v1434, %v1505
      %v1627 = vmul.f32 %v1435, %v1510
      %v1628 = vmul.f32 %v1436, %v1515
      %v1629 = vmul.f32 %v1437, %v1520
      %v1630 = vmul.f32 %v1438, %v1525
      %v1631 = vmul.f32 %v1439, %v1530
      %v1632 = vmul.f32 %v1440, %v1535
      %v1633 = vmul.f32 %v1441, %v1540
      %v1634 = vmul.f32 %v1442, %v1545
      %v1635 = vmul.f32 %v1443, %v1550
      %v1636 = vmul.f32 %v1444, %v1555
      %v1637 = vmul.f32 %v1445, %v1560
      %v1638 = vmul.f32 %v1446, %v1565
      %v1639 = vmul.f32 %v1447, %v1570
      %v1640 = vmul.f32 %v1448, %v1575
      %v1641 = vmul.f32 %v1449, %v1580
      %v1642 = vmul.f32 %v1450, %v1585
      %v1643 = vmul.f32 %v1451, %v1590
      %v1644 = vmul.f32 %v1452, %v1595
      %v1645 = vmul.f32 %v1453, %v1600
      %v1646 = vmul.f32 %v1454, %v1605
      %v1647 = vmul.f32 %v1455, %v1610
      %v1648 = vmul.f32 %v1456, %v1615
      %vm1649 = vcmask 80896
      %v1650 = vsel %vm1649, %v1617, 0.0
      %v1651 = vsel %vm1649, %v1618, 0.0
      %v1652 = vadd.f32 %v1650, %v1651
      %v1653 = vsel %vm1649, %v1619, 0.0
      %v1654 = vadd.f32 %v1652, %v1653
      %v1655 = vsel %vm1649, %v1620, 0.0
      %v1656 = vadd.f32 %v1654, %v1655
      %v1657 = vsel %vm1649, %v1621, 0.0
      %v1658 = vadd.f32 %v1656, %v1657
      %v1659 = vsel %vm1649, %v1622, 0.0
      %v1660 = vadd.f32 %v1658, %v1659
      %v1661 = vsel %vm1649, %v1623, 0.0
      %v1662 = vadd.f32 %v1660, %v1661
      %v1663 = vsel %vm1649, %v1624, 0.0
      %v1664 = vadd.f32 %v1662, %v1663
      %v1665 = vsel %vm1649, %v1625, 0.0
      %v1666 = vadd.f32 %v1664, %v1665
      %v1667 = vsel %vm1649, %v1626, 0.0
      %v1668 = vadd.f32 %v1666, %v1667
      %v1669 = vsel %vm1649, %v1627, 0.0
      %v1670 = vadd.f32 %v1668, %v1669
      %v1671 = vsel %vm1649, %v1628, 0.0
      %v1672 = vadd.f32 %v1670, %v1671
      %v1673 = vsel %vm1649, %v1629, 0.0
      %v1674 = vadd.f32 %v1672, %v1673
      %v1675 = vsel %vm1649, %v1630, 0.0
      %v1676 = vadd.f32 %v1674, %v1675
      %v1677 = vsel %vm1649, %v1631, 0.0
      %v1678 = vadd.f32 %v1676, %v1677
      %v1679 = vsel %vm1649, %v1632, 0.0
      %v1680 = vadd.f32 %v1678, %v1679
      %v1681 = vsel %vm1649, %v1633, 0.0
      %v1682 = vadd.f32 %v1680, %v1681
      %v1683 = vsel %vm1649, %v1634, 0.0
      %v1684 = vadd.f32 %v1682, %v1683
      %v1685 = vsel %vm1649, %v1635, 0.0
      %v1686 = vadd.f32 %v1684, %v1685
      %v1687 = vsel %vm1649, %v1636, 0.0
      %v1688 = vadd.f32 %v1686, %v1687
      %v1689 = vsel %vm1649, %v1637, 0.0
      %v1690 = vadd.f32 %v1688, %v1689
      %v1691 = vsel %vm1649, %v1638, 0.0
      %v1692 = vadd.f32 %v1690, %v1691
      %v1693 = vsel %vm1649, %v1639, 0.0
      %v1694 = vadd.f32 %v1692, %v1693
      %v1695 = vsel %vm1649, %v1640, 0.0
      %v1696 = vadd.f32 %v1694, %v1695
      %v1697 = vsel %vm1649, %v1641, 0.0
      %v1698 = vadd.f32 %v1696, %v1697
      %v1699 = vsel %vm1649, %v1642, 0.0
      %v1700 = vadd.f32 %v1698, %v1699
      %v1701 = vsel %vm1649, %v1643, 0.0
      %v1702 = vadd.f32 %v1700, %v1701
      %v1703 = vsel %vm1649, %v1644, 0.0
      %v1704 = vadd.f32 %v1702, %v1703
      %v1705 = vsel %vm1649, %v1645, 0.0
      %v1706 = vadd.f32 %v1704, %v1705
      %v1707 = vsel %vm1649, %v1646, 0.0
      %v1708 = vadd.f32 %v1706, %v1707
      %v1709 = vsel %vm1649, %v1647, 0.0
      %v1710 = vadd.f32 %v1708, %v1709
      %v1711 = vsel %vm1649, %v1648, 0.0
      %v1712 = vadd.f32 %v1710, %v1711
      %1713 = vadd.xlane.f32.xlu0 %v1712
      %v1714 = vpop.xlane.xlu0 %1713
      %v1715 = vrot.slane %v1714, 4
      %v1716 = vadd.f32 %v1714, %v1715
      %v1717 = vrot.slane %v1716, 2
      %v1718 = vadd.f32 %v1716, %v1717
      %v1719 = vrot.slane %v1718, 1
      %v1720 = vadd.f32 %v1718, %v1719
      %s1721 = vtos %v1720
      %v1722 = vld [vmem:[%s379] sm:$0xf]
      %v1723 = vld [vmem:[%s388] sm:$0x3]
      %vm1724 = vcmp.ne.f32.partialorder %v1723, 0.0
      %v1725 = vsel %vm1724, 1, 0
      %v1726 = vcvt.s32.f32 %v1725
      %vm1727 = vcmp.gt.f32.partialorder %v1723, 0.0
      %v1728 = vsel %vm1727, 1, 0
      %v1729 = vcvt.s32.f32 %v1728
      %v1730 = vcvt.f32.s32.to.zero.pseudo %v1726
      %v1731 = vlaneseq
      %v1732 = vshrl.u32 %v1731, 7
      %v1733 = vlaneseq
      %v1734 = vshrl.u32 %v1733, 7
      %v1735 = vsub.s32 0, %v1734
      %v1736 = vrot.slane %v1730, %v1735
      %v1737 = vlaneseq
      %v1738 = vshrl.u32 %v1737, 7
      %v1739 = vsub.s32 1, %v1738
      %v1740 = vrot.slane %v1730, %v1739
      %vm1741 = vcmp.eq.s32.totalorder %v1732, %v1736
      %vm1742 = vcmp.eq.s32.totalorder %v1732, %v1740
      %v1743 = vsel %vm1741, 1, 0
      %v1744 = vsel %vm1742, 1, 0
      %v1745 = vcvt.s32.f32 %v1743
      %v1746 = vcvt.s32.f32 %v1744
      %v1749 = vcombine.low %v1745, %v1746
      %v1751 = vunpack.c.l.s4 1983009808
      %v1752 = vunpack.c.0.s8 %v1751
      %v1753 = vlaneseq
      %v1754 = vshrl.u32 %v1753, 7
      %v1755 = vsub.s32 %v1752, %v1754
      %v1756 = vrot.slane %v1749, %v1755
      %v1758 = vmul.f32 %v1722, %v1756
      %v1761 = vunpack.c.l.s4 1983009808
      %v1762 = vunpack.c.0.s8 %v1761
      %v1763 = vlaneseq
      %v1764 = vshrl.u32 %v1763, 7
      %v1765 = vsub.s32 %v1762, %v1764
      %v1766 = vrot.slane %v1758, %v1765
      %v1767 = vcombine.high %v1766, %v1766
      %vm1770 = vcmask 1041408
      %v1771 = vsel %vm1770, %v1766, 0.0
      %v1772 = vrot.slane %v1771, 4
      %v1773 = vadd.f32 %v1771, %v1772
      %v1774 = vrot.slane %v1773, 2
      %v1775 = vadd.f32 %v1773, %v1774
      %v1776 = vrot.slane %v1775, 1
      %v1777 = vadd.f32 %v1775, %v1776
      %v1778 = vsel %vm1770, %v1767, 0.0
      %v1779 = vrot.slane %v1778, 4
      %v1780 = vadd.f32 %v1778, %v1779
      %v1781 = vrot.slane %v1780, 2
      %v1782 = vadd.f32 %v1780, %v1781
      %v1783 = vrot.slane %v1782, 1
      %v1784 = vadd.f32 %v1782, %v1783
      %v1787 = vunpack.c.l.s4 1983009808
      %v1788 = vunpack.c.0.s8 %v1787
      %v1789 = vlaneseq
      %v1790 = vshrl.u32 %v1789, 7
      %v1791 = vsub.s32 %v1788, %v1790
      %v1792 = vrot.slane %v1722, %v1791
      %v1793 = vcombine.high %v1792, %v1792
      %v1796 = vsel %vm1770, %v1792, -inf
      %v1797 = vrot.slane %v1796, 4
      %v1798 = vmax.f32 %v1796, %v1797
      %v1799 = vrot.slane %v1798, 2
      %v1800 = vmax.f32 %v1798, %v1799
      %v1801 = vrot.slane %v1800, 1
      %v1802 = vmax.f32 %v1800, %v1801
      %v1803 = vsel %vm1770, %v1793, -inf
      %v1804 = vrot.slane %v1803, 4
      %v1805 = vmax.f32 %v1803, %v1804
      %v1806 = vrot.slane %v1805, 2
      %v1807 = vmax.f32 %v1805, %v1806
      %v1808 = vrot.slane %v1807, 1
      %v1809 = vmax.f32 %v1807, %v1808
      %v1812 = vcombine.low %v1802, %v1809
      %v1814 = vunpack.c.l.s4 1983009808
      %v1815 = vunpack.c.0.s8 %v1814
      %v1816 = vlaneseq
      %v1817 = vshrl.u32 %v1816, 7
      %v1818 = vsub.s32 %v1815, %v1817
      %v1819 = vrot.slane %v1812, %v1818
      %v1821 = vsub.f32 %v1722, %v1819
      %v1822 = vmul.f32 %v1821, 1.442695
      %v1823 = vpow.pop %v1822
      %v1826 = vunpack.c.l.s4 1983009808
      %v1827 = vunpack.c.0.s8 %v1826
      %v1828 = vlaneseq
      %v1829 = vshrl.u32 %v1828, 7
      %v1830 = vsub.s32 %v1827, %v1829
      %v1831 = vrot.slane %v1823, %v1830
      %v1832 = vcombine.high %v1831, %v1831
      %v1835 = vsel %vm1770, %v1831, 0.0
      %v1836 = vrot.slane %v1835, 4
      %v1837 = vadd.f32 %v1835, %v1836
      %v1838 = vrot.slane %v1837, 2
      %v1839 = vadd.f32 %v1837, %v1838
      %v1840 = vrot.slane %v1839, 1
      %v1841 = vadd.f32 %v1839, %v1840
      %v1842 = vsel %vm1770, %v1832, 0.0
      %v1843 = vrot.slane %v1842, 4
      %v1844 = vadd.f32 %v1842, %v1843
      %v1845 = vrot.slane %v1844, 2
      %v1846 = vadd.f32 %v1844, %v1845
      %v1847 = vrot.slane %v1846, 1
      %v1848 = vadd.f32 %v1846, %v1847
      %v1849 = vlog2.pop %v1841
      %v1850 = vmul.f32 %v1849, 0.6931472
      %v1851 = vlog2.pop %v1848
      %v1852 = vmul.f32 %v1851, 0.6931472
      %v1853 = vadd.f32 %v1850, %v1802
      %v1854 = vadd.f32 %v1852, %v1809
      %v1855 = vsub.f32 %v1853, %v1777
      %v1856 = vsub.f32 %v1854, %v1784
      %vm1857 = vcmp.gt.f32.partialorder %v1726, 0.0
      %v1860 = vcombine.low %v1855, %v1856
      %v1862 = vunpack.c.l.s4 1966171168
      %v1863 = vunpack.c.0.s8 %v1862
      %v1864 = vlaneseq
      %v1865 = vshrl.u32 %v1864, 7
      %v1866 = vsub.s32 %v1863, %v1865
      %v1867 = vrot.slane %v1860, %v1866
      %v1869 = vunpack.c.l.s4 1966171168
      %v1870 = vunpack.c.0.s8 %v1869
      %v1871 = vlaneseq
      %v1872 = vshrl.u32 %v1871, 7
      %v1873 = vsub.s32 %v1870, %v1872
      %v1874 = vrot.slane %v1867, %v1873
      %v1876 = vsel %vm1857, 0.0, %v1874
      %v1878 = vlaneseq
      %v1879 = vshrl.u32 %v1878, 7
      %v1880 = vsub.s32 0, %v1879
      %v1881 = vrot.slane %v1726, %v1880
      %v1882 = vlaneseq
      %v1883 = vshrl.u32 %v1882, 7
      %v1884 = vsub.s32 1, %v1883
      %v1885 = vrot.slane %v1726, %v1884
      %vm1888 = vcmask 1040384
      %v1889 = vsel %vm1888, %v1881, 0.0
      %v1890 = vsel %vm1888, %v1885, 0.0
      %v1891 = vadd.f32 %v1889, %v1890
      %1892 = vadd.xlane.f32.xlu0 %v1891
      %v1893 = vpop.xlane.xlu0 %1892
      %v1894 = vrot.slane %v1893, 4
      %v1895 = vadd.f32 %v1893, %v1894
      %v1896 = vrot.slane %v1895, 2
      %v1897 = vadd.f32 %v1895, %v1896
      %v1898 = vrot.slane %v1897, 1
      %v1899 = vadd.f32 %v1897, %v1898
      %s1900 = vtos %v1899
      %v1902 = vlaneseq
      %v1903 = vshrl.u32 %v1902, 7
      %v1904 = vsub.s32 0, %v1903
      %v1905 = vrot.slane %v1729, %v1904
      %v1906 = vlaneseq
      %v1907 = vshrl.u32 %v1906, 7
      %v1908 = vsub.s32 1, %v1907
      %v1909 = vrot.slane %v1729, %v1908
      %v1912 = vsel %vm1888, %v1905, 0.0
      %v1913 = vsel %vm1888, %v1909, 0.0
      %v1914 = vadd.f32 %v1912, %v1913
      %1915 = vadd.xlane.f32.xlu0 %v1914
      %v1916 = vpop.xlane.xlu0 %1915
      %v1917 = vrot.slane %v1916, 4
      %v1918 = vadd.f32 %v1916, %v1917
      %v1919 = vrot.slane %v1918, 2
      %v1920 = vadd.f32 %v1918, %v1919
      %v1921 = vrot.slane %v1920, 1
      %v1922 = vadd.f32 %v1920, %v1921
      %s1923 = vtos %v1922
      %s1924 = smul.f32 %s1900, 7.0
      %s1925 = smin.f32 %s1924, 255.0
      %v1927 = vlaneseq
      %v1928 = vshrl.u32 %v1927, 7
      %v1929 = vsub.s32 0, %v1928
      %v1930 = vrot.slane %v1876, %v1929
      %v1931 = vlaneseq
      %v1932 = vshrl.u32 %v1931, 7
      %v1933 = vsub.s32 1, %v1932
      %v1934 = vrot.slane %v1876, %v1933
      loop: start=0, step=1, limit=32
      $region49: #{multibox_loss.3} parent=47 // loop_pre_header
        _
      $region50: #{multibox_loss.3} parent=47 // loop_header
        %s1938 = sphi 0, %s1942
        %p1939 = scmp.ge.s32.totalorder %s1938, 32
        %v1943 = vphi %v1930, %v2053
        %v1944 = vphi %v1934, %v2052
        %v1945 = vphi 0.0, %v2060
        %v1946 = vphi 0.0, %v2061
      $region51: #{multibox_loss.3} parent=47 // loop_header_branch
        %1941 = sbr.rel (%p1939) target = $region55
      $region52: #{multibox_loss.3} parent=47 // loop_body
        %1947 = vrot.lane.b32.xlu0 %v1943, 1
        %v1948 = vpop.permute.xlu0 %1947
        %1949 = vrot.lane.b32.xlu0 %v1944, 1
        %v1950 = vpop.permute.xlu0 %1949
        %v1951 = vlaneseq
        %v1952 = vand.u32 %v1951, 127
        %vm1953 = vcmp.lt.s32.totalorder %v1952, 1
        %v1954 = vsel %vm1953, %v1948, %v1950
        %v1955 = vsel %vm1953, %v1950, %v1948
        %vm1956 = vcmp.gt.f32.partialorder %v1955, %v1930
        %vm1957 = vcmp.gt.f32.partialorder %v1954, %v1934
        %v1958 = vsel %vm1956, 1, 0
        %v1959 = vsel %vm1957, 1, 0
        %v1960 = vcvt.s32.f32 %v1958
        %v1961 = vcvt.s32.f32 %v1959
        %v1962 = vadd.f32 %v1945, %v1960
        %v1963 = vadd.f32 %v1946, %v1961
        %1964 = vrot.lane.b32.xlu0 %v1955, 1
        %v1965 = vpop.permute.xlu0 %1964
        %1966 = vrot.lane.b32.xlu0 %v1954, 1
        %v1967 = vpop.permute.xlu0 %1966
        %v1968 = vsel %vm1953, %v1965, %v1967
        %v1969 = vsel %vm1953, %v1967, %v1965
        %vm1970 = vcmp.gt.f32.partialorder %v1969, %v1930
        %vm1971 = vcmp.gt.f32.partialorder %v1968, %v1934
        %v1972 = vsel %vm1970, 1, 0
        %v1973 = vsel %vm1971, 1, 0
        %v1974 = vcvt.s32.f32 %v1972
        %v1975 = vcvt.s32.f32 %v1973
        %v1976 = vadd.f32 %v1962, %v1974
        %v1977 = vadd.f32 %v1963, %v1975
        %1978 = vrot.lane.b32.xlu0 %v1969, 1
        %v1979 = vpop.permute.xlu0 %1978
        %1980 = vrot.lane.b32.xlu0 %v1968, 1
        %v1981 = vpop.permute.xlu0 %1980
        %v1982 = vsel %vm1953, %v1979, %v1981
        %v1983 = vsel %vm1953, %v1981, %v1979
        %vm1984 = vcmp.gt.f32.partialorder %v1983, %v1930
        %vm1985 = vcmp.gt.f32.partialorder %v1982, %v1934
        %v1986 = vsel %vm1984, 1, 0
        %v1987 = vsel %vm1985, 1, 0
        %v1988 = vcvt.s32.f32 %v1986
        %v1989 = vcvt.s32.f32 %v1987
        %v1990 = vadd.f32 %v1976, %v1988
        %v1991 = vadd.f32 %v1977, %v1989
        %1992 = vrot.lane.b32.xlu0 %v1983, 1
        %v1993 = vpop.permute.xlu0 %1992
        %1994 = vrot.lane.b32.xlu0 %v1982, 1
        %v1995 = vpop.permute.xlu0 %1994
        %v1996 = vsel %vm1953, %v1993, %v1995
        %v1997 = vsel %vm1953, %v1995, %v1993
        %vm1998 = vcmp.gt.f32.partialorder %v1997, %v1930
        %vm1999 = vcmp.gt.f32.partialorder %v1996, %v1934
        %v2000 = vsel %vm1998, 1, 0
        %v2001 = vsel %vm1999, 1, 0
        %v2002 = vcvt.s32.f32 %v2000
        %v2003 = vcvt.s32.f32 %v2001
        %v2004 = vadd.f32 %v1990, %v2002
        %v2005 = vadd.f32 %v1991, %v2003
        %2006 = vrot.lane.b32.xlu0 %v1997, 1
        %v2007 = vpop.permute.xlu0 %2006
        %2008 = vrot.lane.b32.xlu0 %v1996, 1
        %v2009 = vpop.permute.xlu0 %2008
        %v2010 = vsel %vm1953, %v2007, %v2009
        %v2011 = vsel %vm1953, %v2009, %v2007
        %vm2012 = vcmp.gt.f32.partialorder %v2011, %v1930
        %vm2013 = vcmp.gt.f32.partialorder %v2010, %v1934
        %v2014 = vsel %vm2012, 1, 0
        %v2015 = vsel %vm2013, 1, 0
        %v2016 = vcvt.s32.f32 %v2014
        %v2017 = vcvt.s32.f32 %v2015
        %v2018 = vadd.f32 %v2004, %v2016
        %v2019 = vadd.f32 %v2005, %v2017
        %2020 = vrot.lane.b32.xlu0 %v2011, 1
        %v2021 = vpop.permute.xlu0 %2020
        %2022 = vrot.lane.b32.xlu0 %v2010, 1
        %v2023 = vpop.permute.xlu0 %2022
        %v2024 = vsel %vm1953, %v2021, %v2023
        %v2025 = vsel %vm1953, %v2023, %v2021
        %vm2026 = vcmp.gt.f32.partialorder %v2025, %v1930
        %vm2027 = vcmp.gt.f32.partialorder %v2024, %v1934
        %v2028 = vsel %vm2026, 1, 0
        %v2029 = vsel %vm2027, 1, 0
        %v2030 = vcvt.s32.f32 %v2028
        %v2031 = vcvt.s32.f32 %v2029
        %v2032 = vadd.f32 %v2018, %v2030
        %v2033 = vadd.f32 %v2019, %v2031
        %2034 = vrot.lane.b32.xlu0 %v2025, 1
        %v2035 = vpop.permute.xlu0 %2034
        %2036 = vrot.lane.b32.xlu0 %v2024, 1
        %v2037 = vpop.permute.xlu0 %2036
        %v2038 = vsel %vm1953, %v2035, %v2037
        %v2039 = vsel %vm1953, %v2037, %v2035
        %vm2040 = vcmp.gt.f32.partialorder %v2039, %v1930
        %vm2041 = vcmp.gt.f32.partialorder %v2038, %v1934
        %v2042 = vsel %vm2040, 1, 0
        %v2043 = vsel %vm2041, 1, 0
        %v2044 = vcvt.s32.f32 %v2042
        %v2045 = vcvt.s32.f32 %v2043
        %v2046 = vadd.f32 %v2032, %v2044
        %v2047 = vadd.f32 %v2033, %v2045
        %2048 = vrot.lane.b32.xlu0 %v2039, 1
        %v2049 = vpop.permute.xlu0 %2048
        %2050 = vrot.lane.b32.xlu0 %v2038, 1
        %v2051 = vpop.permute.xlu0 %2050
        %v2052 = vsel %vm1953, %v2049, %v2051
        %v2053 = vsel %vm1953, %v2051, %v2049
        %vm2054 = vcmp.gt.f32.partialorder %v2053, %v1930
        %vm2055 = vcmp.gt.f32.partialorder %v2052, %v1934
        %v2056 = vsel %vm2054, 1, 0
        %v2057 = vsel %vm2055, 1, 0
        %v2058 = vcvt.s32.f32 %v2056
        %v2059 = vcvt.s32.f32 %v2057
        %v2060 = vadd.f32 %v2046, %v2058
        %v2061 = vadd.f32 %v2047, %v2059
      $region53: #{multibox_loss.3} parent=47 // loop_footer
        %s1942 = sadd.s32 1, %s1938
      $region54: #{multibox_loss.3} parent=47 // loop_footer_branch
        %1937 = sbr.rel target = $region50
      $region55: #{multibox_loss.3} parent=47 // loop_exit
        _
      %v2062 = vstv %s1925
      %vm2063 = vcmp.lt.f32.partialorder %v1945, %v2062
      %vm2064 = vcmp.lt.f32.partialorder %v1946, %v2062
      %v2065 = vsel %vm2063, 1, 0
      %v2066 = vsel %vm2064, 1, 0
      %v2067 = vcvt.s32.f32 %v2065
      %v2068 = vcvt.s32.f32 %v2066
      %v2071 = vcombine.low %v2067, %v2068
      %v2073 = vunpack.c.l.s4 1966171168
      %v2074 = vunpack.c.0.s8 %v2073
      %v2075 = vlaneseq
      %v2076 = vshrl.u32 %v2075, 7
      %v2077 = vsub.s32 %v2074, %v2076
      %v2078 = vrot.slane %v2071, %v2077
      %v2080 = vunpack.c.l.s4 1966171168
      %v2081 = vunpack.c.0.s8 %v2080
      %v2082 = vlaneseq
      %v2083 = vshrl.u32 %v2082, 7
      %v2084 = vsub.s32 %v2081, %v2083
      %v2085 = vrot.slane %v2078, %v2084
      %v2087 = vmax.f32 %v1726, %v2085
      %v2089 = vlaneseq
      %v2090 = vshrl.u32 %v2089, 7
      %v2091 = vsub.s32 0, %v2090
      %v2092 = vrot.slane %v2087, %v2091
      %v2093 = vlaneseq
      %v2094 = vshrl.u32 %v2093, 7
      %v2095 = vsub.s32 1, %v2094
      %v2096 = vrot.slane %v2087, %v2095
      %v2099 = vmul.f32 %v1855, %v2092
      %v2100 = vmul.f32 %v1856, %v2096
      %v2101 = vsel %vm1888, %v2099, 0.0
      %v2102 = vsel %vm1888, %v2100, 0.0
      %v2103 = vadd.f32 %v2101, %v2102
      %2104 = vadd.xlane.f32.xlu0 %v2103
      %v2105 = vpop.xlane.xlu0 %2104
      %v2106 = vrot.slane %v2105, 4
      %v2107 = vadd.f32 %v2105, %v2106
      %v2108 = vrot.slane %v2107, 2
      %v2109 = vadd.f32 %v2107, %v2108
      %v2110 = vrot.slane %v2109, 1
      %v2111 = vadd.f32 %v2109, %v2110
      %s2112 = vtos %v2111
      %v2113 = vlaneseq
      %v2114 = vand.u32 %v2113, 127
      %vm2115 = vcmp.eq.s32.totalorder %v2114, 0
      %v2116 = vstv %s1168
      %v2117 = vsel %vm2115, %v2116, 0.0
      %vm2118 = vcmp.eq.s32.totalorder %v2114, 1
      %v2119 = vstv %s2112
      %v2120 = vsel %vm2118, %v2119, 0.0
      %v2121 = vadd.f32 %v2117, %v2120
      %vm2122 = vcmp.eq.s32.totalorder %v2114, 2
      %v2123 = vstv %s1721
      %v2124 = vsel %vm2122, %v2123, 0.0
      %v2125 = vadd.f32 %v2121, %v2124
      %vm2126 = vcmp.eq.s32.totalorder %v2114, 3
      %v2127 = vstv %s1900
      %v2128 = vsel %vm2126, %v2127, 0.0
      %v2129 = vadd.f32 %v2125, %v2128
      %vm2130 = vcmp.eq.s32.totalorder %v2114, 4
      %v2131 = vstv %s1923
      %v2132 = vsel %vm2130, %v2131, 0.0
      %v2133 = vadd.f32 %v2129, %v2132
      %2134 = vst [vmem:[%s391] sm:$0x1] %v2133
      %p2135 = scmp.lt.s32.totalorder %s18, 1
      %s2136 = scalar_select %p2135, %s18, 1
      %s2137 = scalar_lea.vmem %s7, %s2136
      // Predicated region
      $region56: #{multibox_loss.3} parent=47 // pred_check
        %p2138 = pneg %p218
      $region57: #{multibox_loss.3} parent=47 // pred_check_branch
        %2140 = sbr.rel (%p2138) target = $region59
      $region58: #{multibox_loss.3} parent=47 // pred_region
        _
      $region59: #{multibox_loss.3} parent=47 // pred_fallthru
        _
    $region48: #{multibox_loss.3} parent=5 // pred_fallthru
      _
    %p2141 = scmp.le.s32.totalorder 2, %s13
    // Predicated region
    $region60: #{multibox_loss.3} parent=5 // pred_check
      %p2142 = pneg %p2141
    $region61: #{multibox_loss.3} parent=5 // pred_check_branch
      %2144 = sbr.rel (%p2142) target = $region63
    $region62: #{multibox_loss.3} parent=5 // pred_region
      %s2145 = ssub.s32 %s13, 2
      // Predicated region
      $region64: #{multibox_loss.3} parent=62 // pred_check
        %p2146 = pneg %p224
      $region65: #{multibox_loss.3} parent=62 // pred_check_branch
        %2148 = sbr.rel (%p2146) target = $region67
      $region66: #{multibox_loss.3} parent=62 // pred_region
        %p2149 = scmp.lt.s32.totalorder %s19, 1
        %s2150 = scalar_select %p2149, %s19, 1
        %s2151 = scalar_lea.vmem %s7, %s2150
      $region67: #{multibox_loss.3} parent=62 // pred_fallthru
        _
    $region63: #{multibox_loss.3} parent=5 // pred_fallthru
      _
  $region6: #{multibox_loss.3} parent=0 // loop_footer
    %s17 = sadd.s32 1, %s13
  $region7: #{multibox_loss.3} parent=0 // loop_footer_branch
    %12 = sbr.rel target = $region3
  $region8: #{multibox_loss.3} parent=0 // loop_exit
    _

</llo_original>
